<compile_context>
chip_gen: v7x
topology: tpu7x:2x2x1
jax: 0.10.0
libtpu: 0.0.40
codegen_flags: <defaults>
</compile_context>

<pallas_src>
import functools

import jax
import jax.numpy as jnp
from jax.experimental import pallas as pl
from jax.experimental.pallas import tpu as pltpu

HIDDEN = 40
IN_DIM = 9
OUT_DIM = 1
N_HIDDEN_LAYERS = 4        # the four 40->40 layers (layers 2..5)
PACK = 3                   # batch rows packed per lane group (3*40 = 120 lanes)
DEFAULT_TILE_GROUPS = 512  # lane groups per grid step (= 1536 batch rows)
CHUNK_GROUPS = 128         # lane-group rows per in-kernel sub-chunk


def _round_up(n, m):
    return ((n + m - 1) // m) * m


def _block_diag(w, n):
    """(din, dout) -> (n*din, n*dout) block-diagonal."""
    din, dout = w.shape
    out = jnp.zeros((n * din, n * dout), w.dtype)
    for j in range(n):
        out = out.at[j * din:(j + 1) * din, j * dout:(j + 1) * dout].set(w)
    return out


def _mlp_kernel(x_ref, w1_ref, wh_ref, w6_ref, bh_ref, b6_ref, o_ref,
                *, mm_dtype, mm_precision):
    """Forward pass for one batch tile, entirely in VMEM.

    x_ref  : (tile3, 27)     3 packed batch rows per sublane row
    w1_ref : (27, 120)       block-diag first-layer weight
    wh_ref : (4, 120, 120)   block-diag hidden weights (layers 2..5)
    w6_ref : (3, 120)        block-diag last-layer weight (row j = w6^T, slot j)
    bh_ref : (5, 1, 120)     tiled biases of layers 1..5 (f32)
    b6_ref : (1, 1)          last-layer bias (f32)
    o_ref  : (3, tile3)      lane-dense output (row j = outputs of pack slot j)
    """
    tile3 = x_ref.shape[0]
    if tile3 > CHUNK_GROUPS and tile3 % CHUNK_GROUPS == 0:
        chunk = CHUNK_GROUPS
    else:
        chunk = tile3
    n_chunks = tile3 // chunk

    # Hoist parameter loads out of the chunk loop.
    w1 = w1_ref[...]
    whs = [wh_ref[k] for k in range(N_HIDDEN_LAYERS)]
    bhs = [bh_ref[k] for k in range(N_HIDDEN_LAYERS + 1)]
    w6 = w6_ref[...]
    b6 = b6_ref[...]

    for c in range(n_chunks):
        lo = c * chunk
        xs = x_ref[lo:lo + chunk, :].astype(mm_dtype)

        # Layer 1: 27 -> 120 (block-diag of 9->40), tanh on the EUP.
        h = jnp.tanh(
            jnp.dot(xs, w1, preferred_element_type=jnp.float32,
                    precision=mm_precision) + bhs[0])

        # Layers 2..5: 120 -> 120 (block-diag of 40->40).
        for k in range(N_HIDDEN_LAYERS):
            h = jnp.tanh(
                jnp.dot(h.astype(mm_dtype), whs[k],
                        preferred_element_type=jnp.float32,
                        precision=mm_precision) + bhs[k + 1])

        # Layer 6: (3,120) contracted with (chunk,120) on their last dims
        # -> (3, chunk).  Transposed-RHS contraction: h.T is never built.
        y = jax.lax.dot_general(
            w6, h.astype(mm_dtype), (((1,), (1,)), ((), ())),
            preferred_element_type=jnp.float32, precision=mm_precision)
        o_ref[:, lo:lo + chunk] = (y + b6).astype(o_ref.dtype)


def _full_block_spec(arr):
    zeros = (0,) * arr.ndim
    return pl.BlockSpec(arr.shape, lambda i, _z=zeros: _z)


def nn5_prior_forward(x, params, *, tile_groups=DEFAULT_TILE_GROUPS,
                      matmul_dtype=jnp.float32):
    """x: (B, 9) float32.  params: list of 6 (W:(in,out), b:(1,out)) pairs."""
    B, F = x.shape
    assert F == IN_DIM
    assert len(params) == 6

    out_dtype = jnp.float32
    mmd = jnp.dtype(matmul_dtype)
    mm_precision = (jax.lax.Precision.HIGHEST
                    if mmd == jnp.dtype(jnp.float32)
                    else jax.lax.Precision.DEFAULT)

    # ---- batch tiling: pack 3 rows per lane group --------------------------
    B3 = -(-B // PACK)                        # lane groups needed
    if B3 <= 128:
        tile3 = _round_up(max(B3, 8), 8)      # single full tile (tiny batch)
    else:
        # Lane-dense (multiple-of-128) tiles, and at least 2 grid steps so
        # dimension_semantics=("parallel",) can use both v7x TensorCores.
        half = _round_up(-(-B3 // 2), 128)
        tile3 = max(128, min(_round_up(tile_groups, 128), half))
    B3p = _round_up(B3, tile3)
    Bp = B3p * PACK
    pad = Bp - B
    if pad:
        x = jnp.pad(x, ((0, pad), (0, 0)))
    x3 = x.reshape(B3p, PACK * IN_DIM)        # contiguous reshape, free
    n_tiles = B3p // tile3

    # ---- block-diagonal / consolidated parameters --------------------------
    (w1, b1), (w2, b2), (w3, b3), (w4, b4), (w5, b5), (w6, b6) = params
    w1b = _block_diag(w1, PACK).astype(mmd)                        # (27, 120)
    whb = jnp.stack([_block_diag(w, PACK)
                     for w in (w2, w3, w4, w5)]).astype(mmd)       # (4,120,120)
    w6b = _block_diag(w6.T, PACK).astype(mmd)                      # (3, 120)
    bhb = jnp.stack([jnp.tile(b, (1, PACK))
                     for b in (b1, b2, b3, b4, b5)]).astype(jnp.float32)
    b6f = b6.astype(jnp.float32)                                   # (1, 1)
    param_arrays = (w1b, whb, w6b, bhb, b6f)

    x_spec = pl.BlockSpec((tile3, PACK * IN_DIM), lambda i: (i, 0))
    param_specs = [_full_block_spec(a) for a in param_arrays]
    out_spec = pl.BlockSpec((PACK, tile3), lambda i: (0, i))

    param_bytes = sum(int(a.size) * a.dtype.itemsize for a in param_arrays)
    cost = pl.CostEstimate(
        flops=2 * Bp * (IN_DIM * HIDDEN + N_HIDDEN_LAYERS * HIDDEN * HIDDEN
                        + HIDDEN * OUT_DIM),
        transcendentals=(N_HIDDEN_LAYERS + 1) * Bp * HIDDEN,
        bytes_accessed=(int(x3.size) * x3.dtype.itemsize
                        + PACK * B3p * jnp.dtype(out_dtype).itemsize
                        + param_bytes),
    )

    kernel = functools.partial(_mlp_kernel, mm_dtype=mmd,
                               mm_precision=mm_precision)

    out = pl.pallas_call(
        kernel,
        out_shape=jax.ShapeDtypeStruct((PACK, B3p), out_dtype),
        grid_spec=pltpu.PrefetchScalarGridSpec(
            num_scalar_prefetch=0,
            grid=(n_tiles,),
            in_specs=[x_spec] + param_specs,
            out_specs=out_spec,
        ),
        compiler_params=pltpu.CompilerParams(
            dimension_semantics=("parallel",)),
        cost_estimate=cost,
    )(x3, *param_arrays)

    # (3, B3p) lane-dense rows -> (B, 1) column.  Single cheap host transpose.
    return out.T.reshape(Bp, OUT_DIM)[:B]


def init_params(key):
    """Deterministic synthetic init matching NN5_prior's shapes.

    Layer shapes (in -> out): 9->40, 40->40 (x4), 40->1.
    Stored as W:(in, out), b:(1, out)  (torch computes x @ W.T + b with
    W_torch = W.T, so semantics are identical).
    """
    dims = [(IN_DIM, HIDDEN)] + [(HIDDEN, HIDDEN)] * 4 + [(HIDDEN, OUT_DIM)]
    params = []
    for (din, dout) in dims:
        key, kw, kb = jax.random.split(key, 3)
        bound = 1.0 / jnp.sqrt(jnp.float32(din))   # torch Linear default-ish
        w = jax.random.uniform(kw, (din, dout), jnp.float32, -bound, bound)
        b = jax.random.uniform(kb, (1, dout), jnp.float32, -bound, bound)
        params.append((w, b))
    return params


def _reference_forward(x, params):
    h = x
    for i, (w, b) in enumerate(params):
        h = jnp.dot(h, w, precision=jax.lax.Precision.HIGHEST) + b
        if i < len(params) - 1:
            h = jnp.tanh(h)
    return h


if __name__ == "__main__":
    key = jax.random.PRNGKey(0)
    kx, kp = jax.random.split(key)
    params = init_params(kp)

    # Small batch consistent with the (B, 9) -> (B, 1) forward (single tile).
    B = 8
    x = jax.random.normal(kx, (B, IN_DIM), jnp.float32)
    y = jax.block_until_ready(nn5_prior_forward(x, params))
    y_ref = _reference_forward(x, params)
    assert y.shape == (B, OUT_DIM), y.shape
    assert jnp.allclose(y, y_ref, atol=1e-3, rtol=1e-3), (
        float(jnp.max(jnp.abs(y - y_ref))))

    # Multi-tile path: B=400 -> 134 lane groups -> two 128-group grid steps
    # (exercises padding, lane-dense output tiles and the >=2-step rule).
    B2 = 400
    x2 = jax.random.normal(jax.random.PRNGKey(1), (B2, IN_DIM), jnp.float32)
    y2 = jax.block_until_ready(nn5_prior_forward(x2, params))
    y2_ref = _reference_forward(x2, params)
    assert y2.shape == (B2, OUT_DIM), y2.shape
    assert jnp.allclose(y2, y2_ref, atol=1e-3, rtol=1e-3), (
        float(jnp.max(jnp.abs(y2 - y2_ref))))

    # bf16-operand MXU path (f32 accumulation).  Looser tolerance vs. the f32
    # reference is expected; acceptable for inference.
    y3 = jax.block_until_ready(
        nn5_prior_forward(x2, params, matmul_dtype=jnp.bfloat16))
    assert y3.shape == (B2, OUT_DIM), y3.shape
    assert jnp.allclose(y3, y2_ref, atol=5e-2, rtol=0.0), (
        float(jnp.max(jnp.abs(y3 - y2_ref))))

    print("KERNEL_OK")
</pallas_src>

<mosaic_0001>
module attributes {stable_mosaic.version = 11 : i64} {
  func.func @_mlp_kernel(%arg0: i32, %arg1: memref<8x27xf32, #tpu.memory_space<vmem>>, %arg2: memref<27x120xf32, #tpu.memory_space<vmem>>, %arg3: memref<4x120x120xf32, #tpu.memory_space<vmem>>, %arg4: memref<3x120xf32, #tpu.memory_space<vmem>>, %arg5: memref<5x1x120xf32, #tpu.memory_space<vmem>>, %arg6: memref<1x1xf32, #tpu.memory_space<vmem>>, %arg7: memref<3x8xf32, #tpu.memory_space<vmem>>) attributes {dimension_semantics = [#tpu.dimension_semantics<parallel>], iteration_bounds = array<i64: 1>, scalar_prefetch = 0 : i64, scratch_operands = 0 : i64, tpu.core_type = #tpu.core_type<tc>, window_params = [{transform_indices = @transform_0, window_bounds = array<i64: 8, 27>}, {pipeline_mode = #tpu.pipeline_mode<synchronous>, transform_indices = @transform_1, window_bounds = array<i64: 27, 120>}, {pipeline_mode = #tpu.pipeline_mode<synchronous>, transform_indices = @transform_2, window_bounds = array<i64: 4, 120, 120>}, {pipeline_mode = #tpu.pipeline_mode<synchronous>, transform_indices = @transform_3, window_bounds = array<i64: 3, 120>}, {pipeline_mode = #tpu.pipeline_mode<synchronous>, transform_indices = @transform_4, window_bounds = array<i64: 5, 1, 120>}, {pipeline_mode = #tpu.pipeline_mode<synchronous>, transform_indices = @transform_5, window_bounds = array<i64: 1, 1>}, {transform_indices = @transform_6, window_bounds = array<i64: 3, 8>}]} {
    %c0 = arith.constant 0 : index
    %c0_0 = arith.constant 0 : index
    %0 = vector.load %arg2[%c0, %c0_0] : memref<27x120xf32, #tpu.memory_space<vmem>>, vector<27x120xf32>
    %c0_1 = arith.constant 0 : index
    %c0_2 = arith.constant 0 : index
    %c0_3 = arith.constant 0 : index
    %1 = vector.load %arg3[%c0_1, %c0_2, %c0_3] : memref<4x120x120xf32, #tpu.memory_space<vmem>>, vector<1x120x120xf32>
    %2 = vector.shape_cast %1 : vector<1x120x120xf32> to vector<120x120xf32>
    %c1 = arith.constant 1 : index
    %c0_4 = arith.constant 0 : index
    %c0_5 = arith.constant 0 : index
    %3 = vector.load %arg3[%c1, %c0_4, %c0_5] : memref<4x120x120xf32, #tpu.memory_space<vmem>>, vector<1x120x120xf32>
    %4 = vector.shape_cast %3 : vector<1x120x120xf32> to vector<120x120xf32>
    %c2 = arith.constant 2 : index
    %c0_6 = arith.constant 0 : index
    %c0_7 = arith.constant 0 : index
    %5 = vector.load %arg3[%c2, %c0_6, %c0_7] : memref<4x120x120xf32, #tpu.memory_space<vmem>>, vector<1x120x120xf32>
    %6 = vector.shape_cast %5 : vector<1x120x120xf32> to vector<120x120xf32>
    %c3 = arith.constant 3 : index
    %c0_8 = arith.constant 0 : index
    %c0_9 = arith.constant 0 : index
    %7 = vector.load %arg3[%c3, %c0_8, %c0_9] : memref<4x120x120xf32, #tpu.memory_space<vmem>>, vector<1x120x120xf32>
    %8 = vector.shape_cast %7 : vector<1x120x120xf32> to vector<120x120xf32>
    %c0_10 = arith.constant 0 : index
    %c0_11 = arith.constant 0 : index
    %c0_12 = arith.constant 0 : index
    %9 = vector.load %arg5[%c0_10, %c0_11, %c0_12] : memref<5x1x120xf32, #tpu.memory_space<vmem>>, vector<1x1x120xf32>
    %10 = vector.shape_cast %9 : vector<1x1x120xf32> to vector<1x120xf32>
    %c1_13 = arith.constant 1 : index
    %c0_14 = arith.constant 0 : index
    %c0_15 = arith.constant 0 : index
    %11 = vector.load %arg5[%c1_13, %c0_14, %c0_15] : memref<5x1x120xf32, #tpu.memory_space<vmem>>, vector<1x1x120xf32>
    %12 = vector.shape_cast %11 : vector<1x1x120xf32> to vector<1x120xf32>
    %c2_16 = arith.constant 2 : index
    %c0_17 = arith.constant 0 : index
    %c0_18 = arith.constant 0 : index
    %13 = vector.load %arg5[%c2_16, %c0_17, %c0_18] : memref<5x1x120xf32, #tpu.memory_space<vmem>>, vector<1x1x120xf32>
    %14 = vector.shape_cast %13 : vector<1x1x120xf32> to vector<1x120xf32>
    %c3_19 = arith.constant 3 : index
    %c0_20 = arith.constant 0 : index
    %c0_21 = arith.constant 0 : index
    %15 = vector.load %arg5[%c3_19, %c0_20, %c0_21] : memref<5x1x120xf32, #tpu.memory_space<vmem>>, vector<1x1x120xf32>
    %16 = vector.shape_cast %15 : vector<1x1x120xf32> to vector<1x120xf32>
    %c4 = arith.constant 4 : index
    %c0_22 = arith.constant 0 : index
    %c0_23 = arith.constant 0 : index
    %17 = vector.load %arg5[%c4, %c0_22, %c0_23] : memref<5x1x120xf32, #tpu.memory_space<vmem>>, vector<1x1x120xf32>
    %18 = vector.shape_cast %17 : vector<1x1x120xf32> to vector<1x120xf32>
    %c0_24 = arith.constant 0 : index
    %c0_25 = arith.constant 0 : index
    %19 = vector.load %arg4[%c0_24, %c0_25] : memref<3x120xf32, #tpu.memory_space<vmem>>, vector<3x120xf32>
    %c0_26 = arith.constant 0 : index
    %c0_27 = arith.constant 0 : index
    %20 = vector.load %arg6[%c0_26, %c0_27] : memref<1x1xf32, #tpu.memory_space<vmem>>, vector<1x1xf32>
    %c0_28 = arith.constant 0 : index
    %c0_29 = arith.constant 0 : index
    %21 = vector.load %arg1[%c0_28, %c0_29] : memref<8x27xf32, #tpu.memory_space<vmem>>, vector<8x27xf32>
    %cst = arith.constant dense<0.000000e+00> : vector<8x120xf32>
    %22 = tpu.matmul %21, %0, %cst {dimension_numbers = #tpu.dot_dimension_numbers<[1], [0], [0], [1], [0, 0, 1, 1], [], []>, precision = #tpu.contract_precision<fp32>} : vector<8x27xf32>, vector<27x120xf32>, vector<8x120xf32> -> vector<8x120xf32>
    %23 = vector.broadcast %10 : vector<1x120xf32> to vector<8x120xf32>
    %24 = arith.addf %22, %23 : vector<8x120xf32>
    %25 = math.tanh %24 : vector<8x120xf32>
    %cst_30 = arith.constant dense<0.000000e+00> : vector<8x120xf32>
    %26 = tpu.matmul %25, %2, %cst_30 {dimension_numbers = #tpu.dot_dimension_numbers<[1], [0], [0], [1], [0, 0, 1, 1], [], []>, precision = #tpu.contract_precision<fp32>} : vector<8x120xf32>, vector<120x120xf32>, vector<8x120xf32> -> vector<8x120xf32>
    %27 = vector.broadcast %12 : vector<1x120xf32> to vector<8x120xf32>
    %28 = arith.addf %26, %27 : vector<8x120xf32>
    %29 = math.tanh %28 : vector<8x120xf32>
    %cst_31 = arith.constant dense<0.000000e+00> : vector<8x120xf32>
    %30 = tpu.matmul %29, %4, %cst_31 {dimension_numbers = #tpu.dot_dimension_numbers<[1], [0], [0], [1], [0, 0, 1, 1], [], []>, precision = #tpu.contract_precision<fp32>} : vector<8x120xf32>, vector<120x120xf32>, vector<8x120xf32> -> vector<8x120xf32>
    %31 = vector.broadcast %14 : vector<1x120xf32> to vector<8x120xf32>
    %32 = arith.addf %30, %31 : vector<8x120xf32>
    %33 = math.tanh %32 : vector<8x120xf32>
    %cst_32 = arith.constant dense<0.000000e+00> : vector<8x120xf32>
    %34 = tpu.matmul %33, %6, %cst_32 {dimension_numbers = #tpu.dot_dimension_numbers<[1], [0], [0], [1], [0, 0, 1, 1], [], []>, precision = #tpu.contract_precision<fp32>} : vector<8x120xf32>, vector<120x120xf32>, vector<8x120xf32> -> vector<8x120xf32>
    %35 = vector.broadcast %16 : vector<1x120xf32> to vector<8x120xf32>
    %36 = arith.addf %34, %35 : vector<8x120xf32>
    %37 = math.tanh %36 : vector<8x120xf32>
    %cst_33 = arith.constant dense<0.000000e+00> : vector<8x120xf32>
    %38 = tpu.matmul %37, %8, %cst_33 {dimension_numbers = #tpu.dot_dimension_numbers<[1], [0], [0], [1], [0, 0, 1, 1], [], []>, precision = #tpu.contract_precision<fp32>} : vector<8x120xf32>, vector<120x120xf32>, vector<8x120xf32> -> vector<8x120xf32>
    %39 = vector.broadcast %18 : vector<1x120xf32> to vector<8x120xf32>
    %40 = arith.addf %38, %39 : vector<8x120xf32>
    %41 = math.tanh %40 : vector<8x120xf32>
    %cst_34 = arith.constant dense<0.000000e+00> : vector<3x8xf32>
    %42 = tpu.matmul %19, %41, %cst_34 {dimension_numbers = #tpu.dot_dimension_numbers<[1], [1], [0], [0], [0, 0, 1, 0], [], []>, precision = #tpu.contract_precision<fp32>} : vector<3x120xf32>, vector<8x120xf32>, vector<3x8xf32> -> vector<3x8xf32>
    %43 = vector.broadcast %20 : vector<1x1xf32> to vector<3x8xf32>
    %44 = arith.addf %42, %43 : vector<3x8xf32>
    %c0_35 = arith.constant 0 : index
    %c0_36 = arith.constant 0 : index
    %45 = vector.load %arg7[%c0_35, %c0_36] : memref<3x8xf32, #tpu.memory_space<vmem>>, vector<3x8xf32>
    tpu.vector_store %arg7[%c0_35, %c0_36], %44 {strides = array<i32>} : memref<3x8xf32, #tpu.memory_space<vmem>>, vector<3x8xf32>,
    return
  }
  func.func @transform_0(%arg0: i32) -> (i32, i32) {
    %c0_i32 = arith.constant 0 : i32
    %c0_i32_0 = arith.constant 0 : i32
    return %arg0, %c0_i32 : i32, i32
  }
  func.func @transform_1(%arg0: i32) -> (i32, i32) {
    %c0_i32 = arith.constant 0 : i32
    %c0_i32_0 = arith.constant 0 : i32
    %c0_i32_1 = arith.constant 0 : i32
    return %c0_i32, %c0_i32_0 : i32, i32
  }
  func.func @transform_2(%arg0: i32) -> (i32, i32, i32) {
    %c0_i32 = arith.constant 0 : i32
    %c0_i32_0 = arith.constant 0 : i32
    %c0_i32_1 = arith.constant 0 : i32
    %c0_i32_2 = arith.constant 0 : i32
    return %c0_i32, %c0_i32_0, %c0_i32_1 : i32, i32, i32
  }
  func.func @transform_3(%arg0: i32) -> (i32, i32) {
    %c0_i32 = arith.constant 0 : i32
    %c0_i32_0 = arith.constant 0 : i32
    %c0_i32_1 = arith.constant 0 : i32
    return %c0_i32, %c0_i32_0 : i32, i32
  }
  func.func @transform_4(%arg0: i32) -> (i32, i32, i32) {
    %c0_i32 = arith.constant 0 : i32
    %c0_i32_0 = arith.constant 0 : i32
    %c0_i32_1 = arith.constant 0 : i32
    %c0_i32_2 = arith.constant 0 : i32
    return %c0_i32, %c0_i32_0, %c0_i32_1 : i32, i32, i32
  }
  func.func @transform_5(%arg0: i32) -> (i32, i32) {
    %c0_i32 = arith.constant 0 : i32
    %c0_i32_0 = arith.constant 0 : i32
    %c0_i32_1 = arith.constant 0 : i32
    return %c0_i32, %c0_i32_0 : i32, i32
  }
  func.func @transform_6(%arg0: i32) -> (i32, i32) {
    %c0_i32 = arith.constant 0 : i32
    %c0_i32_0 = arith.constant 0 : i32
    return %c0_i32, %arg0 : i32, i32
  }
}

</mosaic_0001>

<llo_original>
// kernel: tpu_custom_call.1
$region0: #{tpu_custom_call.1}
  #allocation0 [shape = 'u32[]', space=smem, size = 0x4, offset = 0x4, fixed_abs, tag = 'smem constant byte address 0x4 - core index']
  #allocation1 [shape = 'u32[144,128]{1,0:T(1,128)}', space=vmem, size = 0x12000, scoped, tag = 'internal scratch']
  #allocation2 [shape = 'f32[1,1]{1,0:T(1,128)S(1)}', space=vmem, size = 0x200, scoped, tag = 'scoped memory for tpu_custom_call.1']
  %s0 = inlined_call_operand.hbm [shape: f32[8,27], index: 0, kind: input, shape index: {}]
  %s1 = inlined_call_operand.hbm [shape: f32[27,120], index: 1, kind: input, shape index: {}]
  %s2 = inlined_call_operand.hbm [shape: f32[4,120,120], index: 2, kind: input, shape index: {}]
  %s3 = inlined_call_operand.vmem [shape: f32[3,120], index: 3, kind: input, shape index: {}]
  %s4 = inlined_call_operand.vmem [shape: f32[5,1,120], index: 4, kind: input, shape index: {}]
  %s5 = inlined_call_operand.<no memory space> [shape: f32[1,1], index: 5, kind: input, shape index: {}]
  %s6 = inlined_call_operand.hbm [shape: f32[3,8], index: 6, kind: output, shape index: {}]
  %s7 = sld [smem:[#allocation0]]
  $region46: #{tpu_custom_call.1} parent=0
    _
  %s9 = ssub.s32 1, %s7
  %s10 = scalar_select 0, %s9, %s7
  %v11 = vstv %s5
  %12 = vst [vmem:[#allocation2] sm:$0x1] %v11
  $region1: #{tpu_custom_call.1} parent=0
    #allocation3 [shape = 'u8[4096]{0}', space=vmem, size = 0x1000, scoped, tag = 'input window, operand 0, single buffered']
    #allocation4 [shape = 's32[1]{0}', space=sflag, size = 0x4, scoped, tag = 'scoped memory for tpu_custom_call.1']
    #allocation5 [shape = 's32[1]{0}', space=sflag, size = 0x4, scoped, tag = 'scoped memory for tpu_custom_call.1']
    #allocation6 [shape = 'u8[16384]{0}', space=vmem, size = 0x4000, scoped, tag = 'input window, operand 1, single buffered']
    #allocation7 [shape = 's32[1]{0}', space=sflag, size = 0x4, scoped, tag = 'scoped memory for tpu_custom_call.1']
    #allocation8 [shape = 'u8[245760]{0}', space=vmem, size = 0x3c000, scoped, tag = 'input window, operand 2, single buffered']
    #allocation9 [shape = 'u8[2048]{0}', space=vmem, size = 0x800, scoped, tag = 'output window, operand 0, single buffered']
    %13 = vsyncpa [#allocation4], 0
    %14 = vsyncpa [#allocation7], 0
    %15 = vsyncpa [#allocation5], 0
    // Predicated region
    $region2: #{tpu_custom_call.1} parent=1 // pred_check
      _
    $region3: #{tpu_custom_call.1} parent=1 // pred_check_branch
      %17 = sbr.rel (0) target = $region5
    $region4: #{tpu_custom_call.1} parent=1 // pred_region
      %s19 = ssub.s32 128, 128
      %20 = vsyncadd [#allocation4], %s19
      %s22 = sshll.u32 [#allocation3], 4
      %s23 = int_to_ptr.vmem [resolvable:$true] %s22
      %25 = dma.hbm_to_vmem [thread:$0]  %s0, 128, %s23, [#allocation4]
    $region5: #{tpu_custom_call.1} parent=1 // pred_fallthru
      _
    // Predicated region
    $region6: #{tpu_custom_call.1} parent=1 // pred_check
      _
    $region7: #{tpu_custom_call.1} parent=1 // pred_check_branch
      %27 = sbr.rel (0) target = $region9
    $region8: #{tpu_custom_call.1} parent=1 // pred_region
      %s29 = ssub.s32 512, 512
      %30 = vsyncadd [#allocation7], %s29
      %s31 = sshll.u32 [#allocation6], 4
      %s32 = int_to_ptr.vmem [resolvable:$true] %s31
      %37 = dma.hbm_to_vmem [thread:$0]  %s1, 512, %s32, [#allocation7], 128, 128, 8
    $region9: #{tpu_custom_call.1} parent=1 // pred_fallthru
      _
    // Predicated region
    $region10: #{tpu_custom_call.1} parent=1 // pred_check
      _
    $region11: #{tpu_custom_call.1} parent=1 // pred_check_branch
      %39 = sbr.rel (0) target = $region13
    $region12: #{tpu_custom_call.1} parent=1 // pred_region
      %s41 = ssub.s32 7680, 7680
      %42 = vsyncadd [#allocation7], %s41
      %s43 = sshll.u32 [#allocation8], 4
      %s44 = int_to_ptr.vmem [resolvable:$true] %s43
      %49 = dma.hbm_to_vmem [thread:$0]  %s2, 7680, %s44, [#allocation7], 128, 128, 8
    $region13: #{tpu_custom_call.1} parent=1 // pred_fallthru
      _
    // Predicated region
    $region14: #{tpu_custom_call.1} parent=1 // pred_check
      _
    $region15: #{tpu_custom_call.1} parent=1 // pred_check_branch
      %51 = sbr.rel (0) target = $region17
    $region16: #{tpu_custom_call.1} parent=1 // pred_region
      _
    $region17: #{tpu_custom_call.1} parent=1 // pred_fallthru
      _
    // Predicated region
    $region18: #{tpu_custom_call.1} parent=1 // pred_check
      _
    $region19: #{tpu_custom_call.1} parent=1 // pred_check_branch
      %53 = sbr.rel (0) target = $region21
    $region20: #{tpu_custom_call.1} parent=1 // pred_region
      _
    $region21: #{tpu_custom_call.1} parent=1 // pred_fallthru
      _
    // Predicated region
    $region22: #{tpu_custom_call.1} parent=1 // pred_check
      _
    $region23: #{tpu_custom_call.1} parent=1 // pred_check_branch
      %55 = sbr.rel (0) target = $region25
    $region24: #{tpu_custom_call.1} parent=1 // pred_region
      _
    $region25: #{tpu_custom_call.1} parent=1 // pred_fallthru
      _
    // Predicated region
    $region26: #{tpu_custom_call.1} parent=1 // pred_check
      _
    $region27: #{tpu_custom_call.1} parent=1 // pred_check_branch
      %57 = sbr.rel (0) target = $region29
    $region28: #{tpu_custom_call.1} parent=1 // pred_region
      %58 = dma.done [#allocation4], 128
    $region29: #{tpu_custom_call.1} parent=1 // pred_fallthru
      _
    // Predicated region
    $region30: #{tpu_custom_call.1} parent=1 // pred_check
      _
    $region31: #{tpu_custom_call.1} parent=1 // pred_check_branch
      %60 = sbr.rel (0) target = $region33
    $region32: #{tpu_custom_call.1} parent=1 // pred_region
      %61 = dma.done [#allocation7], 512
    $region33: #{tpu_custom_call.1} parent=1 // pred_fallthru
      _
    // Predicated region
    $region34: #{tpu_custom_call.1} parent=1 // pred_check
      _
    $region35: #{tpu_custom_call.1} parent=1 // pred_check_branch
      %63 = sbr.rel (0) target = $region37
    $region36: #{tpu_custom_call.1} parent=1 // pred_region
      %64 = dma.done [#allocation7], 7680
    $region37: #{tpu_custom_call.1} parent=1 // pred_fallthru
      _
    %v65 = vld [vmem:[#allocation6] sm:$0xff]
    %v66 = vld [vmem:[#allocation6 + $0x8] sm:$0xff]
    %v67 = vld [vmem:[#allocation6 + $0x10] sm:$0xff]
    %v68 = vld [vmem:[#allocation6 + $0x18] sm:$0x7]
    %v69 = vld [vmem:[#allocation8] sm:$0xff]
    %v70 = vld [vmem:[#allocation8 + $0x8] sm:$0xff]
    %v71 = vld [vmem:[#allocation8 + $0x10] sm:$0xff]
    %v72 = vld [vmem:[#allocation8 + $0x18] sm:$0xff]
    %v73 = vld [vmem:[#allocation8 + $0x20] sm:$0xff]
    %v74 = vld [vmem:[#allocation8 + $0x28] sm:$0xff]
    %v75 = vld [vmem:[#allocation8 + $0x30] sm:$0xff]
    %v76 = vld [vmem:[#allocation8 + $0x38] sm:$0xff]
    %v77 = vld [vmem:[#allocation8 + $0x40] sm:$0xff]
    %v78 = vld [vmem:[#allocation8 + $0x48] sm:$0xff]
    %v79 = vld [vmem:[#allocation8 + $0x50] sm:$0xff]
    %v80 = vld [vmem:[#allocation8 + $0x58] sm:$0xff]
    %v81 = vld [vmem:[#allocation8 + $0x60] sm:$0xff]
    %v82 = vld [vmem:[#allocation8 + $0x68] sm:$0xff]
    %v83 = vld [vmem:[#allocation8 + $0x70] sm:$0xff]
    %s84 = scalar_lea.vmem [#allocation8], 120
    %v85 = vld [vmem:[%s84] sm:$0xff]
    %v86 = vld [vmem:[%s84 + $0x8] sm:$0xff]
    %v87 = vld [vmem:[%s84 + $0x10] sm:$0xff]
    %v88 = vld [vmem:[%s84 + $0x18] sm:$0xff]
    %v89 = vld [vmem:[%s84 + $0x20] sm:$0xff]
    %v90 = vld [vmem:[%s84 + $0x28] sm:$0xff]
    %v91 = vld [vmem:[%s84 + $0x30] sm:$0xff]
    %v92 = vld [vmem:[%s84 + $0x38] sm:$0xff]
    %v93 = vld [vmem:[%s84 + $0x40] sm:$0xff]
    %v94 = vld [vmem:[%s84 + $0x48] sm:$0xff]
    %v95 = vld [vmem:[%s84 + $0x50] sm:$0xff]
    %v96 = vld [vmem:[%s84 + $0x58] sm:$0xff]
    %v97 = vld [vmem:[%s84 + $0x60] sm:$0xff]
    %v98 = vld [vmem:[%s84 + $0x68] sm:$0xff]
    %v99 = vld [vmem:[%s84 + $0x70] sm:$0xff]
    %s100 = scalar_lea.vmem [#allocation8], 240
    %v101 = vld [vmem:[%s100] sm:$0xff]
    %v102 = vld [vmem:[%s100 + $0x8] sm:$0xff]
    %v103 = vld [vmem:[%s100 + $0x10] sm:$0xff]
    %v104 = vld [vmem:[%s100 + $0x18] sm:$0xff]
    %v105 = vld [vmem:[%s100 + $0x20] sm:$0xff]
    %v106 = vld [vmem:[%s100 + $0x28] sm:$0xff]
    %v107 = vld [vmem:[%s100 + $0x30] sm:$0xff]
    %v108 = vld [vmem:[%s100 + $0x38] sm:$0xff]
    %v109 = vld [vmem:[%s100 + $0x40] sm:$0xff]
    %v110 = vld [vmem:[%s100 + $0x48] sm:$0xff]
    %v111 = vld [vmem:[%s100 + $0x50] sm:$0xff]
    %v112 = vld [vmem:[%s100 + $0x58] sm:$0xff]
    %v113 = vld [vmem:[%s100 + $0x60] sm:$0xff]
    %v114 = vld [vmem:[%s100 + $0x68] sm:$0xff]
    %v115 = vld [vmem:[%s100 + $0x70] sm:$0xff]
    %s116 = scalar_lea.vmem [#allocation8], 360
    %v117 = vld [vmem:[%s116] sm:$0xff]
    %v118 = vld [vmem:[%s116 + $0x8] sm:$0xff]
    %v119 = vld [vmem:[%s116 + $0x10] sm:$0xff]
    %v120 = vld [vmem:[%s116 + $0x18] sm:$0xff]
    %v121 = vld [vmem:[%s116 + $0x20] sm:$0xff]
    %v122 = vld [vmem:[%s116 + $0x28] sm:$0xff]
    %v123 = vld [vmem:[%s116 + $0x30] sm:$0xff]
    %v124 = vld [vmem:[%s116 + $0x38] sm:$0xff]
    %v125 = vld [vmem:[%s116 + $0x40] sm:$0xff]
    %v126 = vld [vmem:[%s116 + $0x48] sm:$0xff]
    %v127 = vld [vmem:[%s116 + $0x50] sm:$0xff]
    %v128 = vld [vmem:[%s116 + $0x58] sm:$0xff]
    %v129 = vld [vmem:[%s116 + $0x60] sm:$0xff]
    %v130 = vld [vmem:[%s116 + $0x68] sm:$0xff]
    %v131 = vld [vmem:[%s116 + $0x70] sm:$0xff]
    %v132 = vld [vmem:[%s4] sm:$0x1]
    %s133 = scalar_lea.vmem %s4, 1
    %v134 = vld [vmem:[%s133] sm:$0x1]
    %s135 = scalar_lea.vmem %s4, 2
    %v136 = vld [vmem:[%s135] sm:$0x1]
    %s137 = scalar_lea.vmem %s4, 3
    %v138 = vld [vmem:[%s137] sm:$0x1]
    %s139 = scalar_lea.vmem %s4, 4
    %v140 = vld [vmem:[%s139] sm:$0x1]
    %v141 = vld [vmem:[%s3] sm:$0x7]
    %v142 = vld [vmem:[#allocation2] sm:$0x1]
    %v143 = vld [vmem:[#allocation3] sm:$0xff]
    %v145 = vlaneseq
    %v146 = vshrl.u32 %v145, 7
    %v147 = vsub.s32 0, %v146
    %v148 = vrot.slane %v132, %v147
    %vm150 = vcmask 220160
    %v152 = vsel %vm150, %v143, 0
    %vm154 = vcmask 1042432
    %v156 = vsel %vm154, %v68, 0
    %158 = vmatprep.subr.mxu0 0.0
    %v159 = vand.u32 %v65, 4294901760
    %160 = vmatpush1.msra.mxu0 %v159
    %161 = vmatprep.subr.mxu0 0.0
    %v162 = vand.u32 %v66, 4294901760
    %163 = vmatpush1.msra.mxu0 %v162
    %164 = vmatprep.subr.mxu0 0.0
    %v165 = vand.u32 %v67, 4294901760
    %166 = vmatpush1.msra.mxu0 %v165
    %167 = vmatprep.subr.mxu0 0.0
    %v168 = vand.u32 %v156, 4294901760
    %169 = vmatpush1.msra.mxu0 %v168
    %170 = vmatprep.subr.mxu0 0.0
    %171 = vmatpush1.msra.mxu0 0.0
    %172 = vmatprep.subr.mxu0 0.0
    %173 = vmatpush1.msra.mxu0 0.0
    %174 = vmatprep.subr.mxu0 0.0
    %175 = vmatpush1.msra.mxu0 0.0
    %176 = vmatprep.subr.mxu0 0.0
    %177 = vmatpush1.msra.mxu0 0.0
    %178 = vmatprep.subr.mxu0 0.0
    %179 = vmatpush1.msra.mxu0 0.0
    %180 = vmatprep.subr.mxu0 0.0
    %181 = vmatpush1.msra.mxu0 0.0
    %182 = vmatprep.subr.mxu0 0.0
    %183 = vmatpush1.msra.mxu0 0.0
    %184 = vmatprep.subr.mxu0 0.0
    %185 = vmatpush1.msra.mxu0 0.0
    %186 = vmatprep.subr.mxu0 0.0
    %187 = vmatpush1.msra.mxu0 0.0
    %188 = vmatprep.subr.mxu0 0.0
    %189 = vmatpush1.msra.mxu0 0.0
    %190 = vmatprep.subr.mxu0 0.0
    %191 = vmatpush1.msra.mxu0 0.0
    %192 = vmatprep.subr.mxu0 0.0
    %193 = vmatpush1.msra.mxu0 0.0
    %194 = vmatprep.subr.mxu0 0.0
    %195 = vmatpush1.msra.mxu0 0.0
    %196 = vmatprep.subr.mxu0 0.0
    %197 = vmatpush1.msra.mxu0 0.0
    %198 = vmatprep.subr.mxu0 0.0
    %199 = vmatpush1.msra.mxu0 0.0
    %200 = vmatprep.subr.mxu0 0.0
    %201 = vmatpush1.msra.mxu0 0.0
    %202 = vmatprep.subr.mxu0 0.0
    %203 = vmatpush1.msra.mxu0 0.0
    %204 = vmatprep.subr.mxu0 0.0
    %205 = vmatpush1.msra.mxu0 0.0
    %206 = vmatprep.subr.mxu0 0.0
    %207 = vmatpush1.msra.mxu0 0.0
    %208 = vmatprep.subr.mxu0 0.0
    %209 = vmatpush1.msra.mxu0 0.0
    %210 = vmatprep.subr.mxu0 0.0
    %211 = vmatpush1.msra.mxu0 0.0
    %212 = vmatprep.subr.mxu0 0.0
    %213 = vmatpush1.msra.mxu0 0.0
    %214 = vmatprep.subr.mxu0 0.0
    %215 = vmatpush1.msra.mxu0 0.0
    %216 = vmatprep.subr.mxu0 0.0
    %217 = vmatpush1.msra.mxu0 0.0
    %218 = vmatprep.subr.mxu0 0.0
    %219 = vmatpush1.msra.mxu0 0.0
    %220 = vmatprep.subr.mxu0 0.0
    %221 = vmatpush1.msra.mxu0 0.0
    %222 = vmatprep.subr.mxu0 0.0
    %223 = vmatpush1.msra.mxu0 0.0
    %224 = vmatprep.subr.mxu0 0.0
    %225 = vmatpush1.msra.mxu0 0.0
    %226 = vmatprep.mubr.f32.mxu0 0.0
    %v227 = vand.u32 %v152, 4294901760
    %v228 = vsub.f32 %v152, %v227
    %v229 = vand.u32 %v228, 4294901760
    %v230 = vsub.f32 %v228, %v229
    %v231 = vand.u32 %v230, 4294901760
    %232 = vmatmul.mubr.f32.gmra.mrb[0].mxu0 %v231
    %v233 = vpop.f32.mrb[0].mxu0
    %v234 = vadd.f32 %v148, %v233
    %v235 = vpop.f32.mrb[0].mxu0
    %236 = vdwg.mxu0
    %237 = vmatprep.subr.mxu0 0.0
    %v238 = vand.u32 %v65, 4294901760
    %v239 = vsub.f32 %v65, %v238
    %v240 = vand.u32 %v239, 4294901760
    %v241 = vsub.f32 %v239, %v240
    %v242 = vand.u32 %v241, 4294901760
    %243 = vmatpush1.msra.mxu0 %v242
    %244 = vmatprep.subr.mxu0 0.0
    %v245 = vand.u32 %v66, 4294901760
    %v246 = vsub.f32 %v66, %v245
    %v247 = vand.u32 %v246, 4294901760
    %v248 = vsub.f32 %v246, %v247
    %v249 = vand.u32 %v248, 4294901760
    %250 = vmatpush1.msra.mxu0 %v249
    %251 = vmatprep.subr.mxu0 0.0
    %v252 = vand.u32 %v67, 4294901760
    %v253 = vsub.f32 %v67, %v252
    %v254 = vand.u32 %v253, 4294901760
    %v255 = vsub.f32 %v253, %v254
    %v256 = vand.u32 %v255, 4294901760
    %257 = vmatpush1.msra.mxu0 %v256
    %258 = vmatprep.subr.mxu0 0.0
    %v259 = vand.u32 %v156, 4294901760
    %v260 = vsub.f32 %v156, %v259
    %v261 = vand.u32 %v260, 4294901760
    %v262 = vsub.f32 %v260, %v261
    %v263 = vand.u32 %v262, 4294901760
    %264 = vmatpush1.msra.mxu0 %v263
    %265 = vmatprep.subr.mxu0 0.0
    %266 = vmatpush1.msra.mxu0 0.0
    %267 = vmatprep.subr.mxu0 0.0
    %268 = vmatpush1.msra.mxu0 0.0
    %269 = vmatprep.subr.mxu0 0.0
    %270 = vmatpush1.msra.mxu0 0.0
    %271 = vmatprep.subr.mxu0 0.0
    %272 = vmatpush1.msra.mxu0 0.0
    %273 = vmatprep.subr.mxu0 0.0
    %274 = vmatpush1.msra.mxu0 0.0
    %275 = vmatprep.subr.mxu0 0.0
    %276 = vmatpush1.msra.mxu0 0.0
    %277 = vmatprep.subr.mxu0 0.0
    %278 = vmatpush1.msra.mxu0 0.0
    %279 = vmatprep.subr.mxu0 0.0
    %280 = vmatpush1.msra.mxu0 0.0
    %281 = vmatprep.subr.mxu0 0.0
    %282 = vmatpush1.msra.mxu0 0.0
    %283 = vmatprep.subr.mxu0 0.0
    %284 = vmatpush1.msra.mxu0 0.0
    %285 = vmatprep.subr.mxu0 0.0
    %286 = vmatpush1.msra.mxu0 0.0
    %287 = vmatprep.subr.mxu0 0.0
    %288 = vmatpush1.msra.mxu0 0.0
    %289 = vmatprep.subr.mxu0 0.0
    %290 = vmatpush1.msra.mxu0 0.0
    %291 = vmatprep.subr.mxu0 0.0
    %292 = vmatpush1.msra.mxu0 0.0
    %293 = vmatprep.subr.mxu0 0.0
    %294 = vmatpush1.msra.mxu0 0.0
    %295 = vmatprep.subr.mxu0 0.0
    %296 = vmatpush1.msra.mxu0 0.0
    %297 = vmatprep.subr.mxu0 0.0
    %298 = vmatpush1.msra.mxu0 0.0
    %299 = vmatprep.subr.mxu0 0.0
    %300 = vmatpush1.msra.mxu0 0.0
    %301 = vmatprep.subr.mxu0 0.0
    %302 = vmatpush1.msra.mxu0 0.0
    %303 = vmatprep.subr.mxu0 0.0
    %304 = vmatpush1.msra.mxu0 0.0
    %305 = vmatprep.subr.mxu0 0.0
    %306 = vmatpush1.msra.mxu0 0.0
    %307 = vmatprep.subr.mxu0 0.0
    %308 = vmatpush1.msra.mxu0 0.0
    %309 = vmatprep.subr.mxu0 0.0
    %310 = vmatpush1.msra.mxu0 0.0
    %311 = vmatprep.subr.mxu0 0.0
    %312 = vmatpush1.msra.mxu0 0.0
    %313 = vmatprep.subr.mxu0 0.0
    %314 = vmatpush1.msra.mxu0 0.0
    %315 = vmatprep.subr.mxu0 0.0
    %316 = vmatpush1.msra.mxu0 0.0
    %317 = vmatprep.subr.mxu0 0.0
    %318 = vmatpush1.msra.mxu0 0.0
    %319 = vmatprep.subr.mxu0 0.0
    %320 = vmatpush1.msra.mxu0 0.0
    %321 = vmatprep.mubr.f32.mxu0 0.0
    %v322 = vand.u32 %v152, 4294901760
    %323 = vmatmul.mubr.f32.gmra.mrb[0].mxu0 %v322
    %v324 = vpop.f32.mrb[0].mxu0
    %v325 = vadd.f32 %v234, %v324
    %v326 = vpop.f32.mrb[0].mxu0
    %327 = vdwg.mxu0
    %328 = vmatprep.subr.mxu0 0.0
    %v329 = vand.u32 %v65, 4294901760
    %v330 = vsub.f32 %v65, %v329
    %331 = vmatpush1.msra.mxu0 %v330
    %332 = vmatprep.subr.mxu0 0.0
    %v333 = vand.u32 %v66, 4294901760
    %v334 = vsub.f32 %v66, %v333
    %335 = vmatpush1.msra.mxu0 %v334
    %336 = vmatprep.subr.mxu0 0.0
    %v337 = vand.u32 %v67, 4294901760
    %v338 = vsub.f32 %v67, %v337
    %339 = vmatpush1.msra.mxu0 %v338
    %340 = vmatprep.subr.mxu0 0.0
    %v341 = vand.u32 %v156, 4294901760
    %v342 = vsub.f32 %v156, %v341
    %343 = vmatpush1.msra.mxu0 %v342
    %344 = vmatprep.subr.mxu0 0.0
    %345 = vmatpush1.msra.mxu0 0.0
    %346 = vmatprep.subr.mxu0 0.0
    %347 = vmatpush1.msra.mxu0 0.0
    %348 = vmatprep.subr.mxu0 0.0
    %349 = vmatpush1.msra.mxu0 0.0
    %350 = vmatprep.subr.mxu0 0.0
    %351 = vmatpush1.msra.mxu0 0.0
    %352 = vmatprep.subr.mxu0 0.0
    %353 = vmatpush1.msra.mxu0 0.0
    %354 = vmatprep.subr.mxu0 0.0
    %355 = vmatpush1.msra.mxu0 0.0
    %356 = vmatprep.subr.mxu0 0.0
    %357 = vmatpush1.msra.mxu0 0.0
    %358 = vmatprep.subr.mxu0 0.0
    %359 = vmatpush1.msra.mxu0 0.0
    %360 = vmatprep.subr.mxu0 0.0
    %361 = vmatpush1.msra.mxu0 0.0
    %362 = vmatprep.subr.mxu0 0.0
    %363 = vmatpush1.msra.mxu0 0.0
    %364 = vmatprep.subr.mxu0 0.0
    %365 = vmatpush1.msra.mxu0 0.0
    %366 = vmatprep.subr.mxu0 0.0
    %367 = vmatpush1.msra.mxu0 0.0
    %368 = vmatprep.subr.mxu0 0.0
    %369 = vmatpush1.msra.mxu0 0.0
    %370 = vmatprep.subr.mxu0 0.0
    %371 = vmatpush1.msra.mxu0 0.0
    %372 = vmatprep.subr.mxu0 0.0
    %373 = vmatpush1.msra.mxu0 0.0
    %374 = vmatprep.subr.mxu0 0.0
    %375 = vmatpush1.msra.mxu0 0.0
    %376 = vmatprep.subr.mxu0 0.0
    %377 = vmatpush1.msra.mxu0 0.0
    %378 = vmatprep.subr.mxu0 0.0
    %379 = vmatpush1.msra.mxu0 0.0
    %380 = vmatprep.subr.mxu0 0.0
    %381 = vmatpush1.msra.mxu0 0.0
    %382 = vmatprep.subr.mxu0 0.0
    %383 = vmatpush1.msra.mxu0 0.0
    %384 = vmatprep.subr.mxu0 0.0
    %385 = vmatpush1.msra.mxu0 0.0
    %386 = vmatprep.subr.mxu0 0.0
    %387 = vmatpush1.msra.mxu0 0.0
    %388 = vmatprep.subr.mxu0 0.0
    %389 = vmatpush1.msra.mxu0 0.0
    %390 = vmatprep.subr.mxu0 0.0
    %391 = vmatpush1.msra.mxu0 0.0
    %392 = vmatprep.subr.mxu0 0.0
    %393 = vmatpush1.msra.mxu0 0.0
    %394 = vmatprep.subr.mxu0 0.0
    %395 = vmatpush1.msra.mxu0 0.0
    %396 = vmatprep.subr.mxu0 0.0
    %397 = vmatpush1.msra.mxu0 0.0
    %398 = vmatprep.subr.mxu0 0.0
    %399 = vmatpush1.msra.mxu0 0.0
    %400 = vmatprep.mubr.f32.mxu0 0.0
    %v401 = vand.u32 %v152, 4294901760
    %v402 = vsub.f32 %v152, %v401
    %403 = vmatmul.mubr.f32.gmra.mrb[0].mxu0 %v402
    %v404 = vpop.f32.mrb[0].mxu0
    %v405 = vadd.f32 %v325, %v404
    %v406 = vpop.f32.mrb[0].mxu0
    %407 = vdwg.mxu0
    %408 = vmatprep.subr.mxu0 0.0
    %v409 = vand.u32 %v65, 4294901760
    %410 = vmatpush1.msra.mxu0 %v409
    %411 = vmatprep.subr.mxu0 0.0
    %v412 = vand.u32 %v66, 4294901760
    %413 = vmatpush1.msra.mxu0 %v412
    %414 = vmatprep.subr.mxu0 0.0
    %v415 = vand.u32 %v67, 4294901760
    %416 = vmatpush1.msra.mxu0 %v415
    %417 = vmatprep.subr.mxu0 0.0
    %v418 = vand.u32 %v156, 4294901760
    %419 = vmatpush1.msra.mxu0 %v418
    %420 = vmatprep.subr.mxu0 0.0
    %421 = vmatpush1.msra.mxu0 0.0
    %422 = vmatprep.subr.mxu0 0.0
    %423 = vmatpush1.msra.mxu0 0.0
    %424 = vmatprep.subr.mxu0 0.0
    %425 = vmatpush1.msra.mxu0 0.0
    %426 = vmatprep.subr.mxu0 0.0
    %427 = vmatpush1.msra.mxu0 0.0
    %428 = vmatprep.subr.mxu0 0.0
    %429 = vmatpush1.msra.mxu0 0.0
    %430 = vmatprep.subr.mxu0 0.0
    %431 = vmatpush1.msra.mxu0 0.0
    %432 = vmatprep.subr.mxu0 0.0
    %433 = vmatpush1.msra.mxu0 0.0
    %434 = vmatprep.subr.mxu0 0.0
    %435 = vmatpush1.msra.mxu0 0.0
    %436 = vmatprep.subr.mxu0 0.0
    %437 = vmatpush1.msra.mxu0 0.0
    %438 = vmatprep.subr.mxu0 0.0
    %439 = vmatpush1.msra.mxu0 0.0
    %440 = vmatprep.subr.mxu0 0.0
    %441 = vmatpush1.msra.mxu0 0.0
    %442 = vmatprep.subr.mxu0 0.0
    %443 = vmatpush1.msra.mxu0 0.0
    %444 = vmatprep.subr.mxu0 0.0
    %445 = vmatpush1.msra.mxu0 0.0
    %446 = vmatprep.subr.mxu0 0.0
    %447 = vmatpush1.msra.mxu0 0.0
    %448 = vmatprep.subr.mxu0 0.0
    %449 = vmatpush1.msra.mxu0 0.0
    %450 = vmatprep.subr.mxu0 0.0
    %451 = vmatpush1.msra.mxu0 0.0
    %452 = vmatprep.subr.mxu0 0.0
    %453 = vmatpush1.msra.mxu0 0.0
    %454 = vmatprep.subr.mxu0 0.0
    %455 = vmatpush1.msra.mxu0 0.0
    %456 = vmatprep.subr.mxu0 0.0
    %457 = vmatpush1.msra.mxu0 0.0
    %458 = vmatprep.subr.mxu0 0.0
    %459 = vmatpush1.msra.mxu0 0.0
    %460 = vmatprep.subr.mxu0 0.0
    %461 = vmatpush1.msra.mxu0 0.0
    %462 = vmatprep.subr.mxu0 0.0
    %463 = vmatpush1.msra.mxu0 0.0
    %464 = vmatprep.subr.mxu0 0.0
    %465 = vmatpush1.msra.mxu0 0.0
    %466 = vmatprep.subr.mxu0 0.0
    %467 = vmatpush1.msra.mxu0 0.0
    %468 = vmatprep.subr.mxu0 0.0
    %469 = vmatpush1.msra.mxu0 0.0
    %470 = vmatprep.subr.mxu0 0.0
    %471 = vmatpush1.msra.mxu0 0.0
    %472 = vmatprep.subr.mxu0 0.0
    %473 = vmatpush1.msra.mxu0 0.0
    %474 = vmatprep.subr.mxu0 0.0
    %475 = vmatpush1.msra.mxu0 0.0
    %476 = vmatprep.mubr.f32.mxu0 0.0
    %v477 = vand.u32 %v152, 4294901760
    %v478 = vsub.f32 %v152, %v477
    %v479 = vand.u32 %v478, 4294901760
    %480 = vmatmul.mubr.f32.gmra.mrb[0].mxu0 %v479
    %v481 = vpop.f32.mrb[0].mxu0
    %v482 = vadd.f32 %v405, %v481
    %v483 = vpop.f32.mrb[0].mxu0
    %484 = vdwg.mxu0
    %485 = vmatprep.subr.mxu0 0.0
    %v486 = vand.u32 %v65, 4294901760
    %v487 = vsub.f32 %v65, %v486
    %v488 = vand.u32 %v487, 4294901760
    %489 = vmatpush1.msra.mxu0 %v488
    %490 = vmatprep.subr.mxu0 0.0
    %v491 = vand.u32 %v66, 4294901760
    %v492 = vsub.f32 %v66, %v491
    %v493 = vand.u32 %v492, 4294901760
    %494 = vmatpush1.msra.mxu0 %v493
    %495 = vmatprep.subr.mxu0 0.0
    %v496 = vand.u32 %v67, 4294901760
    %v497 = vsub.f32 %v67, %v496
    %v498 = vand.u32 %v497, 4294901760
    %499 = vmatpush1.msra.mxu0 %v498
    %500 = vmatprep.subr.mxu0 0.0
    %v501 = vand.u32 %v156, 4294901760
    %v502 = vsub.f32 %v156, %v501
    %v503 = vand.u32 %v502, 4294901760
    %504 = vmatpush1.msra.mxu0 %v503
    %505 = vmatprep.subr.mxu0 0.0
    %506 = vmatpush1.msra.mxu0 0.0
    %507 = vmatprep.subr.mxu0 0.0
    %508 = vmatpush1.msra.mxu0 0.0
    %509 = vmatprep.subr.mxu0 0.0
    %510 = vmatpush1.msra.mxu0 0.0
    %511 = vmatprep.subr.mxu0 0.0
    %512 = vmatpush1.msra.mxu0 0.0
    %513 = vmatprep.subr.mxu0 0.0
    %514 = vmatpush1.msra.mxu0 0.0
    %515 = vmatprep.subr.mxu0 0.0
    %516 = vmatpush1.msra.mxu0 0.0
    %517 = vmatprep.subr.mxu0 0.0
    %518 = vmatpush1.msra.mxu0 0.0
    %519 = vmatprep.subr.mxu0 0.0
    %520 = vmatpush1.msra.mxu0 0.0
    %521 = vmatprep.subr.mxu0 0.0
    %522 = vmatpush1.msra.mxu0 0.0
    %523 = vmatprep.subr.mxu0 0.0
    %524 = vmatpush1.msra.mxu0 0.0
    %525 = vmatprep.subr.mxu0 0.0
    %526 = vmatpush1.msra.mxu0 0.0
    %527 = vmatprep.subr.mxu0 0.0
    %528 = vmatpush1.msra.mxu0 0.0
    %529 = vmatprep.subr.mxu0 0.0
    %530 = vmatpush1.msra.mxu0 0.0
    %531 = vmatprep.subr.mxu0 0.0
    %532 = vmatpush1.msra.mxu0 0.0
    %533 = vmatprep.subr.mxu0 0.0
    %534 = vmatpush1.msra.mxu0 0.0
    %535 = vmatprep.subr.mxu0 0.0
    %536 = vmatpush1.msra.mxu0 0.0
    %537 = vmatprep.subr.mxu0 0.0
    %538 = vmatpush1.msra.mxu0 0.0
    %539 = vmatprep.subr.mxu0 0.0
    %540 = vmatpush1.msra.mxu0 0.0
    %541 = vmatprep.subr.mxu0 0.0
    %542 = vmatpush1.msra.mxu0 0.0
    %543 = vmatprep.subr.mxu0 0.0
    %544 = vmatpush1.msra.mxu0 0.0
    %545 = vmatprep.subr.mxu0 0.0
    %546 = vmatpush1.msra.mxu0 0.0
    %547 = vmatprep.subr.mxu0 0.0
    %548 = vmatpush1.msra.mxu0 0.0
    %549 = vmatprep.subr.mxu0 0.0
    %550 = vmatpush1.msra.mxu0 0.0
    %551 = vmatprep.subr.mxu0 0.0
    %552 = vmatpush1.msra.mxu0 0.0
    %553 = vmatprep.subr.mxu0 0.0
    %554 = vmatpush1.msra.mxu0 0.0
    %555 = vmatprep.subr.mxu0 0.0
    %556 = vmatpush1.msra.mxu0 0.0
    %557 = vmatprep.subr.mxu0 0.0
    %558 = vmatpush1.msra.mxu0 0.0
    %559 = vmatprep.subr.mxu0 0.0
    %560 = vmatpush1.msra.mxu0 0.0
    %561 = vmatprep.mubr.f32.mxu0 0.0
    %v562 = vand.u32 %v152, 4294901760
    %563 = vmatmul.mubr.f32.gmra.mrb[0].mxu0 %v562
    %v564 = vpop.f32.mrb[0].mxu0
    %v565 = vadd.f32 %v482, %v564
    %v566 = vpop.f32.mrb[0].mxu0
    %567 = vdwg.mxu0
    %568 = vmatprep.subr.mxu0 0.0
    %v569 = vand.u32 %v65, 4294901760
    %570 = vmatpush1.msra.mxu0 %v569
    %571 = vmatprep.subr.mxu0 0.0
    %v572 = vand.u32 %v66, 4294901760
    %573 = vmatpush1.msra.mxu0 %v572
    %574 = vmatprep.subr.mxu0 0.0
    %v575 = vand.u32 %v67, 4294901760
    %576 = vmatpush1.msra.mxu0 %v575
    %577 = vmatprep.subr.mxu0 0.0
    %v578 = vand.u32 %v156, 4294901760
    %579 = vmatpush1.msra.mxu0 %v578
    %580 = vmatprep.subr.mxu0 0.0
    %581 = vmatpush1.msra.mxu0 0.0
    %582 = vmatprep.subr.mxu0 0.0
    %583 = vmatpush1.msra.mxu0 0.0
    %584 = vmatprep.subr.mxu0 0.0
    %585 = vmatpush1.msra.mxu0 0.0
    %586 = vmatprep.subr.mxu0 0.0
    %587 = vmatpush1.msra.mxu0 0.0
    %588 = vmatprep.subr.mxu0 0.0
    %589 = vmatpush1.msra.mxu0 0.0
    %590 = vmatprep.subr.mxu0 0.0
    %591 = vmatpush1.msra.mxu0 0.0
    %592 = vmatprep.subr.mxu0 0.0
    %593 = vmatpush1.msra.mxu0 0.0
    %594 = vmatprep.subr.mxu0 0.0
    %595 = vmatpush1.msra.mxu0 0.0
    %596 = vmatprep.subr.mxu0 0.0
    %597 = vmatpush1.msra.mxu0 0.0
    %598 = vmatprep.subr.mxu0 0.0
    %599 = vmatpush1.msra.mxu0 0.0
    %600 = vmatprep.subr.mxu0 0.0
    %601 = vmatpush1.msra.mxu0 0.0
    %602 = vmatprep.subr.mxu0 0.0
    %603 = vmatpush1.msra.mxu0 0.0
    %604 = vmatprep.subr.mxu0 0.0
    %605 = vmatpush1.msra.mxu0 0.0
    %606 = vmatprep.subr.mxu0 0.0
    %607 = vmatpush1.msra.mxu0 0.0
    %608 = vmatprep.subr.mxu0 0.0
    %609 = vmatpush1.msra.mxu0 0.0
    %610 = vmatprep.subr.mxu0 0.0
    %611 = vmatpush1.msra.mxu0 0.0
    %612 = vmatprep.subr.mxu0 0.0
    %613 = vmatpush1.msra.mxu0 0.0
    %614 = vmatprep.subr.mxu0 0.0
    %615 = vmatpush1.msra.mxu0 0.0
    %616 = vmatprep.subr.mxu0 0.0
    %617 = vmatpush1.msra.mxu0 0.0
    %618 = vmatprep.subr.mxu0 0.0
    %619 = vmatpush1.msra.mxu0 0.0
    %620 = vmatprep.subr.mxu0 0.0
    %621 = vmatpush1.msra.mxu0 0.0
    %622 = vmatprep.subr.mxu0 0.0
    %623 = vmatpush1.msra.mxu0 0.0
    %624 = vmatprep.subr.mxu0 0.0
    %625 = vmatpush1.msra.mxu0 0.0
    %626 = vmatprep.subr.mxu0 0.0
    %627 = vmatpush1.msra.mxu0 0.0
    %628 = vmatprep.subr.mxu0 0.0
    %629 = vmatpush1.msra.mxu0 0.0
    %630 = vmatprep.subr.mxu0 0.0
    %631 = vmatpush1.msra.mxu0 0.0
    %632 = vmatprep.subr.mxu0 0.0
    %633 = vmatpush1.msra.mxu0 0.0
    %634 = vmatprep.subr.mxu0 0.0
    %635 = vmatpush1.msra.mxu0 0.0
    %636 = vmatprep.mubr.f32.mxu0 0.0
    %v637 = vand.u32 %v152, 4294901760
    %638 = vmatmul.mubr.f32.gmra.mrb[0].mxu0 %v637
    %v639 = vpop.f32.mrb[0].mxu0
    %v640 = vadd.f32 %v565, %v639
    %v641 = vpop.f32.mrb[0].mxu0
    %642 = vdwg.mxu0
    %v643 = vtanh.pop %v640
    %v645 = vlaneseq
    %v646 = vshrl.u32 %v645, 7
    %v647 = vsub.s32 0, %v646
    %v648 = vrot.slane %v134, %v647
    %vm650 = vcmask 982016
    %v652 = vsel %vm650, %v643, 0
    %654 = vmatprep.subr.mxu0 0.0
    %v655 = vand.u32 %v69, 4294901760
    %656 = vmatpush1.msra.mxu0 %v655
    %657 = vmatprep.subr.mxu0 0.0
    %v658 = vand.u32 %v70, 4294901760
    %659 = vmatpush1.msra.mxu0 %v658
    %660 = vmatprep.subr.mxu0 0.0
    %v661 = vand.u32 %v71, 4294901760
    %662 = vmatpush1.msra.mxu0 %v661
    %663 = vmatprep.subr.mxu0 0.0
    %v664 = vand.u32 %v72, 4294901760
    %665 = vmatpush1.msra.mxu0 %v664
    %666 = vmatprep.subr.mxu0 0.0
    %v667 = vand.u32 %v73, 4294901760
    %668 = vmatpush1.msra.mxu0 %v667
    %669 = vmatprep.subr.mxu0 0.0
    %v670 = vand.u32 %v74, 4294901760
    %671 = vmatpush1.msra.mxu0 %v670
    %672 = vmatprep.subr.mxu0 0.0
    %v673 = vand.u32 %v75, 4294901760
    %674 = vmatpush1.msra.mxu0 %v673
    %675 = vmatprep.subr.mxu0 0.0
    %v676 = vand.u32 %v76, 4294901760
    %677 = vmatpush1.msra.mxu0 %v676
    %678 = vmatprep.subr.mxu0 0.0
    %v679 = vand.u32 %v77, 4294901760
    %680 = vmatpush1.msra.mxu0 %v679
    %681 = vmatprep.subr.mxu0 0.0
    %v682 = vand.u32 %v78, 4294901760
    %683 = vmatpush1.msra.mxu0 %v682
    %684 = vmatprep.subr.mxu0 0.0
    %v685 = vand.u32 %v79, 4294901760
    %686 = vmatpush1.msra.mxu0 %v685
    %687 = vmatprep.subr.mxu0 0.0
    %v688 = vand.u32 %v80, 4294901760
    %689 = vmatpush1.msra.mxu0 %v688
    %690 = vmatprep.subr.mxu0 0.0
    %v691 = vand.u32 %v81, 4294901760
    %692 = vmatpush1.msra.mxu0 %v691
    %693 = vmatprep.subr.mxu0 0.0
    %v694 = vand.u32 %v82, 4294901760
    %695 = vmatpush1.msra.mxu0 %v694
    %696 = vmatprep.subr.mxu0 0.0
    %v697 = vand.u32 %v83, 4294901760
    %698 = vmatpush1.msra.mxu0 %v697
    %699 = vmatprep.subr.mxu0 0.0
    %700 = vmatpush1.msra.mxu0 0.0
    %701 = vmatprep.subr.mxu0 0.0
    %702 = vmatpush1.msra.mxu0 0.0
    %703 = vmatprep.subr.mxu0 0.0
    %704 = vmatpush1.msra.mxu0 0.0
    %705 = vmatprep.subr.mxu0 0.0
    %706 = vmatpush1.msra.mxu0 0.0
    %707 = vmatprep.subr.mxu0 0.0
    %708 = vmatpush1.msra.mxu0 0.0
    %709 = vmatprep.subr.mxu0 0.0
    %710 = vmatpush1.msra.mxu0 0.0
    %711 = vmatprep.subr.mxu0 0.0
    %712 = vmatpush1.msra.mxu0 0.0
    %713 = vmatprep.subr.mxu0 0.0
    %714 = vmatpush1.msra.mxu0 0.0
    %715 = vmatprep.subr.mxu0 0.0
    %716 = vmatpush1.msra.mxu0 0.0
    %717 = vmatprep.subr.mxu0 0.0
    %718 = vmatpush1.msra.mxu0 0.0
    %719 = vmatprep.subr.mxu0 0.0
    %720 = vmatpush1.msra.mxu0 0.0
    %721 = vmatprep.subr.mxu0 0.0
    %722 = vmatpush1.msra.mxu0 0.0
    %723 = vmatprep.subr.mxu0 0.0
    %724 = vmatpush1.msra.mxu0 0.0
    %725 = vmatprep.subr.mxu0 0.0
    %726 = vmatpush1.msra.mxu0 0.0
    %727 = vmatprep.subr.mxu0 0.0
    %728 = vmatpush1.msra.mxu0 0.0
    %729 = vmatprep.subr.mxu0 0.0
    %730 = vmatpush1.msra.mxu0 0.0
    %731 = vmatprep.subr.mxu0 0.0
    %732 = vmatpush1.msra.mxu0 0.0
    %733 = vmatprep.mubr.f32.mxu0 0.0
    %v734 = vand.u32 %v652, 4294901760
    %v735 = vsub.f32 %v652, %v734
    %v736 = vand.u32 %v735, 4294901760
    %v737 = vsub.f32 %v735, %v736
    %v738 = vand.u32 %v737, 4294901760
    %739 = vmatmul.mubr.f32.gmra.mrb[0].mxu0 %v738
    %v740 = vpop.f32.mrb[0].mxu0
    %v741 = vadd.f32 %v648, %v740
    %v742 = vpop.f32.mrb[0].mxu0
    %743 = vdwg.mxu0
    %744 = vmatprep.subr.mxu0 0.0
    %v745 = vand.u32 %v69, 4294901760
    %v746 = vsub.f32 %v69, %v745
    %v747 = vand.u32 %v746, 4294901760
    %v748 = vsub.f32 %v746, %v747
    %v749 = vand.u32 %v748, 4294901760
    %750 = vmatpush1.msra.mxu0 %v749
    %751 = vmatprep.subr.mxu0 0.0
    %v752 = vand.u32 %v70, 4294901760
    %v753 = vsub.f32 %v70, %v752
    %v754 = vand.u32 %v753, 4294901760
    %v755 = vsub.f32 %v753, %v754
    %v756 = vand.u32 %v755, 4294901760
    %757 = vmatpush1.msra.mxu0 %v756
    %758 = vmatprep.subr.mxu0 0.0
    %v759 = vand.u32 %v71, 4294901760
    %v760 = vsub.f32 %v71, %v759
    %v761 = vand.u32 %v760, 4294901760
    %v762 = vsub.f32 %v760, %v761
    %v763 = vand.u32 %v762, 4294901760
    %764 = vmatpush1.msra.mxu0 %v763
    %765 = vmatprep.subr.mxu0 0.0
    %v766 = vand.u32 %v72, 4294901760
    %v767 = vsub.f32 %v72, %v766
    %v768 = vand.u32 %v767, 4294901760
    %v769 = vsub.f32 %v767, %v768
    %v770 = vand.u32 %v769, 4294901760
    %771 = vmatpush1.msra.mxu0 %v770
    %772 = vmatprep.subr.mxu0 0.0
    %v773 = vand.u32 %v73, 4294901760
    %v774 = vsub.f32 %v73, %v773
    %v775 = vand.u32 %v774, 4294901760
    %v776 = vsub.f32 %v774, %v775
    %v777 = vand.u32 %v776, 4294901760
    %778 = vmatpush1.msra.mxu0 %v777
    %779 = vmatprep.subr.mxu0 0.0
    %v780 = vand.u32 %v74, 4294901760
    %v781 = vsub.f32 %v74, %v780
    %v782 = vand.u32 %v781, 4294901760
    %v783 = vsub.f32 %v781, %v782
    %v784 = vand.u32 %v783, 4294901760
    %785 = vmatpush1.msra.mxu0 %v784
    %786 = vmatprep.subr.mxu0 0.0
    %v787 = vand.u32 %v75, 4294901760
    %v788 = vsub.f32 %v75, %v787
    %v789 = vand.u32 %v788, 4294901760
    %v790 = vsub.f32 %v788, %v789
    %v791 = vand.u32 %v790, 4294901760
    %792 = vmatpush1.msra.mxu0 %v791
    %793 = vmatprep.subr.mxu0 0.0
    %v794 = vand.u32 %v76, 4294901760
    %v795 = vsub.f32 %v76, %v794
    %v796 = vand.u32 %v795, 4294901760
    %v797 = vsub.f32 %v795, %v796
    %v798 = vand.u32 %v797, 4294901760
    %799 = vmatpush1.msra.mxu0 %v798
    %800 = vmatprep.subr.mxu0 0.0
    %v801 = vand.u32 %v77, 4294901760
    %v802 = vsub.f32 %v77, %v801
    %v803 = vand.u32 %v802, 4294901760
    %v804 = vsub.f32 %v802, %v803
    %v805 = vand.u32 %v804, 4294901760
    %806 = vmatpush1.msra.mxu0 %v805
    %807 = vmatprep.subr.mxu0 0.0
    %v808 = vand.u32 %v78, 4294901760
    %v809 = vsub.f32 %v78, %v808
    %v810 = vand.u32 %v809, 4294901760
    %v811 = vsub.f32 %v809, %v810
    %v812 = vand.u32 %v811, 4294901760
    %813 = vmatpush1.msra.mxu0 %v812
    %814 = vmatprep.subr.mxu0 0.0
    %v815 = vand.u32 %v79, 4294901760
    %v816 = vsub.f32 %v79, %v815
    %v817 = vand.u32 %v816, 4294901760
    %v818 = vsub.f32 %v816, %v817
    %v819 = vand.u32 %v818, 4294901760
    %820 = vmatpush1.msra.mxu0 %v819
    %821 = vmatprep.subr.mxu0 0.0
    %v822 = vand.u32 %v80, 4294901760
    %v823 = vsub.f32 %v80, %v822
    %v824 = vand.u32 %v823, 4294901760
    %v825 = vsub.f32 %v823, %v824
    %v826 = vand.u32 %v825, 4294901760
    %827 = vmatpush1.msra.mxu0 %v826
    %828 = vmatprep.subr.mxu0 0.0
    %v829 = vand.u32 %v81, 4294901760
    %v830 = vsub.f32 %v81, %v829
    %v831 = vand.u32 %v830, 4294901760
    %v832 = vsub.f32 %v830, %v831
    %v833 = vand.u32 %v832, 4294901760
    %834 = vmatpush1.msra.mxu0 %v833
    %835 = vmatprep.subr.mxu0 0.0
    %v836 = vand.u32 %v82, 4294901760
    %v837 = vsub.f32 %v82, %v836
    %v838 = vand.u32 %v837, 4294901760
    %v839 = vsub.f32 %v837, %v838
    %v840 = vand.u32 %v839, 4294901760
    %841 = vmatpush1.msra.mxu0 %v840
    %842 = vmatprep.subr.mxu0 0.0
    %v843 = vand.u32 %v83, 4294901760
    %v844 = vsub.f32 %v83, %v843
    %v845 = vand.u32 %v844, 4294901760
    %v846 = vsub.f32 %v844, %v845
    %v847 = vand.u32 %v846, 4294901760
    %848 = vmatpush1.msra.mxu0 %v847
    %849 = vmatprep.subr.mxu0 0.0
    %850 = vmatpush1.msra.mxu0 0.0
    %851 = vmatprep.subr.mxu0 0.0
    %852 = vmatpush1.msra.mxu0 0.0
    %853 = vmatprep.subr.mxu0 0.0
    %854 = vmatpush1.msra.mxu0 0.0
    %855 = vmatprep.subr.mxu0 0.0
    %856 = vmatpush1.msra.mxu0 0.0
    %857 = vmatprep.subr.mxu0 0.0
    %858 = vmatpush1.msra.mxu0 0.0
    %859 = vmatprep.subr.mxu0 0.0
    %860 = vmatpush1.msra.mxu0 0.0
    %861 = vmatprep.subr.mxu0 0.0
    %862 = vmatpush1.msra.mxu0 0.0
    %863 = vmatprep.subr.mxu0 0.0
    %864 = vmatpush1.msra.mxu0 0.0
    %865 = vmatprep.subr.mxu0 0.0
    %866 = vmatpush1.msra.mxu0 0.0
    %867 = vmatprep.subr.mxu0 0.0
    %868 = vmatpush1.msra.mxu0 0.0
    %869 = vmatprep.subr.mxu0 0.0
    %870 = vmatpush1.msra.mxu0 0.0
    %871 = vmatprep.subr.mxu0 0.0
    %872 = vmatpush1.msra.mxu0 0.0
    %873 = vmatprep.subr.mxu0 0.0
    %874 = vmatpush1.msra.mxu0 0.0
    %875 = vmatprep.subr.mxu0 0.0
    %876 = vmatpush1.msra.mxu0 0.0
    %877 = vmatprep.subr.mxu0 0.0
    %878 = vmatpush1.msra.mxu0 0.0
    %879 = vmatprep.subr.mxu0 0.0
    %880 = vmatpush1.msra.mxu0 0.0
    %881 = vmatprep.subr.mxu0 0.0
    %882 = vmatpush1.msra.mxu0 0.0
    %883 = vmatprep.mubr.f32.mxu0 0.0
    %v884 = vand.u32 %v652, 4294901760
    %885 = vmatmul.mubr.f32.gmra.mrb[0].mxu0 %v884
    %v886 = vpop.f32.mrb[0].mxu0
    %v887 = vadd.f32 %v741, %v886
    %v888 = vpop.f32.mrb[0].mxu0
    %889 = vdwg.mxu0
    %890 = vmatprep.subr.mxu0 0.0
    %v891 = vand.u32 %v69, 4294901760
    %v892 = vsub.f32 %v69, %v891
    %893 = vmatpush1.msra.mxu0 %v892
    %894 = vmatprep.subr.mxu0 0.0
    %v895 = vand.u32 %v70, 4294901760
    %v896 = vsub.f32 %v70, %v895
    %897 = vmatpush1.msra.mxu0 %v896
    %898 = vmatprep.subr.mxu0 0.0
    %v899 = vand.u32 %v71, 4294901760
    %v900 = vsub.f32 %v71, %v899
    %901 = vmatpush1.msra.mxu0 %v900
    %902 = vmatprep.subr.mxu0 0.0
    %v903 = vand.u32 %v72, 4294901760
    %v904 = vsub.f32 %v72, %v903
    %905 = vmatpush1.msra.mxu0 %v904
    %906 = vmatprep.subr.mxu0 0.0
    %v907 = vand.u32 %v73, 4294901760
    %v908 = vsub.f32 %v73, %v907
    %909 = vmatpush1.msra.mxu0 %v908
    %910 = vmatprep.subr.mxu0 0.0
    %v911 = vand.u32 %v74, 4294901760
    %v912 = vsub.f32 %v74, %v911
    %913 = vmatpush1.msra.mxu0 %v912
    %914 = vmatprep.subr.mxu0 0.0
    %v915 = vand.u32 %v75, 4294901760
    %v916 = vsub.f32 %v75, %v915
    %917 = vmatpush1.msra.mxu0 %v916
    %918 = vmatprep.subr.mxu0 0.0
    %v919 = vand.u32 %v76, 4294901760
    %v920 = vsub.f32 %v76, %v919
    %921 = vmatpush1.msra.mxu0 %v920
    %922 = vmatprep.subr.mxu0 0.0
    %v923 = vand.u32 %v77, 4294901760
    %v924 = vsub.f32 %v77, %v923
    %925 = vmatpush1.msra.mxu0 %v924
    %926 = vmatprep.subr.mxu0 0.0
    %v927 = vand.u32 %v78, 4294901760
    %v928 = vsub.f32 %v78, %v927
    %929 = vmatpush1.msra.mxu0 %v928
    %930 = vmatprep.subr.mxu0 0.0
    %v931 = vand.u32 %v79, 4294901760
    %v932 = vsub.f32 %v79, %v931
    %933 = vmatpush1.msra.mxu0 %v932
    %934 = vmatprep.subr.mxu0 0.0
    %v935 = vand.u32 %v80, 4294901760
    %v936 = vsub.f32 %v80, %v935
    %937 = vmatpush1.msra.mxu0 %v936
    %938 = vmatprep.subr.mxu0 0.0
    %v939 = vand.u32 %v81, 4294901760
    %v940 = vsub.f32 %v81, %v939
    %941 = vmatpush1.msra.mxu0 %v940
    %942 = vmatprep.subr.mxu0 0.0
    %v943 = vand.u32 %v82, 4294901760
    %v944 = vsub.f32 %v82, %v943
    %945 = vmatpush1.msra.mxu0 %v944
    %946 = vmatprep.subr.mxu0 0.0
    %v947 = vand.u32 %v83, 4294901760
    %v948 = vsub.f32 %v83, %v947
    %949 = vmatpush1.msra.mxu0 %v948
    %950 = vmatprep.subr.mxu0 0.0
    %951 = vmatpush1.msra.mxu0 0.0
    %952 = vmatprep.subr.mxu0 0.0
    %953 = vmatpush1.msra.mxu0 0.0
    %954 = vmatprep.subr.mxu0 0.0
    %955 = vmatpush1.msra.mxu0 0.0
    %956 = vmatprep.subr.mxu0 0.0
    %957 = vmatpush1.msra.mxu0 0.0
    %958 = vmatprep.subr.mxu0 0.0
    %959 = vmatpush1.msra.mxu0 0.0
    %960 = vmatprep.subr.mxu0 0.0
    %961 = vmatpush1.msra.mxu0 0.0
    %962 = vmatprep.subr.mxu0 0.0
    %963 = vmatpush1.msra.mxu0 0.0
    %964 = vmatprep.subr.mxu0 0.0
    %965 = vmatpush1.msra.mxu0 0.0
    %966 = vmatprep.subr.mxu0 0.0
    %967 = vmatpush1.msra.mxu0 0.0
    %968 = vmatprep.subr.mxu0 0.0
    %969 = vmatpush1.msra.mxu0 0.0
    %970 = vmatprep.subr.mxu0 0.0
    %971 = vmatpush1.msra.mxu0 0.0
    %972 = vmatprep.subr.mxu0 0.0
    %973 = vmatpush1.msra.mxu0 0.0
    %974 = vmatprep.subr.mxu0 0.0
    %975 = vmatpush1.msra.mxu0 0.0
    %976 = vmatprep.subr.mxu0 0.0
    %977 = vmatpush1.msra.mxu0 0.0
    %978 = vmatprep.subr.mxu0 0.0
    %979 = vmatpush1.msra.mxu0 0.0
    %980 = vmatprep.subr.mxu0 0.0
    %981 = vmatpush1.msra.mxu0 0.0
    %982 = vmatprep.subr.mxu0 0.0
    %983 = vmatpush1.msra.mxu0 0.0
    %984 = vmatprep.mubr.f32.mxu0 0.0
    %v985 = vand.u32 %v652, 4294901760
    %v986 = vsub.f32 %v652, %v985
    %987 = vmatmul.mubr.f32.gmra.mrb[0].mxu0 %v986
    %v988 = vpop.f32.mrb[0].mxu0
    %v989 = vadd.f32 %v887, %v988
    %v990 = vpop.f32.mrb[0].mxu0
    %991 = vdwg.mxu0
    %992 = vmatprep.subr.mxu0 0.0
    %v993 = vand.u32 %v69, 4294901760
    %994 = vmatpush1.msra.mxu0 %v993
    %995 = vmatprep.subr.mxu0 0.0
    %v996 = vand.u32 %v70, 4294901760
    %997 = vmatpush1.msra.mxu0 %v996
    %998 = vmatprep.subr.mxu0 0.0
    %v999 = vand.u32 %v71, 4294901760
    %1000 = vmatpush1.msra.mxu0 %v999
    %1001 = vmatprep.subr.mxu0 0.0
    %v1002 = vand.u32 %v72, 4294901760
    %1003 = vmatpush1.msra.mxu0 %v1002
    %1004 = vmatprep.subr.mxu0 0.0
    %v1005 = vand.u32 %v73, 4294901760
    %1006 = vmatpush1.msra.mxu0 %v1005
    %1007 = vmatprep.subr.mxu0 0.0
    %v1008 = vand.u32 %v74, 4294901760
    %1009 = vmatpush1.msra.mxu0 %v1008
    %1010 = vmatprep.subr.mxu0 0.0
    %v1011 = vand.u32 %v75, 4294901760
    %1012 = vmatpush1.msra.mxu0 %v1011
    %1013 = vmatprep.subr.mxu0 0.0
    %v1014 = vand.u32 %v76, 4294901760
    %1015 = vmatpush1.msra.mxu0 %v1014
    %1016 = vmatprep.subr.mxu0 0.0
    %v1017 = vand.u32 %v77, 4294901760
    %1018 = vmatpush1.msra.mxu0 %v1017
    %1019 = vmatprep.subr.mxu0 0.0
    %v1020 = vand.u32 %v78, 4294901760
    %1021 = vmatpush1.msra.mxu0 %v1020
    %1022 = vmatprep.subr.mxu0 0.0
    %v1023 = vand.u32 %v79, 4294901760
    %1024 = vmatpush1.msra.mxu0 %v1023
    %1025 = vmatprep.subr.mxu0 0.0
    %v1026 = vand.u32 %v80, 4294901760
    %1027 = vmatpush1.msra.mxu0 %v1026
    %1028 = vmatprep.subr.mxu0 0.0
    %v1029 = vand.u32 %v81, 4294901760
    %1030 = vmatpush1.msra.mxu0 %v1029
    %1031 = vmatprep.subr.mxu0 0.0
    %v1032 = vand.u32 %v82, 4294901760
    %1033 = vmatpush1.msra.mxu0 %v1032
    %1034 = vmatprep.subr.mxu0 0.0
    %v1035 = vand.u32 %v83, 4294901760
    %1036 = vmatpush1.msra.mxu0 %v1035
    %1037 = vmatprep.subr.mxu0 0.0
    %1038 = vmatpush1.msra.mxu0 0.0
    %1039 = vmatprep.subr.mxu0 0.0
    %1040 = vmatpush1.msra.mxu0 0.0
    %1041 = vmatprep.subr.mxu0 0.0
    %1042 = vmatpush1.msra.mxu0 0.0
    %1043 = vmatprep.subr.mxu0 0.0
    %1044 = vmatpush1.msra.mxu0 0.0
    %1045 = vmatprep.subr.mxu0 0.0
    %1046 = vmatpush1.msra.mxu0 0.0
    %1047 = vmatprep.subr.mxu0 0.0
    %1048 = vmatpush1.msra.mxu0 0.0
    %1049 = vmatprep.subr.mxu0 0.0
    %1050 = vmatpush1.msra.mxu0 0.0
    %1051 = vmatprep.subr.mxu0 0.0
    %1052 = vmatpush1.msra.mxu0 0.0
    %1053 = vmatprep.subr.mxu0 0.0
    %1054 = vmatpush1.msra.mxu0 0.0
    %1055 = vmatprep.subr.mxu0 0.0
    %1056 = vmatpush1.msra.mxu0 0.0
    %1057 = vmatprep.subr.mxu0 0.0
    %1058 = vmatpush1.msra.mxu0 0.0
    %1059 = vmatprep.subr.mxu0 0.0
    %1060 = vmatpush1.msra.mxu0 0.0
    %1061 = vmatprep.subr.mxu0 0.0
    %1062 = vmatpush1.msra.mxu0 0.0
    %1063 = vmatprep.subr.mxu0 0.0
    %1064 = vmatpush1.msra.mxu0 0.0
    %1065 = vmatprep.subr.mxu0 0.0
    %1066 = vmatpush1.msra.mxu0 0.0
    %1067 = vmatprep.subr.mxu0 0.0
    %1068 = vmatpush1.msra.mxu0 0.0
    %1069 = vmatprep.subr.mxu0 0.0
    %1070 = vmatpush1.msra.mxu0 0.0
    %1071 = vmatprep.mubr.f32.mxu0 0.0
    %v1072 = vand.u32 %v652, 4294901760
    %v1073 = vsub.f32 %v652, %v1072
    %v1074 = vand.u32 %v1073, 4294901760
    %1075 = vmatmul.mubr.f32.gmra.mrb[0].mxu0 %v1074
    %v1076 = vpop.f32.mrb[0].mxu0
    %v1077 = vadd.f32 %v989, %v1076
    %v1078 = vpop.f32.mrb[0].mxu0
    %1079 = vdwg.mxu0
    %1080 = vmatprep.subr.mxu0 0.0
    %v1081 = vand.u32 %v69, 4294901760
    %v1082 = vsub.f32 %v69, %v1081
    %v1083 = vand.u32 %v1082, 4294901760
    %1084 = vmatpush1.msra.mxu0 %v1083
    %1085 = vmatprep.subr.mxu0 0.0
    %v1086 = vand.u32 %v70, 4294901760
    %v1087 = vsub.f32 %v70, %v1086
    %v1088 = vand.u32 %v1087, 4294901760
    %1089 = vmatpush1.msra.mxu0 %v1088
    %1090 = vmatprep.subr.mxu0 0.0
    %v1091 = vand.u32 %v71, 4294901760
    %v1092 = vsub.f32 %v71, %v1091
    %v1093 = vand.u32 %v1092, 4294901760
    %1094 = vmatpush1.msra.mxu0 %v1093
    %1095 = vmatprep.subr.mxu0 0.0
    %v1096 = vand.u32 %v72, 4294901760
    %v1097 = vsub.f32 %v72, %v1096
    %v1098 = vand.u32 %v1097, 4294901760
    %1099 = vmatpush1.msra.mxu0 %v1098
    %1100 = vmatprep.subr.mxu0 0.0
    %v1101 = vand.u32 %v73, 4294901760
    %v1102 = vsub.f32 %v73, %v1101
    %v1103 = vand.u32 %v1102, 4294901760
    %1104 = vmatpush1.msra.mxu0 %v1103
    %1105 = vmatprep.subr.mxu0 0.0
    %v1106 = vand.u32 %v74, 4294901760
    %v1107 = vsub.f32 %v74, %v1106
    %v1108 = vand.u32 %v1107, 4294901760
    %1109 = vmatpush1.msra.mxu0 %v1108
    %1110 = vmatprep.subr.mxu0 0.0
    %v1111 = vand.u32 %v75, 4294901760
    %v1112 = vsub.f32 %v75, %v1111
    %v1113 = vand.u32 %v1112, 4294901760
    %1114 = vmatpush1.msra.mxu0 %v1113
    %1115 = vmatprep.subr.mxu0 0.0
    %v1116 = vand.u32 %v76, 4294901760
    %v1117 = vsub.f32 %v76, %v1116
    %v1118 = vand.u32 %v1117, 4294901760
    %1119 = vmatpush1.msra.mxu0 %v1118
    %1120 = vmatprep.subr.mxu0 0.0
    %v1121 = vand.u32 %v77, 4294901760
    %v1122 = vsub.f32 %v77, %v1121
    %v1123 = vand.u32 %v1122, 4294901760
    %1124 = vmatpush1.msra.mxu0 %v1123
    %1125 = vmatprep.subr.mxu0 0.0
    %v1126 = vand.u32 %v78, 4294901760
    %v1127 = vsub.f32 %v78, %v1126
    %v1128 = vand.u32 %v1127, 4294901760
    %1129 = vmatpush1.msra.mxu0 %v1128
    %1130 = vmatprep.subr.mxu0 0.0
    %v1131 = vand.u32 %v79, 4294901760
    %v1132 = vsub.f32 %v79, %v1131
    %v1133 = vand.u32 %v1132, 4294901760
    %1134 = vmatpush1.msra.mxu0 %v1133
    %1135 = vmatprep.subr.mxu0 0.0
    %v1136 = vand.u32 %v80, 4294901760
    %v1137 = vsub.f32 %v80, %v1136
    %v1138 = vand.u32 %v1137, 4294901760
    %1139 = vmatpush1.msra.mxu0 %v1138
    %1140 = vmatprep.subr.mxu0 0.0
    %v1141 = vand.u32 %v81, 4294901760
    %v1142 = vsub.f32 %v81, %v1141
    %v1143 = vand.u32 %v1142, 4294901760
    %1144 = vmatpush1.msra.mxu0 %v1143
    %1145 = vmatprep.subr.mxu0 0.0
    %v1146 = vand.u32 %v82, 4294901760
    %v1147 = vsub.f32 %v82, %v1146
    %v1148 = vand.u32 %v1147, 4294901760
    %1149 = vmatpush1.msra.mxu0 %v1148
    %1150 = vmatprep.subr.mxu0 0.0
    %v1151 = vand.u32 %v83, 4294901760
    %v1152 = vsub.f32 %v83, %v1151
    %v1153 = vand.u32 %v1152, 4294901760
    %1154 = vmatpush1.msra.mxu0 %v1153
    %1155 = vmatprep.subr.mxu0 0.0
    %1156 = vmatpush1.msra.mxu0 0.0
    %1157 = vmatprep.subr.mxu0 0.0
    %1158 = vmatpush1.msra.mxu0 0.0
    %1159 = vmatprep.subr.mxu0 0.0
    %1160 = vmatpush1.msra.mxu0 0.0
    %1161 = vmatprep.subr.mxu0 0.0
    %1162 = vmatpush1.msra.mxu0 0.0
    %1163 = vmatprep.subr.mxu0 0.0
    %1164 = vmatpush1.msra.mxu0 0.0
    %1165 = vmatprep.subr.mxu0 0.0
    %1166 = vmatpush1.msra.mxu0 0.0
    %1167 = vmatprep.subr.mxu0 0.0
    %1168 = vmatpush1.msra.mxu0 0.0
    %1169 = vmatprep.subr.mxu0 0.0
    %1170 = vmatpush1.msra.mxu0 0.0
    %1171 = vmatprep.subr.mxu0 0.0
    %1172 = vmatpush1.msra.mxu0 0.0
    %1173 = vmatprep.subr.mxu0 0.0
    %1174 = vmatpush1.msra.mxu0 0.0
    %1175 = vmatprep.subr.mxu0 0.0
    %1176 = vmatpush1.msra.mxu0 0.0
    %1177 = vmatprep.subr.mxu0 0.0
    %1178 = vmatpush1.msra.mxu0 0.0
    %1179 = vmatprep.subr.mxu0 0.0
    %1180 = vmatpush1.msra.mxu0 0.0
    %1181 = vmatprep.subr.mxu0 0.0
    %1182 = vmatpush1.msra.mxu0 0.0
    %1183 = vmatprep.subr.mxu0 0.0
    %1184 = vmatpush1.msra.mxu0 0.0
    %1185 = vmatprep.subr.mxu0 0.0
    %1186 = vmatpush1.msra.mxu0 0.0
    %1187 = vmatprep.subr.mxu0 0.0
    %1188 = vmatpush1.msra.mxu0 0.0
    %1189 = vmatprep.mubr.f32.mxu0 0.0
    %v1190 = vand.u32 %v652, 4294901760
    %1191 = vmatmul.mubr.f32.gmra.mrb[0].mxu0 %v1190
    %v1192 = vpop.f32.mrb[0].mxu0
    %v1193 = vadd.f32 %v1077, %v1192
    %v1194 = vpop.f32.mrb[0].mxu0
    %1195 = vdwg.mxu0
    %1196 = vmatprep.subr.mxu0 0.0
    %v1197 = vand.u32 %v69, 4294901760
    %1198 = vmatpush1.msra.mxu0 %v1197
    %1199 = vmatprep.subr.mxu0 0.0
    %v1200 = vand.u32 %v70, 4294901760
    %1201 = vmatpush1.msra.mxu0 %v1200
    %1202 = vmatprep.subr.mxu0 0.0
    %v1203 = vand.u32 %v71, 4294901760
    %1204 = vmatpush1.msra.mxu0 %v1203
    %1205 = vmatprep.subr.mxu0 0.0
    %v1206 = vand.u32 %v72, 4294901760
    %1207 = vmatpush1.msra.mxu0 %v1206
    %1208 = vmatprep.subr.mxu0 0.0
    %v1209 = vand.u32 %v73, 4294901760
    %1210 = vmatpush1.msra.mxu0 %v1209
    %1211 = vmatprep.subr.mxu0 0.0
    %v1212 = vand.u32 %v74, 4294901760
    %1213 = vmatpush1.msra.mxu0 %v1212
    %1214 = vmatprep.subr.mxu0 0.0
    %v1215 = vand.u32 %v75, 4294901760
    %1216 = vmatpush1.msra.mxu0 %v1215
    %1217 = vmatprep.subr.mxu0 0.0
    %v1218 = vand.u32 %v76, 4294901760
    %1219 = vmatpush1.msra.mxu0 %v1218
    %1220 = vmatprep.subr.mxu0 0.0
    %v1221 = vand.u32 %v77, 4294901760
    %1222 = vmatpush1.msra.mxu0 %v1221
    %1223 = vmatprep.subr.mxu0 0.0
    %v1224 = vand.u32 %v78, 4294901760
    %1225 = vmatpush1.msra.mxu0 %v1224
    %1226 = vmatprep.subr.mxu0 0.0
    %v1227 = vand.u32 %v79, 4294901760
    %1228 = vmatpush1.msra.mxu0 %v1227
    %1229 = vmatprep.subr.mxu0 0.0
    %v1230 = vand.u32 %v80, 4294901760
    %1231 = vmatpush1.msra.mxu0 %v1230
    %1232 = vmatprep.subr.mxu0 0.0
    %v1233 = vand.u32 %v81, 4294901760
    %1234 = vmatpush1.msra.mxu0 %v1233
    %1235 = vmatprep.subr.mxu0 0.0
    %v1236 = vand.u32 %v82, 4294901760
    %1237 = vmatpush1.msra.mxu0 %v1236
    %1238 = vmatprep.subr.mxu0 0.0
    %v1239 = vand.u32 %v83, 4294901760
    %1240 = vmatpush1.msra.mxu0 %v1239
    %1241 = vmatprep.subr.mxu0 0.0
    %1242 = vmatpush1.msra.mxu0 0.0
    %1243 = vmatprep.subr.mxu0 0.0
    %1244 = vmatpush1.msra.mxu0 0.0
    %1245 = vmatprep.subr.mxu0 0.0
    %1246 = vmatpush1.msra.mxu0 0.0
    %1247 = vmatprep.subr.mxu0 0.0
    %1248 = vmatpush1.msra.mxu0 0.0
    %1249 = vmatprep.subr.mxu0 0.0
    %1250 = vmatpush1.msra.mxu0 0.0
    %1251 = vmatprep.subr.mxu0 0.0
    %1252 = vmatpush1.msra.mxu0 0.0
    %1253 = vmatprep.subr.mxu0 0.0
    %1254 = vmatpush1.msra.mxu0 0.0
    %1255 = vmatprep.subr.mxu0 0.0
    %1256 = vmatpush1.msra.mxu0 0.0
    %1257 = vmatprep.subr.mxu0 0.0
    %1258 = vmatpush1.msra.mxu0 0.0
    %1259 = vmatprep.subr.mxu0 0.0
    %1260 = vmatpush1.msra.mxu0 0.0
    %1261 = vmatprep.subr.mxu0 0.0
    %1262 = vmatpush1.msra.mxu0 0.0
    %1263 = vmatprep.subr.mxu0 0.0
    %1264 = vmatpush1.msra.mxu0 0.0
    %1265 = vmatprep.subr.mxu0 0.0
    %1266 = vmatpush1.msra.mxu0 0.0
    %1267 = vmatprep.subr.mxu0 0.0
    %1268 = vmatpush1.msra.mxu0 0.0
    %1269 = vmatprep.subr.mxu0 0.0
    %1270 = vmatpush1.msra.mxu0 0.0
    %1271 = vmatprep.subr.mxu0 0.0
    %1272 = vmatpush1.msra.mxu0 0.0
    %1273 = vmatprep.subr.mxu0 0.0
    %1274 = vmatpush1.msra.mxu0 0.0
    %1275 = vmatprep.mubr.f32.mxu0 0.0
    %v1276 = vand.u32 %v652, 4294901760
    %1277 = vmatmul.mubr.f32.gmra.mrb[0].mxu0 %v1276
    %v1278 = vpop.f32.mrb[0].mxu0
    %v1279 = vadd.f32 %v1193, %v1278
    %v1280 = vpop.f32.mrb[0].mxu0
    %1281 = vdwg.mxu0
    %v1282 = vtanh.pop %v1279
    %v1284 = vlaneseq
    %v1285 = vshrl.u32 %v1284, 7
    %v1286 = vsub.s32 0, %v1285
    %v1287 = vrot.slane %v136, %v1286
    %v1290 = vsel %vm650, %v1282, 0
    %1292 = vmatprep.subr.mxu0 0.0
    %v1293 = vand.u32 %v85, 4294901760
    %1294 = vmatpush1.msra.mxu0 %v1293
    %1295 = vmatprep.subr.mxu0 0.0
    %v1296 = vand.u32 %v86, 4294901760
    %1297 = vmatpush1.msra.mxu0 %v1296
    %1298 = vmatprep.subr.mxu0 0.0
    %v1299 = vand.u32 %v87, 4294901760
    %1300 = vmatpush1.msra.mxu0 %v1299
    %1301 = vmatprep.subr.mxu0 0.0
    %v1302 = vand.u32 %v88, 4294901760
    %1303 = vmatpush1.msra.mxu0 %v1302
    %1304 = vmatprep.subr.mxu0 0.0
    %v1305 = vand.u32 %v89, 4294901760
    %1306 = vmatpush1.msra.mxu0 %v1305
    %1307 = vmatprep.subr.mxu0 0.0
    %v1308 = vand.u32 %v90, 4294901760
    %1309 = vmatpush1.msra.mxu0 %v1308
    %1310 = vmatprep.subr.mxu0 0.0
    %v1311 = vand.u32 %v91, 4294901760
    %1312 = vmatpush1.msra.mxu0 %v1311
    %1313 = vmatprep.subr.mxu0 0.0
    %v1314 = vand.u32 %v92, 4294901760
    %1315 = vmatpush1.msra.mxu0 %v1314
    %1316 = vmatprep.subr.mxu0 0.0
    %v1317 = vand.u32 %v93, 4294901760
    %1318 = vmatpush1.msra.mxu0 %v1317
    %1319 = vmatprep.subr.mxu0 0.0
    %v1320 = vand.u32 %v94, 4294901760
    %1321 = vmatpush1.msra.mxu0 %v1320
    %1322 = vmatprep.subr.mxu0 0.0
    %v1323 = vand.u32 %v95, 4294901760
    %1324 = vmatpush1.msra.mxu0 %v1323
    %1325 = vmatprep.subr.mxu0 0.0
    %v1326 = vand.u32 %v96, 4294901760
    %1327 = vmatpush1.msra.mxu0 %v1326
    %1328 = vmatprep.subr.mxu0 0.0
    %v1329 = vand.u32 %v97, 4294901760
    %1330 = vmatpush1.msra.mxu0 %v1329
    %1331 = vmatprep.subr.mxu0 0.0
    %v1332 = vand.u32 %v98, 4294901760
    %1333 = vmatpush1.msra.mxu0 %v1332
    %1334 = vmatprep.subr.mxu0 0.0
    %v1335 = vand.u32 %v99, 4294901760
    %1336 = vmatpush1.msra.mxu0 %v1335
    %1337 = vmatprep.subr.mxu0 0.0
    %1338 = vmatpush1.msra.mxu0 0.0
    %1339 = vmatprep.subr.mxu0 0.0
    %1340 = vmatpush1.msra.mxu0 0.0
    %1341 = vmatprep.subr.mxu0 0.0
    %1342 = vmatpush1.msra.mxu0 0.0
    %1343 = vmatprep.subr.mxu0 0.0
    %1344 = vmatpush1.msra.mxu0 0.0
    %1345 = vmatprep.subr.mxu0 0.0
    %1346 = vmatpush1.msra.mxu0 0.0
    %1347 = vmatprep.subr.mxu0 0.0
    %1348 = vmatpush1.msra.mxu0 0.0
    %1349 = vmatprep.subr.mxu0 0.0
    %1350 = vmatpush1.msra.mxu0 0.0
    %1351 = vmatprep.subr.mxu0 0.0
    %1352 = vmatpush1.msra.mxu0 0.0
    %1353 = vmatprep.subr.mxu0 0.0
    %1354 = vmatpush1.msra.mxu0 0.0
    %1355 = vmatprep.subr.mxu0 0.0
    %1356 = vmatpush1.msra.mxu0 0.0
    %1357 = vmatprep.subr.mxu0 0.0
    %1358 = vmatpush1.msra.mxu0 0.0
    %1359 = vmatprep.subr.mxu0 0.0
    %1360 = vmatpush1.msra.mxu0 0.0
    %1361 = vmatprep.subr.mxu0 0.0
    %1362 = vmatpush1.msra.mxu0 0.0
    %1363 = vmatprep.subr.mxu0 0.0
    %1364 = vmatpush1.msra.mxu0 0.0
    %1365 = vmatprep.subr.mxu0 0.0
    %1366 = vmatpush1.msra.mxu0 0.0
    %1367 = vmatprep.subr.mxu0 0.0
    %1368 = vmatpush1.msra.mxu0 0.0
    %1369 = vmatprep.subr.mxu0 0.0
    %1370 = vmatpush1.msra.mxu0 0.0
    %1371 = vmatprep.mubr.f32.mxu0 0.0
    %v1372 = vand.u32 %v1290, 4294901760
    %v1373 = vsub.f32 %v1290, %v1372
    %v1374 = vand.u32 %v1373, 4294901760
    %v1375 = vsub.f32 %v1373, %v1374
    %v1376 = vand.u32 %v1375, 4294901760
    %1377 = vmatmul.mubr.f32.gmra.mrb[0].mxu0 %v1376
    %v1378 = vpop.f32.mrb[0].mxu0
    %v1379 = vadd.f32 %v1287, %v1378
    %v1380 = vpop.f32.mrb[0].mxu0
    %1381 = vdwg.mxu0
    %1382 = vmatprep.subr.mxu0 0.0
    %v1383 = vand.u32 %v85, 4294901760
    %v1384 = vsub.f32 %v85, %v1383
    %v1385 = vand.u32 %v1384, 4294901760
    %v1386 = vsub.f32 %v1384, %v1385
    %v1387 = vand.u32 %v1386, 4294901760
    %1388 = vmatpush1.msra.mxu0 %v1387
    %1389 = vmatprep.subr.mxu0 0.0
    %v1390 = vand.u32 %v86, 4294901760
    %v1391 = vsub.f32 %v86, %v1390
    %v1392 = vand.u32 %v1391, 4294901760
    %v1393 = vsub.f32 %v1391, %v1392
    %v1394 = vand.u32 %v1393, 4294901760
    %1395 = vmatpush1.msra.mxu0 %v1394
    %1396 = vmatprep.subr.mxu0 0.0
    %v1397 = vand.u32 %v87, 4294901760
    %v1398 = vsub.f32 %v87, %v1397
    %v1399 = vand.u32 %v1398, 4294901760
    %v1400 = vsub.f32 %v1398, %v1399
    %v1401 = vand.u32 %v1400, 4294901760
    %1402 = vmatpush1.msra.mxu0 %v1401
    %1403 = vmatprep.subr.mxu0 0.0
    %v1404 = vand.u32 %v88, 4294901760
    %v1405 = vsub.f32 %v88, %v1404
    %v1406 = vand.u32 %v1405, 4294901760
    %v1407 = vsub.f32 %v1405, %v1406
    %v1408 = vand.u32 %v1407, 4294901760
    %1409 = vmatpush1.msra.mxu0 %v1408
    %1410 = vmatprep.subr.mxu0 0.0
    %v1411 = vand.u32 %v89, 4294901760
    %v1412 = vsub.f32 %v89, %v1411
    %v1413 = vand.u32 %v1412, 4294901760
    %v1414 = vsub.f32 %v1412, %v1413
    %v1415 = vand.u32 %v1414, 4294901760
    %1416 = vmatpush1.msra.mxu0 %v1415
    %1417 = vmatprep.subr.mxu0 0.0
    %v1418 = vand.u32 %v90, 4294901760
    %v1419 = vsub.f32 %v90, %v1418
    %v1420 = vand.u32 %v1419, 4294901760
    %v1421 = vsub.f32 %v1419, %v1420
    %v1422 = vand.u32 %v1421, 4294901760
    %1423 = vmatpush1.msra.mxu0 %v1422
    %1424 = vmatprep.subr.mxu0 0.0
    %v1425 = vand.u32 %v91, 4294901760
    %v1426 = vsub.f32 %v91, %v1425
    %v1427 = vand.u32 %v1426, 4294901760
    %v1428 = vsub.f32 %v1426, %v1427
    %v1429 = vand.u32 %v1428, 4294901760
    %1430 = vmatpush1.msra.mxu0 %v1429
    %1431 = vmatprep.subr.mxu0 0.0
    %v1432 = vand.u32 %v92, 4294901760
    %v1433 = vsub.f32 %v92, %v1432
    %v1434 = vand.u32 %v1433, 4294901760
    %v1435 = vsub.f32 %v1433, %v1434
    %v1436 = vand.u32 %v1435, 4294901760
    %1437 = vmatpush1.msra.mxu0 %v1436
    %1438 = vmatprep.subr.mxu0 0.0
    %v1439 = vand.u32 %v93, 4294901760
    %v1440 = vsub.f32 %v93, %v1439
    %v1441 = vand.u32 %v1440, 4294901760
    %v1442 = vsub.f32 %v1440, %v1441
    %v1443 = vand.u32 %v1442, 4294901760
    %1444 = vmatpush1.msra.mxu0 %v1443
    %1445 = vmatprep.subr.mxu0 0.0
    %v1446 = vand.u32 %v94, 4294901760
    %v1447 = vsub.f32 %v94, %v1446
    %v1448 = vand.u32 %v1447, 4294901760
    %v1449 = vsub.f32 %v1447, %v1448
    %v1450 = vand.u32 %v1449, 4294901760
    %1451 = vmatpush1.msra.mxu0 %v1450
    %1452 = vmatprep.subr.mxu0 0.0
    %v1453 = vand.u32 %v95, 4294901760
    %v1454 = vsub.f32 %v95, %v1453
    %v1455 = vand.u32 %v1454, 4294901760
    %v1456 = vsub.f32 %v1454, %v1455
    %v1457 = vand.u32 %v1456, 4294901760
    %1458 = vmatpush1.msra.mxu0 %v1457
    %1459 = vmatprep.subr.mxu0 0.0
    %v1460 = vand.u32 %v96, 4294901760
    %v1461 = vsub.f32 %v96, %v1460
    %v1462 = vand.u32 %v1461, 4294901760
    %v1463 = vsub.f32 %v1461, %v1462
    %v1464 = vand.u32 %v1463, 4294901760
    %1465 = vmatpush1.msra.mxu0 %v1464
    %1466 = vmatprep.subr.mxu0 0.0
    %v1467 = vand.u32 %v97, 4294901760
    %v1468 = vsub.f32 %v97, %v1467
    %v1469 = vand.u32 %v1468, 4294901760
    %v1470 = vsub.f32 %v1468, %v1469
    %v1471 = vand.u32 %v1470, 4294901760
    %1472 = vmatpush1.msra.mxu0 %v1471
    %1473 = vmatprep.subr.mxu0 0.0
    %v1474 = vand.u32 %v98, 4294901760
    %v1475 = vsub.f32 %v98, %v1474
    %v1476 = vand.u32 %v1475, 4294901760
    %v1477 = vsub.f32 %v1475, %v1476
    %v1478 = vand.u32 %v1477, 4294901760
    %1479 = vmatpush1.msra.mxu0 %v1478
    %1480 = vmatprep.subr.mxu0 0.0
    %v1481 = vand.u32 %v99, 4294901760
    %v1482 = vsub.f32 %v99, %v1481
    %v1483 = vand.u32 %v1482, 4294901760
    %v1484 = vsub.f32 %v1482, %v1483
    %v1485 = vand.u32 %v1484, 4294901760
    %1486 = vmatpush1.msra.mxu0 %v1485
    %1487 = vmatprep.subr.mxu0 0.0
    %1488 = vmatpush1.msra.mxu0 0.0
    %1489 = vmatprep.subr.mxu0 0.0
    %1490 = vmatpush1.msra.mxu0 0.0
    %1491 = vmatprep.subr.mxu0 0.0
    %1492 = vmatpush1.msra.mxu0 0.0
    %1493 = vmatprep.subr.mxu0 0.0
    %1494 = vmatpush1.msra.mxu0 0.0
    %1495 = vmatprep.subr.mxu0 0.0
    %1496 = vmatpush1.msra.mxu0 0.0
    %1497 = vmatprep.subr.mxu0 0.0
    %1498 = vmatpush1.msra.mxu0 0.0
    %1499 = vmatprep.subr.mxu0 0.0
    %1500 = vmatpush1.msra.mxu0 0.0
    %1501 = vmatprep.subr.mxu0 0.0
    %1502 = vmatpush1.msra.mxu0 0.0
    %1503 = vmatprep.subr.mxu0 0.0
    %1504 = vmatpush1.msra.mxu0 0.0
    %1505 = vmatprep.subr.mxu0 0.0
    %1506 = vmatpush1.msra.mxu0 0.0
    %1507 = vmatprep.subr.mxu0 0.0
    %1508 = vmatpush1.msra.mxu0 0.0
    %1509 = vmatprep.subr.mxu0 0.0
    %1510 = vmatpush1.msra.mxu0 0.0
    %1511 = vmatprep.subr.mxu0 0.0
    %1512 = vmatpush1.msra.mxu0 0.0
    %1513 = vmatprep.subr.mxu0 0.0
    %1514 = vmatpush1.msra.mxu0 0.0
    %1515 = vmatprep.subr.mxu0 0.0
    %1516 = vmatpush1.msra.mxu0 0.0
    %1517 = vmatprep.subr.mxu0 0.0
    %1518 = vmatpush1.msra.mxu0 0.0
    %1519 = vmatprep.subr.mxu0 0.0
    %1520 = vmatpush1.msra.mxu0 0.0
    %1521 = vmatprep.mubr.f32.mxu0 0.0
    %v1522 = vand.u32 %v1290, 4294901760
    %1523 = vmatmul.mubr.f32.gmra.mrb[0].mxu0 %v1522
    %v1524 = vpop.f32.mrb[0].mxu0
    %v1525 = vadd.f32 %v1379, %v1524
    %v1526 = vpop.f32.mrb[0].mxu0
    %1527 = vdwg.mxu0
    %1528 = vmatprep.subr.mxu0 0.0
    %v1529 = vand.u32 %v85, 4294901760
    %v1530 = vsub.f32 %v85, %v1529
    %1531 = vmatpush1.msra.mxu0 %v1530
    %1532 = vmatprep.subr.mxu0 0.0
    %v1533 = vand.u32 %v86, 4294901760
    %v1534 = vsub.f32 %v86, %v1533
    %1535 = vmatpush1.msra.mxu0 %v1534
    %1536 = vmatprep.subr.mxu0 0.0
    %v1537 = vand.u32 %v87, 4294901760
    %v1538 = vsub.f32 %v87, %v1537
    %1539 = vmatpush1.msra.mxu0 %v1538
    %1540 = vmatprep.subr.mxu0 0.0
    %v1541 = vand.u32 %v88, 4294901760
    %v1542 = vsub.f32 %v88, %v1541
    %1543 = vmatpush1.msra.mxu0 %v1542
    %1544 = vmatprep.subr.mxu0 0.0
    %v1545 = vand.u32 %v89, 4294901760
    %v1546 = vsub.f32 %v89, %v1545
    %1547 = vmatpush1.msra.mxu0 %v1546
    %1548 = vmatprep.subr.mxu0 0.0
    %v1549 = vand.u32 %v90, 4294901760
    %v1550 = vsub.f32 %v90, %v1549
    %1551 = vmatpush1.msra.mxu0 %v1550
    %1552 = vmatprep.subr.mxu0 0.0
    %v1553 = vand.u32 %v91, 4294901760
    %v1554 = vsub.f32 %v91, %v1553
    %1555 = vmatpush1.msra.mxu0 %v1554
    %1556 = vmatprep.subr.mxu0 0.0
    %v1557 = vand.u32 %v92, 4294901760
    %v1558 = vsub.f32 %v92, %v1557
    %1559 = vmatpush1.msra.mxu0 %v1558
    %1560 = vmatprep.subr.mxu0 0.0
    %v1561 = vand.u32 %v93, 4294901760
    %v1562 = vsub.f32 %v93, %v1561
    %1563 = vmatpush1.msra.mxu0 %v1562
    %1564 = vmatprep.subr.mxu0 0.0
    %v1565 = vand.u32 %v94, 4294901760
    %v1566 = vsub.f32 %v94, %v1565
    %1567 = vmatpush1.msra.mxu0 %v1566
    %1568 = vmatprep.subr.mxu0 0.0
    %v1569 = vand.u32 %v95, 4294901760
    %v1570 = vsub.f32 %v95, %v1569
    %1571 = vmatpush1.msra.mxu0 %v1570
    %1572 = vmatprep.subr.mxu0 0.0
    %v1573 = vand.u32 %v96, 4294901760
    %v1574 = vsub.f32 %v96, %v1573
    %1575 = vmatpush1.msra.mxu0 %v1574
    %1576 = vmatprep.subr.mxu0 0.0
    %v1577 = vand.u32 %v97, 4294901760
    %v1578 = vsub.f32 %v97, %v1577
    %1579 = vmatpush1.msra.mxu0 %v1578
    %1580 = vmatprep.subr.mxu0 0.0
    %v1581 = vand.u32 %v98, 4294901760
    %v1582 = vsub.f32 %v98, %v1581
    %1583 = vmatpush1.msra.mxu0 %v1582
    %1584 = vmatprep.subr.mxu0 0.0
    %v1585 = vand.u32 %v99, 4294901760
    %v1586 = vsub.f32 %v99, %v1585
    %1587 = vmatpush1.msra.mxu0 %v1586
    %1588 = vmatprep.subr.mxu0 0.0
    %1589 = vmatpush1.msra.mxu0 0.0
    %1590 = vmatprep.subr.mxu0 0.0
    %1591 = vmatpush1.msra.mxu0 0.0
    %1592 = vmatprep.subr.mxu0 0.0
    %1593 = vmatpush1.msra.mxu0 0.0
    %1594 = vmatprep.subr.mxu0 0.0
    %1595 = vmatpush1.msra.mxu0 0.0
    %1596 = vmatprep.subr.mxu0 0.0
    %1597 = vmatpush1.msra.mxu0 0.0
    %1598 = vmatprep.subr.mxu0 0.0
    %1599 = vmatpush1.msra.mxu0 0.0
    %1600 = vmatprep.subr.mxu0 0.0
    %1601 = vmatpush1.msra.mxu0 0.0
    %1602 = vmatprep.subr.mxu0 0.0
    %1603 = vmatpush1.msra.mxu0 0.0
    %1604 = vmatprep.subr.mxu0 0.0
    %1605 = vmatpush1.msra.mxu0 0.0
    %1606 = vmatprep.subr.mxu0 0.0
    %1607 = vmatpush1.msra.mxu0 0.0
    %1608 = vmatprep.subr.mxu0 0.0
    %1609 = vmatpush1.msra.mxu0 0.0
    %1610 = vmatprep.subr.mxu0 0.0
    %1611 = vmatpush1.msra.mxu0 0.0
    %1612 = vmatprep.subr.mxu0 0.0
    %1613 = vmatpush1.msra.mxu0 0.0
    %1614 = vmatprep.subr.mxu0 0.0
    %1615 = vmatpush1.msra.mxu0 0.0
    %1616 = vmatprep.subr.mxu0 0.0
    %1617 = vmatpush1.msra.mxu0 0.0
    %1618 = vmatprep.subr.mxu0 0.0
    %1619 = vmatpush1.msra.mxu0 0.0
    %1620 = vmatprep.subr.mxu0 0.0
    %1621 = vmatpush1.msra.mxu0 0.0
    %1622 = vmatprep.mubr.f32.mxu0 0.0
    %v1623 = vand.u32 %v1290, 4294901760
    %v1624 = vsub.f32 %v1290, %v1623
    %1625 = vmatmul.mubr.f32.gmra.mrb[0].mxu0 %v1624
    %v1626 = vpop.f32.mrb[0].mxu0
    %v1627 = vadd.f32 %v1525, %v1626
    %v1628 = vpop.f32.mrb[0].mxu0
    %1629 = vdwg.mxu0
    %1630 = vmatprep.subr.mxu0 0.0
    %v1631 = vand.u32 %v85, 4294901760
    %1632 = vmatpush1.msra.mxu0 %v1631
    %1633 = vmatprep.subr.mxu0 0.0
    %v1634 = vand.u32 %v86, 4294901760
    %1635 = vmatpush1.msra.mxu0 %v1634
    %1636 = vmatprep.subr.mxu0 0.0
    %v1637 = vand.u32 %v87, 4294901760
    %1638 = vmatpush1.msra.mxu0 %v1637
    %1639 = vmatprep.subr.mxu0 0.0
    %v1640 = vand.u32 %v88, 4294901760
    %1641 = vmatpush1.msra.mxu0 %v1640
    %1642 = vmatprep.subr.mxu0 0.0
    %v1643 = vand.u32 %v89, 4294901760
    %1644 = vmatpush1.msra.mxu0 %v1643
    %1645 = vmatprep.subr.mxu0 0.0
    %v1646 = vand.u32 %v90, 4294901760
    %1647 = vmatpush1.msra.mxu0 %v1646
    %1648 = vmatprep.subr.mxu0 0.0
    %v1649 = vand.u32 %v91, 4294901760
    %1650 = vmatpush1.msra.mxu0 %v1649
    %1651 = vmatprep.subr.mxu0 0.0
    %v1652 = vand.u32 %v92, 4294901760
    %1653 = vmatpush1.msra.mxu0 %v1652
    %1654 = vmatprep.subr.mxu0 0.0
    %v1655 = vand.u32 %v93, 4294901760
    %1656 = vmatpush1.msra.mxu0 %v1655
    %1657 = vmatprep.subr.mxu0 0.0
    %v1658 = vand.u32 %v94, 4294901760
    %1659 = vmatpush1.msra.mxu0 %v1658
    %1660 = vmatprep.subr.mxu0 0.0
    %v1661 = vand.u32 %v95, 4294901760
    %1662 = vmatpush1.msra.mxu0 %v1661
    %1663 = vmatprep.subr.mxu0 0.0
    %v1664 = vand.u32 %v96, 4294901760
    %1665 = vmatpush1.msra.mxu0 %v1664
    %1666 = vmatprep.subr.mxu0 0.0
    %v1667 = vand.u32 %v97, 4294901760
    %1668 = vmatpush1.msra.mxu0 %v1667
    %1669 = vmatprep.subr.mxu0 0.0
    %v1670 = vand.u32 %v98, 4294901760
    %1671 = vmatpush1.msra.mxu0 %v1670
    %1672 = vmatprep.subr.mxu0 0.0
    %v1673 = vand.u32 %v99, 4294901760
    %1674 = vmatpush1.msra.mxu0 %v1673
    %1675 = vmatprep.subr.mxu0 0.0
    %1676 = vmatpush1.msra.mxu0 0.0
    %1677 = vmatprep.subr.mxu0 0.0
    %1678 = vmatpush1.msra.mxu0 0.0
    %1679 = vmatprep.subr.mxu0 0.0
    %1680 = vmatpush1.msra.mxu0 0.0
    %1681 = vmatprep.subr.mxu0 0.0
    %1682 = vmatpush1.msra.mxu0 0.0
    %1683 = vmatprep.subr.mxu0 0.0
    %1684 = vmatpush1.msra.mxu0 0.0
    %1685 = vmatprep.subr.mxu0 0.0
    %1686 = vmatpush1.msra.mxu0 0.0
    %1687 = vmatprep.subr.mxu0 0.0
    %1688 = vmatpush1.msra.mxu0 0.0
    %1689 = vmatprep.subr.mxu0 0.0
    %1690 = vmatpush1.msra.mxu0 0.0
    %1691 = vmatprep.subr.mxu0 0.0
    %1692 = vmatpush1.msra.mxu0 0.0
    %1693 = vmatprep.subr.mxu0 0.0
    %1694 = vmatpush1.msra.mxu0 0.0
    %1695 = vmatprep.subr.mxu0 0.0
    %1696 = vmatpush1.msra.mxu0 0.0
    %1697 = vmatprep.subr.mxu0 0.0
    %1698 = vmatpush1.msra.mxu0 0.0
    %1699 = vmatprep.subr.mxu0 0.0
    %1700 = vmatpush1.msra.mxu0 0.0
    %1701 = vmatprep.subr.mxu0 0.0
    %1702 = vmatpush1.msra.mxu0 0.0
    %1703 = vmatprep.subr.mxu0 0.0
    %1704 = vmatpush1.msra.mxu0 0.0
    %1705 = vmatprep.subr.mxu0 0.0
    %1706 = vmatpush1.msra.mxu0 0.0
    %1707 = vmatprep.subr.mxu0 0.0
    %1708 = vmatpush1.msra.mxu0 0.0
    %1709 = vmatprep.mubr.f32.mxu0 0.0
    %v1710 = vand.u32 %v1290, 4294901760
    %v1711 = vsub.f32 %v1290, %v1710
    %v1712 = vand.u32 %v1711, 4294901760
    %1713 = vmatmul.mubr.f32.gmra.mrb[0].mxu0 %v1712
    %v1714 = vpop.f32.mrb[0].mxu0
    %v1715 = vadd.f32 %v1627, %v1714
    %v1716 = vpop.f32.mrb[0].mxu0
    %1717 = vdwg.mxu0
    %1718 = vmatprep.subr.mxu0 0.0
    %v1719 = vand.u32 %v85, 4294901760
    %v1720 = vsub.f32 %v85, %v1719
    %v1721 = vand.u32 %v1720, 4294901760
    %1722 = vmatpush1.msra.mxu0 %v1721
    %1723 = vmatprep.subr.mxu0 0.0
    %v1724 = vand.u32 %v86, 4294901760
    %v1725 = vsub.f32 %v86, %v1724
    %v1726 = vand.u32 %v1725, 4294901760
    %1727 = vmatpush1.msra.mxu0 %v1726
    %1728 = vmatprep.subr.mxu0 0.0
    %v1729 = vand.u32 %v87, 4294901760
    %v1730 = vsub.f32 %v87, %v1729
    %v1731 = vand.u32 %v1730, 4294901760
    %1732 = vmatpush1.msra.mxu0 %v1731
    %1733 = vmatprep.subr.mxu0 0.0
    %v1734 = vand.u32 %v88, 4294901760
    %v1735 = vsub.f32 %v88, %v1734
    %v1736 = vand.u32 %v1735, 4294901760
    %1737 = vmatpush1.msra.mxu0 %v1736
    %1738 = vmatprep.subr.mxu0 0.0
    %v1739 = vand.u32 %v89, 4294901760
    %v1740 = vsub.f32 %v89, %v1739
    %v1741 = vand.u32 %v1740, 4294901760
    %1742 = vmatpush1.msra.mxu0 %v1741
    %1743 = vmatprep.subr.mxu0 0.0
    %v1744 = vand.u32 %v90, 4294901760
    %v1745 = vsub.f32 %v90, %v1744
    %v1746 = vand.u32 %v1745, 4294901760
    %1747 = vmatpush1.msra.mxu0 %v1746
    %1748 = vmatprep.subr.mxu0 0.0
    %v1749 = vand.u32 %v91, 4294901760
    %v1750 = vsub.f32 %v91, %v1749
    %v1751 = vand.u32 %v1750, 4294901760
    %1752 = vmatpush1.msra.mxu0 %v1751
    %1753 = vmatprep.subr.mxu0 0.0
    %v1754 = vand.u32 %v92, 4294901760
    %v1755 = vsub.f32 %v92, %v1754
    %v1756 = vand.u32 %v1755, 4294901760
    %1757 = vmatpush1.msra.mxu0 %v1756
    %1758 = vmatprep.subr.mxu0 0.0
    %v1759 = vand.u32 %v93, 4294901760
    %v1760 = vsub.f32 %v93, %v1759
    %v1761 = vand.u32 %v1760, 4294901760
    %1762 = vmatpush1.msra.mxu0 %v1761
    %1763 = vmatprep.subr.mxu0 0.0
    %v1764 = vand.u32 %v94, 4294901760
    %v1765 = vsub.f32 %v94, %v1764
    %v1766 = vand.u32 %v1765, 4294901760
    %1767 = vmatpush1.msra.mxu0 %v1766
    %1768 = vmatprep.subr.mxu0 0.0
    %v1769 = vand.u32 %v95, 4294901760
    %v1770 = vsub.f32 %v95, %v1769
    %v1771 = vand.u32 %v1770, 4294901760
    %1772 = vmatpush1.msra.mxu0 %v1771
    %1773 = vmatprep.subr.mxu0 0.0
    %v1774 = vand.u32 %v96, 4294901760
    %v1775 = vsub.f32 %v96, %v1774
    %v1776 = vand.u32 %v1775, 4294901760
    %1777 = vmatpush1.msra.mxu0 %v1776
    %1778 = vmatprep.subr.mxu0 0.0
    %v1779 = vand.u32 %v97, 4294901760
    %v1780 = vsub.f32 %v97, %v1779
    %v1781 = vand.u32 %v1780, 4294901760
    %1782 = vmatpush1.msra.mxu0 %v1781
    %1783 = vmatprep.subr.mxu0 0.0
    %v1784 = vand.u32 %v98, 4294901760
    %v1785 = vsub.f32 %v98, %v1784
    %v1786 = vand.u32 %v1785, 4294901760
    %1787 = vmatpush1.msra.mxu0 %v1786
    %1788 = vmatprep.subr.mxu0 0.0
    %v1789 = vand.u32 %v99, 4294901760
    %v1790 = vsub.f32 %v99, %v1789
    %v1791 = vand.u32 %v1790, 4294901760
    %1792 = vmatpush1.msra.mxu0 %v1791
    %1793 = vmatprep.subr.mxu0 0.0
    %1794 = vmatpush1.msra.mxu0 0.0
    %1795 = vmatprep.subr.mxu0 0.0
    %1796 = vmatpush1.msra.mxu0 0.0
    %1797 = vmatprep.subr.mxu0 0.0
    %1798 = vmatpush1.msra.mxu0 0.0
    %1799 = vmatprep.subr.mxu0 0.0
    %1800 = vmatpush1.msra.mxu0 0.0
    %1801 = vmatprep.subr.mxu0 0.0
    %1802 = vmatpush1.msra.mxu0 0.0
    %1803 = vmatprep.subr.mxu0 0.0
    %1804 = vmatpush1.msra.mxu0 0.0
    %1805 = vmatprep.subr.mxu0 0.0
    %1806 = vmatpush1.msra.mxu0 0.0
    %1807 = vmatprep.subr.mxu0 0.0
    %1808 = vmatpush1.msra.mxu0 0.0
    %1809 = vmatprep.subr.mxu0 0.0
    %1810 = vmatpush1.msra.mxu0 0.0
    %1811 = vmatprep.subr.mxu0 0.0
    %1812 = vmatpush1.msra.mxu0 0.0
    %1813 = vmatprep.subr.mxu0 0.0
    %1814 = vmatpush1.msra.mxu0 0.0
    %1815 = vmatprep.subr.mxu0 0.0
    %1816 = vmatpush1.msra.mxu0 0.0
    %1817 = vmatprep.subr.mxu0 0.0
    %1818 = vmatpush1.msra.mxu0 0.0
    %1819 = vmatprep.subr.mxu0 0.0
    %1820 = vmatpush1.msra.mxu0 0.0
    %1821 = vmatprep.subr.mxu0 0.0
    %1822 = vmatpush1.msra.mxu0 0.0
    %1823 = vmatprep.subr.mxu0 0.0
    %1824 = vmatpush1.msra.mxu0 0.0
    %1825 = vmatprep.subr.mxu0 0.0
    %1826 = vmatpush1.msra.mxu0 0.0
    %1827 = vmatprep.mubr.f32.mxu0 0.0
    %v1828 = vand.u32 %v1290, 4294901760
    %1829 = vmatmul.mubr.f32.gmra.mrb[0].mxu0 %v1828
    %v1830 = vpop.f32.mrb[0].mxu0
    %v1831 = vadd.f32 %v1715, %v1830
    %v1832 = vpop.f32.mrb[0].mxu0
    %1833 = vdwg.mxu0
    %1834 = vmatprep.subr.mxu0 0.0
    %v1835 = vand.u32 %v85, 4294901760
    %1836 = vmatpush1.msra.mxu0 %v1835
    %1837 = vmatprep.subr.mxu0 0.0
    %v1838 = vand.u32 %v86, 4294901760
    %1839 = vmatpush1.msra.mxu0 %v1838
    %1840 = vmatprep.subr.mxu0 0.0
    %v1841 = vand.u32 %v87, 4294901760
    %1842 = vmatpush1.msra.mxu0 %v1841
    %1843 = vmatprep.subr.mxu0 0.0
    %v1844 = vand.u32 %v88, 4294901760
    %1845 = vmatpush1.msra.mxu0 %v1844
    %1846 = vmatprep.subr.mxu0 0.0
    %v1847 = vand.u32 %v89, 4294901760
    %1848 = vmatpush1.msra.mxu0 %v1847
    %1849 = vmatprep.subr.mxu0 0.0
    %v1850 = vand.u32 %v90, 4294901760
    %1851 = vmatpush1.msra.mxu0 %v1850
    %1852 = vmatprep.subr.mxu0 0.0
    %v1853 = vand.u32 %v91, 4294901760
    %1854 = vmatpush1.msra.mxu0 %v1853
    %1855 = vmatprep.subr.mxu0 0.0
    %v1856 = vand.u32 %v92, 4294901760
    %1857 = vmatpush1.msra.mxu0 %v1856
    %1858 = vmatprep.subr.mxu0 0.0
    %v1859 = vand.u32 %v93, 4294901760
    %1860 = vmatpush1.msra.mxu0 %v1859
    %1861 = vmatprep.subr.mxu0 0.0
    %v1862 = vand.u32 %v94, 4294901760
    %1863 = vmatpush1.msra.mxu0 %v1862
    %1864 = vmatprep.subr.mxu0 0.0
    %v1865 = vand.u32 %v95, 4294901760
    %1866 = vmatpush1.msra.mxu0 %v1865
    %1867 = vmatprep.subr.mxu0 0.0
    %v1868 = vand.u32 %v96, 4294901760
    %1869 = vmatpush1.msra.mxu0 %v1868
    %1870 = vmatprep.subr.mxu0 0.0
    %v1871 = vand.u32 %v97, 4294901760
    %1872 = vmatpush1.msra.mxu0 %v1871
    %1873 = vmatprep.subr.mxu0 0.0
    %v1874 = vand.u32 %v98, 4294901760
    %1875 = vmatpush1.msra.mxu0 %v1874
    %1876 = vmatprep.subr.mxu0 0.0
    %v1877 = vand.u32 %v99, 4294901760
    %1878 = vmatpush1.msra.mxu0 %v1877
    %1879 = vmatprep.subr.mxu0 0.0
    %1880 = vmatpush1.msra.mxu0 0.0
    %1881 = vmatprep.subr.mxu0 0.0
    %1882 = vmatpush1.msra.mxu0 0.0
    %1883 = vmatprep.subr.mxu0 0.0
    %1884 = vmatpush1.msra.mxu0 0.0
    %1885 = vmatprep.subr.mxu0 0.0
    %1886 = vmatpush1.msra.mxu0 0.0
    %1887 = vmatprep.subr.mxu0 0.0
    %1888 = vmatpush1.msra.mxu0 0.0
    %1889 = vmatprep.subr.mxu0 0.0
    %1890 = vmatpush1.msra.mxu0 0.0
    %1891 = vmatprep.subr.mxu0 0.0
    %1892 = vmatpush1.msra.mxu0 0.0
    %1893 = vmatprep.subr.mxu0 0.0
    %1894 = vmatpush1.msra.mxu0 0.0
    %1895 = vmatprep.subr.mxu0 0.0
    %1896 = vmatpush1.msra.mxu0 0.0
    %1897 = vmatprep.subr.mxu0 0.0
    %1898 = vmatpush1.msra.mxu0 0.0
    %1899 = vmatprep.subr.mxu0 0.0
    %1900 = vmatpush1.msra.mxu0 0.0
    %1901 = vmatprep.subr.mxu0 0.0
    %1902 = vmatpush1.msra.mxu0 0.0
    %1903 = vmatprep.subr.mxu0 0.0
    %1904 = vmatpush1.msra.mxu0 0.0
    %1905 = vmatprep.subr.mxu0 0.0
    %1906 = vmatpush1.msra.mxu0 0.0
    %1907 = vmatprep.subr.mxu0 0.0
    %1908 = vmatpush1.msra.mxu0 0.0
    %1909 = vmatprep.subr.mxu0 0.0
    %1910 = vmatpush1.msra.mxu0 0.0
    %1911 = vmatprep.subr.mxu0 0.0
    %1912 = vmatpush1.msra.mxu0 0.0
    %1913 = vmatprep.mubr.f32.mxu0 0.0
    %v1914 = vand.u32 %v1290, 4294901760
    %1915 = vmatmul.mubr.f32.gmra.mrb[0].mxu0 %v1914
    %v1916 = vpop.f32.mrb[0].mxu0
    %v1917 = vadd.f32 %v1831, %v1916
    %v1918 = vpop.f32.mrb[0].mxu0
    %1919 = vdwg.mxu0
    %v1920 = vtanh.pop %v1917
    %v1922 = vlaneseq
    %v1923 = vshrl.u32 %v1922, 7
    %v1924 = vsub.s32 0, %v1923
    %v1925 = vrot.slane %v138, %v1924
    %v1928 = vsel %vm650, %v1920, 0
    %1930 = vmatprep.subr.mxu0 0.0
    %v1931 = vand.u32 %v101, 4294901760
    %1932 = vmatpush1.msra.mxu0 %v1931
    %1933 = vmatprep.subr.mxu0 0.0
    %v1934 = vand.u32 %v102, 4294901760
    %1935 = vmatpush1.msra.mxu0 %v1934
    %1936 = vmatprep.subr.mxu0 0.0
    %v1937 = vand.u32 %v103, 4294901760
    %1938 = vmatpush1.msra.mxu0 %v1937
    %1939 = vmatprep.subr.mxu0 0.0
    %v1940 = vand.u32 %v104, 4294901760
    %1941 = vmatpush1.msra.mxu0 %v1940
    %1942 = vmatprep.subr.mxu0 0.0
    %v1943 = vand.u32 %v105, 4294901760
    %1944 = vmatpush1.msra.mxu0 %v1943
    %1945 = vmatprep.subr.mxu0 0.0
    %v1946 = vand.u32 %v106, 4294901760
    %1947 = vmatpush1.msra.mxu0 %v1946
    %1948 = vmatprep.subr.mxu0 0.0
    %v1949 = vand.u32 %v107, 4294901760
    %1950 = vmatpush1.msra.mxu0 %v1949
    %1951 = vmatprep.subr.mxu0 0.0
    %v1952 = vand.u32 %v108, 4294901760
    %1953 = vmatpush1.msra.mxu0 %v1952
    %1954 = vmatprep.subr.mxu0 0.0
    %v1955 = vand.u32 %v109, 4294901760
    %1956 = vmatpush1.msra.mxu0 %v1955
    %1957 = vmatprep.subr.mxu0 0.0
    %v1958 = vand.u32 %v110, 4294901760
    %1959 = vmatpush1.msra.mxu0 %v1958
    %1960 = vmatprep.subr.mxu0 0.0
    %v1961 = vand.u32 %v111, 4294901760
    %1962 = vmatpush1.msra.mxu0 %v1961
    %1963 = vmatprep.subr.mxu0 0.0
    %v1964 = vand.u32 %v112, 4294901760
    %1965 = vmatpush1.msra.mxu0 %v1964
    %1966 = vmatprep.subr.mxu0 0.0
    %v1967 = vand.u32 %v113, 4294901760
    %1968 = vmatpush1.msra.mxu0 %v1967
    %1969 = vmatprep.subr.mxu0 0.0
    %v1970 = vand.u32 %v114, 4294901760
    %1971 = vmatpush1.msra.mxu0 %v1970
    %1972 = vmatprep.subr.mxu0 0.0
    %v1973 = vand.u32 %v115, 4294901760
    %1974 = vmatpush1.msra.mxu0 %v1973
    %1975 = vmatprep.subr.mxu0 0.0
    %1976 = vmatpush1.msra.mxu0 0.0
    %1977 = vmatprep.subr.mxu0 0.0
    %1978 = vmatpush1.msra.mxu0 0.0
    %1979 = vmatprep.subr.mxu0 0.0
    %1980 = vmatpush1.msra.mxu0 0.0
    %1981 = vmatprep.subr.mxu0 0.0
    %1982 = vmatpush1.msra.mxu0 0.0
    %1983 = vmatprep.subr.mxu0 0.0
    %1984 = vmatpush1.msra.mxu0 0.0
    %1985 = vmatprep.subr.mxu0 0.0
    %1986 = vmatpush1.msra.mxu0 0.0
    %1987 = vmatprep.subr.mxu0 0.0
    %1988 = vmatpush1.msra.mxu0 0.0
    %1989 = vmatprep.subr.mxu0 0.0
    %1990 = vmatpush1.msra.mxu0 0.0
    %1991 = vmatprep.subr.mxu0 0.0
    %1992 = vmatpush1.msra.mxu0 0.0
    %1993 = vmatprep.subr.mxu0 0.0
    %1994 = vmatpush1.msra.mxu0 0.0
    %1995 = vmatprep.subr.mxu0 0.0
    %1996 = vmatpush1.msra.mxu0 0.0
    %1997 = vmatprep.subr.mxu0 0.0
    %1998 = vmatpush1.msra.mxu0 0.0
    %1999 = vmatprep.subr.mxu0 0.0
    %2000 = vmatpush1.msra.mxu0 0.0
    %2001 = vmatprep.subr.mxu0 0.0
    %2002 = vmatpush1.msra.mxu0 0.0
    %2003 = vmatprep.subr.mxu0 0.0
    %2004 = vmatpush1.msra.mxu0 0.0
    %2005 = vmatprep.subr.mxu0 0.0
    %2006 = vmatpush1.msra.mxu0 0.0
    %2007 = vmatprep.subr.mxu0 0.0
    %2008 = vmatpush1.msra.mxu0 0.0
    %2009 = vmatprep.mubr.f32.mxu0 0.0
    %v2010 = vand.u32 %v1928, 4294901760
    %v2011 = vsub.f32 %v1928, %v2010
    %v2012 = vand.u32 %v2011, 4294901760
    %v2013 = vsub.f32 %v2011, %v2012
    %v2014 = vand.u32 %v2013, 4294901760
    %2015 = vmatmul.mubr.f32.gmra.mrb[0].mxu0 %v2014
    %v2016 = vpop.f32.mrb[0].mxu0
    %v2017 = vadd.f32 %v1925, %v2016
    %v2018 = vpop.f32.mrb[0].mxu0
    %2019 = vdwg.mxu0
    %2020 = vmatprep.subr.mxu0 0.0
    %v2021 = vand.u32 %v101, 4294901760
    %v2022 = vsub.f32 %v101, %v2021
    %v2023 = vand.u32 %v2022, 4294901760
    %v2024 = vsub.f32 %v2022, %v2023
    %v2025 = vand.u32 %v2024, 4294901760
    %2026 = vmatpush1.msra.mxu0 %v2025
    %2027 = vmatprep.subr.mxu0 0.0
    %v2028 = vand.u32 %v102, 4294901760
    %v2029 = vsub.f32 %v102, %v2028
    %v2030 = vand.u32 %v2029, 4294901760
    %v2031 = vsub.f32 %v2029, %v2030
    %v2032 = vand.u32 %v2031, 4294901760
    %2033 = vmatpush1.msra.mxu0 %v2032
    %2034 = vmatprep.subr.mxu0 0.0
    %v2035 = vand.u32 %v103, 4294901760
    %v2036 = vsub.f32 %v103, %v2035
    %v2037 = vand.u32 %v2036, 4294901760
    %v2038 = vsub.f32 %v2036, %v2037
    %v2039 = vand.u32 %v2038, 4294901760
    %2040 = vmatpush1.msra.mxu0 %v2039
    %2041 = vmatprep.subr.mxu0 0.0
    %v2042 = vand.u32 %v104, 4294901760
    %v2043 = vsub.f32 %v104, %v2042
    %v2044 = vand.u32 %v2043, 4294901760
    %v2045 = vsub.f32 %v2043, %v2044
    %v2046 = vand.u32 %v2045, 4294901760
    %2047 = vmatpush1.msra.mxu0 %v2046
    %2048 = vmatprep.subr.mxu0 0.0
    %v2049 = vand.u32 %v105, 4294901760
    %v2050 = vsub.f32 %v105, %v2049
    %v2051 = vand.u32 %v2050, 4294901760
    %v2052 = vsub.f32 %v2050, %v2051
    %v2053 = vand.u32 %v2052, 4294901760
    %2054 = vmatpush1.msra.mxu0 %v2053
    %2055 = vmatprep.subr.mxu0 0.0
    %v2056 = vand.u32 %v106, 4294901760
    %v2057 = vsub.f32 %v106, %v2056
    %v2058 = vand.u32 %v2057, 4294901760
    %v2059 = vsub.f32 %v2057, %v2058
    %v2060 = vand.u32 %v2059, 4294901760
    %2061 = vmatpush1.msra.mxu0 %v2060
    %2062 = vmatprep.subr.mxu0 0.0
    %v2063 = vand.u32 %v107, 4294901760
    %v2064 = vsub.f32 %v107, %v2063
    %v2065 = vand.u32 %v2064, 4294901760
    %v2066 = vsub.f32 %v2064, %v2065
    %v2067 = vand.u32 %v2066, 4294901760
    %2068 = vmatpush1.msra.mxu0 %v2067
    %2069 = vmatprep.subr.mxu0 0.0
    %v2070 = vand.u32 %v108, 4294901760
    %v2071 = vsub.f32 %v108, %v2070
    %v2072 = vand.u32 %v2071, 4294901760
    %v2073 = vsub.f32 %v2071, %v2072
    %v2074 = vand.u32 %v2073, 4294901760
    %2075 = vmatpush1.msra.mxu0 %v2074
    %2076 = vmatprep.subr.mxu0 0.0
    %v2077 = vand.u32 %v109, 4294901760
    %v2078 = vsub.f32 %v109, %v2077
    %v2079 = vand.u32 %v2078, 4294901760
    %v2080 = vsub.f32 %v2078, %v2079
    %v2081 = vand.u32 %v2080, 4294901760
    %2082 = vmatpush1.msra.mxu0 %v2081
    %2083 = vmatprep.subr.mxu0 0.0
    %v2084 = vand.u32 %v110, 4294901760
    %v2085 = vsub.f32 %v110, %v2084
    %v2086 = vand.u32 %v2085, 4294901760
    %v2087 = vsub.f32 %v2085, %v2086
    %v2088 = vand.u32 %v2087, 4294901760
    %2089 = vmatpush1.msra.mxu0 %v2088
    %2090 = vmatprep.subr.mxu0 0.0
    %v2091 = vand.u32 %v111, 4294901760
    %v2092 = vsub.f32 %v111, %v2091
    %v2093 = vand.u32 %v2092, 4294901760
    %v2094 = vsub.f32 %v2092, %v2093
    %v2095 = vand.u32 %v2094, 4294901760
    %2096 = vmatpush1.msra.mxu0 %v2095
    %2097 = vmatprep.subr.mxu0 0.0
    %v2098 = vand.u32 %v112, 4294901760
    %v2099 = vsub.f32 %v112, %v2098
    %v2100 = vand.u32 %v2099, 4294901760
    %v2101 = vsub.f32 %v2099, %v2100
    %v2102 = vand.u32 %v2101, 4294901760
    %2103 = vmatpush1.msra.mxu0 %v2102
    %2104 = vmatprep.subr.mxu0 0.0
    %v2105 = vand.u32 %v113, 4294901760
    %v2106 = vsub.f32 %v113, %v2105
    %v2107 = vand.u32 %v2106, 4294901760
    %v2108 = vsub.f32 %v2106, %v2107
    %v2109 = vand.u32 %v2108, 4294901760
    %2110 = vmatpush1.msra.mxu0 %v2109
    %2111 = vmatprep.subr.mxu0 0.0
    %v2112 = vand.u32 %v114, 4294901760
    %v2113 = vsub.f32 %v114, %v2112
    %v2114 = vand.u32 %v2113, 4294901760
    %v2115 = vsub.f32 %v2113, %v2114
    %v2116 = vand.u32 %v2115, 4294901760
    %2117 = vmatpush1.msra.mxu0 %v2116
    %2118 = vmatprep.subr.mxu0 0.0
    %v2119 = vand.u32 %v115, 4294901760
    %v2120 = vsub.f32 %v115, %v2119
    %v2121 = vand.u32 %v2120, 4294901760
    %v2122 = vsub.f32 %v2120, %v2121
    %v2123 = vand.u32 %v2122, 4294901760
    %2124 = vmatpush1.msra.mxu0 %v2123
    %2125 = vmatprep.subr.mxu0 0.0
    %2126 = vmatpush1.msra.mxu0 0.0
    %2127 = vmatprep.subr.mxu0 0.0
    %2128 = vmatpush1.msra.mxu0 0.0
    %2129 = vmatprep.subr.mxu0 0.0
    %2130 = vmatpush1.msra.mxu0 0.0
    %2131 = vmatprep.subr.mxu0 0.0
    %2132 = vmatpush1.msra.mxu0 0.0
    %2133 = vmatprep.subr.mxu0 0.0
    %2134 = vmatpush1.msra.mxu0 0.0
    %2135 = vmatprep.subr.mxu0 0.0
    %2136 = vmatpush1.msra.mxu0 0.0
    %2137 = vmatprep.subr.mxu0 0.0
    %2138 = vmatpush1.msra.mxu0 0.0
    %2139 = vmatprep.subr.mxu0 0.0
    %2140 = vmatpush1.msra.mxu0 0.0
    %2141 = vmatprep.subr.mxu0 0.0
    %2142 = vmatpush1.msra.mxu0 0.0
    %2143 = vmatprep.subr.mxu0 0.0
    %2144 = vmatpush1.msra.mxu0 0.0
    %2145 = vmatprep.subr.mxu0 0.0
    %2146 = vmatpush1.msra.mxu0 0.0
    %2147 = vmatprep.subr.mxu0 0.0
    %2148 = vmatpush1.msra.mxu0 0.0
    %2149 = vmatprep.subr.mxu0 0.0
    %2150 = vmatpush1.msra.mxu0 0.0
    %2151 = vmatprep.subr.mxu0 0.0
    %2152 = vmatpush1.msra.mxu0 0.0
    %2153 = vmatprep.subr.mxu0 0.0
    %2154 = vmatpush1.msra.mxu0 0.0
    %2155 = vmatprep.subr.mxu0 0.0
    %2156 = vmatpush1.msra.mxu0 0.0
    %2157 = vmatprep.subr.mxu0 0.0
    %2158 = vmatpush1.msra.mxu0 0.0
    %2159 = vmatprep.mubr.f32.mxu0 0.0
    %v2160 = vand.u32 %v1928, 4294901760
    %2161 = vmatmul.mubr.f32.gmra.mrb[0].mxu0 %v2160
    %v2162 = vpop.f32.mrb[0].mxu0
    %v2163 = vadd.f32 %v2017, %v2162
    %v2164 = vpop.f32.mrb[0].mxu0
    %2165 = vdwg.mxu0
    %2166 = vmatprep.subr.mxu0 0.0
    %v2167 = vand.u32 %v101, 4294901760
    %v2168 = vsub.f32 %v101, %v2167
    %2169 = vmatpush1.msra.mxu0 %v2168
    %2170 = vmatprep.subr.mxu0 0.0
    %v2171 = vand.u32 %v102, 4294901760
    %v2172 = vsub.f32 %v102, %v2171
    %2173 = vmatpush1.msra.mxu0 %v2172
    %2174 = vmatprep.subr.mxu0 0.0
    %v2175 = vand.u32 %v103, 4294901760
    %v2176 = vsub.f32 %v103, %v2175
    %2177 = vmatpush1.msra.mxu0 %v2176
    %2178 = vmatprep.subr.mxu0 0.0
    %v2179 = vand.u32 %v104, 4294901760
    %v2180 = vsub.f32 %v104, %v2179
    %2181 = vmatpush1.msra.mxu0 %v2180
    %2182 = vmatprep.subr.mxu0 0.0
    %v2183 = vand.u32 %v105, 4294901760
    %v2184 = vsub.f32 %v105, %v2183
    %2185 = vmatpush1.msra.mxu0 %v2184
    %2186 = vmatprep.subr.mxu0 0.0
    %v2187 = vand.u32 %v106, 4294901760
    %v2188 = vsub.f32 %v106, %v2187
    %2189 = vmatpush1.msra.mxu0 %v2188
    %2190 = vmatprep.subr.mxu0 0.0
    %v2191 = vand.u32 %v107, 4294901760
    %v2192 = vsub.f32 %v107, %v2191
    %2193 = vmatpush1.msra.mxu0 %v2192
    %2194 = vmatprep.subr.mxu0 0.0
    %v2195 = vand.u32 %v108, 4294901760
    %v2196 = vsub.f32 %v108, %v2195
    %2197 = vmatpush1.msra.mxu0 %v2196
    %2198 = vmatprep.subr.mxu0 0.0
    %v2199 = vand.u32 %v109, 4294901760
    %v2200 = vsub.f32 %v109, %v2199
    %2201 = vmatpush1.msra.mxu0 %v2200
    %2202 = vmatprep.subr.mxu0 0.0
    %v2203 = vand.u32 %v110, 4294901760
    %v2204 = vsub.f32 %v110, %v2203
    %2205 = vmatpush1.msra.mxu0 %v2204
    %2206 = vmatprep.subr.mxu0 0.0
    %v2207 = vand.u32 %v111, 4294901760
    %v2208 = vsub.f32 %v111, %v2207
    %2209 = vmatpush1.msra.mxu0 %v2208
    %2210 = vmatprep.subr.mxu0 0.0
    %v2211 = vand.u32 %v112, 4294901760
    %v2212 = vsub.f32 %v112, %v2211
    %2213 = vmatpush1.msra.mxu0 %v2212
    %2214 = vmatprep.subr.mxu0 0.0
    %v2215 = vand.u32 %v113, 4294901760
    %v2216 = vsub.f32 %v113, %v2215
    %2217 = vmatpush1.msra.mxu0 %v2216
    %2218 = vmatprep.subr.mxu0 0.0
    %v2219 = vand.u32 %v114, 4294901760
    %v2220 = vsub.f32 %v114, %v2219
    %2221 = vmatpush1.msra.mxu0 %v2220
    %2222 = vmatprep.subr.mxu0 0.0
    %v2223 = vand.u32 %v115, 4294901760
    %v2224 = vsub.f32 %v115, %v2223
    %2225 = vmatpush1.msra.mxu0 %v2224
    %2226 = vmatprep.subr.mxu0 0.0
    %2227 = vmatpush1.msra.mxu0 0.0
    %2228 = vmatprep.subr.mxu0 0.0
    %2229 = vmatpush1.msra.mxu0 0.0
    %2230 = vmatprep.subr.mxu0 0.0
    %2231 = vmatpush1.msra.mxu0 0.0
    %2232 = vmatprep.subr.mxu0 0.0
    %2233 = vmatpush1.msra.mxu0 0.0
    %2234 = vmatprep.subr.mxu0 0.0
    %2235 = vmatpush1.msra.mxu0 0.0
    %2236 = vmatprep.subr.mxu0 0.0
    %2237 = vmatpush1.msra.mxu0 0.0
    %2238 = vmatprep.subr.mxu0 0.0
    %2239 = vmatpush1.msra.mxu0 0.0
    %2240 = vmatprep.subr.mxu0 0.0
    %2241 = vmatpush1.msra.mxu0 0.0
    %2242 = vmatprep.subr.mxu0 0.0
    %2243 = vmatpush1.msra.mxu0 0.0
    %2244 = vmatprep.subr.mxu0 0.0
    %2245 = vmatpush1.msra.mxu0 0.0
    %2246 = vmatprep.subr.mxu0 0.0
    %2247 = vmatpush1.msra.mxu0 0.0
    %2248 = vmatprep.subr.mxu0 0.0
    %2249 = vmatpush1.msra.mxu0 0.0
    %2250 = vmatprep.subr.mxu0 0.0
    %2251 = vmatpush1.msra.mxu0 0.0
    %2252 = vmatprep.subr.mxu0 0.0
    %2253 = vmatpush1.msra.mxu0 0.0
    %2254 = vmatprep.subr.mxu0 0.0
    %2255 = vmatpush1.msra.mxu0 0.0
    %2256 = vmatprep.subr.mxu0 0.0
    %2257 = vmatpush1.msra.mxu0 0.0
    %2258 = vmatprep.subr.mxu0 0.0
    %2259 = vmatpush1.msra.mxu0 0.0
    %2260 = vmatprep.mubr.f32.mxu0 0.0
    %v2261 = vand.u32 %v1928, 4294901760
    %v2262 = vsub.f32 %v1928, %v2261
    %2263 = vmatmul.mubr.f32.gmra.mrb[0].mxu0 %v2262
    %v2264 = vpop.f32.mrb[0].mxu0
    %v2265 = vadd.f32 %v2163, %v2264
    %v2266 = vpop.f32.mrb[0].mxu0
    %2267 = vdwg.mxu0
    %2268 = vmatprep.subr.mxu0 0.0
    %v2269 = vand.u32 %v101, 4294901760
    %2270 = vmatpush1.msra.mxu0 %v2269
    %2271 = vmatprep.subr.mxu0 0.0
    %v2272 = vand.u32 %v102, 4294901760
    %2273 = vmatpush1.msra.mxu0 %v2272
    %2274 = vmatprep.subr.mxu0 0.0
    %v2275 = vand.u32 %v103, 4294901760
    %2276 = vmatpush1.msra.mxu0 %v2275
    %2277 = vmatprep.subr.mxu0 0.0
    %v2278 = vand.u32 %v104, 4294901760
    %2279 = vmatpush1.msra.mxu0 %v2278
    %2280 = vmatprep.subr.mxu0 0.0
    %v2281 = vand.u32 %v105, 4294901760
    %2282 = vmatpush1.msra.mxu0 %v2281
    %2283 = vmatprep.subr.mxu0 0.0
    %v2284 = vand.u32 %v106, 4294901760
    %2285 = vmatpush1.msra.mxu0 %v2284
    %2286 = vmatprep.subr.mxu0 0.0
    %v2287 = vand.u32 %v107, 4294901760
    %2288 = vmatpush1.msra.mxu0 %v2287
    %2289 = vmatprep.subr.mxu0 0.0
    %v2290 = vand.u32 %v108, 4294901760
    %2291 = vmatpush1.msra.mxu0 %v2290
    %2292 = vmatprep.subr.mxu0 0.0
    %v2293 = vand.u32 %v109, 4294901760
    %2294 = vmatpush1.msra.mxu0 %v2293
    %2295 = vmatprep.subr.mxu0 0.0
    %v2296 = vand.u32 %v110, 4294901760
    %2297 = vmatpush1.msra.mxu0 %v2296
    %2298 = vmatprep.subr.mxu0 0.0
    %v2299 = vand.u32 %v111, 4294901760
    %2300 = vmatpush1.msra.mxu0 %v2299
    %2301 = vmatprep.subr.mxu0 0.0
    %v2302 = vand.u32 %v112, 4294901760
    %2303 = vmatpush1.msra.mxu0 %v2302
    %2304 = vmatprep.subr.mxu0 0.0
    %v2305 = vand.u32 %v113, 4294901760
    %2306 = vmatpush1.msra.mxu0 %v2305
    %2307 = vmatprep.subr.mxu0 0.0
    %v2308 = vand.u32 %v114, 4294901760
    %2309 = vmatpush1.msra.mxu0 %v2308
    %2310 = vmatprep.subr.mxu0 0.0
    %v2311 = vand.u32 %v115, 4294901760
    %2312 = vmatpush1.msra.mxu0 %v2311
    %2313 = vmatprep.subr.mxu0 0.0
    %2314 = vmatpush1.msra.mxu0 0.0
    %2315 = vmatprep.subr.mxu0 0.0
    %2316 = vmatpush1.msra.mxu0 0.0
    %2317 = vmatprep.subr.mxu0 0.0
    %2318 = vmatpush1.msra.mxu0 0.0
    %2319 = vmatprep.subr.mxu0 0.0
    %2320 = vmatpush1.msra.mxu0 0.0
    %2321 = vmatprep.subr.mxu0 0.0
    %2322 = vmatpush1.msra.mxu0 0.0
    %2323 = vmatprep.subr.mxu0 0.0
    %2324 = vmatpush1.msra.mxu0 0.0
    %2325 = vmatprep.subr.mxu0 0.0
    %2326 = vmatpush1.msra.mxu0 0.0
    %2327 = vmatprep.subr.mxu0 0.0
    %2328 = vmatpush1.msra.mxu0 0.0
    %2329 = vmatprep.subr.mxu0 0.0
    %2330 = vmatpush1.msra.mxu0 0.0
    %2331 = vmatprep.subr.mxu0 0.0
    %2332 = vmatpush1.msra.mxu0 0.0
    %2333 = vmatprep.subr.mxu0 0.0
    %2334 = vmatpush1.msra.mxu0 0.0
    %2335 = vmatprep.subr.mxu0 0.0
    %2336 = vmatpush1.msra.mxu0 0.0
    %2337 = vmatprep.subr.mxu0 0.0
    %2338 = vmatpush1.msra.mxu0 0.0
    %2339 = vmatprep.subr.mxu0 0.0
    %2340 = vmatpush1.msra.mxu0 0.0
    %2341 = vmatprep.subr.mxu0 0.0
    %2342 = vmatpush1.msra.mxu0 0.0
    %2343 = vmatprep.subr.mxu0 0.0
    %2344 = vmatpush1.msra.mxu0 0.0
    %2345 = vmatprep.subr.mxu0 0.0
    %2346 = vmatpush1.msra.mxu0 0.0
    %2347 = vmatprep.mubr.f32.mxu0 0.0
    %v2348 = vand.u32 %v1928, 4294901760
    %v2349 = vsub.f32 %v1928, %v2348
    %v2350 = vand.u32 %v2349, 4294901760
    %2351 = vmatmul.mubr.f32.gmra.mrb[0].mxu0 %v2350
    %v2352 = vpop.f32.mrb[0].mxu0
    %v2353 = vadd.f32 %v2265, %v2352
    %v2354 = vpop.f32.mrb[0].mxu0
    %2355 = vdwg.mxu0
    %2356 = vmatprep.subr.mxu0 0.0
    %v2357 = vand.u32 %v101, 4294901760
    %v2358 = vsub.f32 %v101, %v2357
    %v2359 = vand.u32 %v2358, 4294901760
    %2360 = vmatpush1.msra.mxu0 %v2359
    %2361 = vmatprep.subr.mxu0 0.0
    %v2362 = vand.u32 %v102, 4294901760
    %v2363 = vsub.f32 %v102, %v2362
    %v2364 = vand.u32 %v2363, 4294901760
    %2365 = vmatpush1.msra.mxu0 %v2364
    %2366 = vmatprep.subr.mxu0 0.0
    %v2367 = vand.u32 %v103, 4294901760
    %v2368 = vsub.f32 %v103, %v2367
    %v2369 = vand.u32 %v2368, 4294901760
    %2370 = vmatpush1.msra.mxu0 %v2369
    %2371 = vmatprep.subr.mxu0 0.0
    %v2372 = vand.u32 %v104, 4294901760
    %v2373 = vsub.f32 %v104, %v2372
    %v2374 = vand.u32 %v2373, 4294901760
    %2375 = vmatpush1.msra.mxu0 %v2374
    %2376 = vmatprep.subr.mxu0 0.0
    %v2377 = vand.u32 %v105, 4294901760
    %v2378 = vsub.f32 %v105, %v2377
    %v2379 = vand.u32 %v2378, 4294901760
    %2380 = vmatpush1.msra.mxu0 %v2379
    %2381 = vmatprep.subr.mxu0 0.0
    %v2382 = vand.u32 %v106, 4294901760
    %v2383 = vsub.f32 %v106, %v2382
    %v2384 = vand.u32 %v2383, 4294901760
    %2385 = vmatpush1.msra.mxu0 %v2384
    %2386 = vmatprep.subr.mxu0 0.0
    %v2387 = vand.u32 %v107, 4294901760
    %v2388 = vsub.f32 %v107, %v2387
    %v2389 = vand.u32 %v2388, 4294901760
    %2390 = vmatpush1.msra.mxu0 %v2389
    %2391 = vmatprep.subr.mxu0 0.0
    %v2392 = vand.u32 %v108, 4294901760
    %v2393 = vsub.f32 %v108, %v2392
    %v2394 = vand.u32 %v2393, 4294901760
    %2395 = vmatpush1.msra.mxu0 %v2394
    %2396 = vmatprep.subr.mxu0 0.0
    %v2397 = vand.u32 %v109, 4294901760
    %v2398 = vsub.f32 %v109, %v2397
    %v2399 = vand.u32 %v2398, 4294901760
    %2400 = vmatpush1.msra.mxu0 %v2399
    %2401 = vmatprep.subr.mxu0 0.0
    %v2402 = vand.u32 %v110, 4294901760
    %v2403 = vsub.f32 %v110, %v2402
    %v2404 = vand.u32 %v2403, 4294901760
    %2405 = vmatpush1.msra.mxu0 %v2404
    %2406 = vmatprep.subr.mxu0 0.0
    %v2407 = vand.u32 %v111, 4294901760
    %v2408 = vsub.f32 %v111, %v2407
    %v2409 = vand.u32 %v2408, 4294901760
    %2410 = vmatpush1.msra.mxu0 %v2409
    %2411 = vmatprep.subr.mxu0 0.0
    %v2412 = vand.u32 %v112, 4294901760
    %v2413 = vsub.f32 %v112, %v2412
    %v2414 = vand.u32 %v2413, 4294901760
    %2415 = vmatpush1.msra.mxu0 %v2414
    %2416 = vmatprep.subr.mxu0 0.0
    %v2417 = vand.u32 %v113, 4294901760
    %v2418 = vsub.f32 %v113, %v2417
    %v2419 = vand.u32 %v2418, 4294901760
    %2420 = vmatpush1.msra.mxu0 %v2419
    %2421 = vmatprep.subr.mxu0 0.0
    %v2422 = vand.u32 %v114, 4294901760
    %v2423 = vsub.f32 %v114, %v2422
    %v2424 = vand.u32 %v2423, 4294901760
    %2425 = vmatpush1.msra.mxu0 %v2424
    %2426 = vmatprep.subr.mxu0 0.0
    %v2427 = vand.u32 %v115, 4294901760
    %v2428 = vsub.f32 %v115, %v2427
    %v2429 = vand.u32 %v2428, 4294901760
    %2430 = vmatpush1.msra.mxu0 %v2429
    %2431 = vmatprep.subr.mxu0 0.0
    %2432 = vmatpush1.msra.mxu0 0.0
    %2433 = vmatprep.subr.mxu0 0.0
    %2434 = vmatpush1.msra.mxu0 0.0
    %2435 = vmatprep.subr.mxu0 0.0
    %2436 = vmatpush1.msra.mxu0 0.0
    %2437 = vmatprep.subr.mxu0 0.0
    %2438 = vmatpush1.msra.mxu0 0.0
    %2439 = vmatprep.subr.mxu0 0.0
    %2440 = vmatpush1.msra.mxu0 0.0
    %2441 = vmatprep.subr.mxu0 0.0
    %2442 = vmatpush1.msra.mxu0 0.0
    %2443 = vmatprep.subr.mxu0 0.0
    %2444 = vmatpush1.msra.mxu0 0.0
    %2445 = vmatprep.subr.mxu0 0.0
    %2446 = vmatpush1.msra.mxu0 0.0
    %2447 = vmatprep.subr.mxu0 0.0
    %2448 = vmatpush1.msra.mxu0 0.0
    %2449 = vmatprep.subr.mxu0 0.0
    %2450 = vmatpush1.msra.mxu0 0.0
    %2451 = vmatprep.subr.mxu0 0.0
    %2452 = vmatpush1.msra.mxu0 0.0
    %2453 = vmatprep.subr.mxu0 0.0
    %2454 = vmatpush1.msra.mxu0 0.0
    %2455 = vmatprep.subr.mxu0 0.0
    %2456 = vmatpush1.msra.mxu0 0.0
    %2457 = vmatprep.subr.mxu0 0.0
    %2458 = vmatpush1.msra.mxu0 0.0
    %2459 = vmatprep.subr.mxu0 0.0
    %2460 = vmatpush1.msra.mxu0 0.0
    %2461 = vmatprep.subr.mxu0 0.0
    %2462 = vmatpush1.msra.mxu0 0.0
    %2463 = vmatprep.subr.mxu0 0.0
    %2464 = vmatpush1.msra.mxu0 0.0
    %2465 = vmatprep.mubr.f32.mxu0 0.0
    %v2466 = vand.u32 %v1928, 4294901760
    %2467 = vmatmul.mubr.f32.gmra.mrb[0].mxu0 %v2466
    %v2468 = vpop.f32.mrb[0].mxu0
    %v2469 = vadd.f32 %v2353, %v2468
    %v2470 = vpop.f32.mrb[0].mxu0
    %2471 = vdwg.mxu0
    %2472 = vmatprep.subr.mxu0 0.0
    %v2473 = vand.u32 %v101, 4294901760
    %2474 = vmatpush1.msra.mxu0 %v2473
    %2475 = vmatprep.subr.mxu0 0.0
    %v2476 = vand.u32 %v102, 4294901760
    %2477 = vmatpush1.msra.mxu0 %v2476
    %2478 = vmatprep.subr.mxu0 0.0
    %v2479 = vand.u32 %v103, 4294901760
    %2480 = vmatpush1.msra.mxu0 %v2479
    %2481 = vmatprep.subr.mxu0 0.0
    %v2482 = vand.u32 %v104, 4294901760
    %2483 = vmatpush1.msra.mxu0 %v2482
    %2484 = vmatprep.subr.mxu0 0.0
    %v2485 = vand.u32 %v105, 4294901760
    %2486 = vmatpush1.msra.mxu0 %v2485
    %2487 = vmatprep.subr.mxu0 0.0
    %v2488 = vand.u32 %v106, 4294901760
    %2489 = vmatpush1.msra.mxu0 %v2488
    %2490 = vmatprep.subr.mxu0 0.0
    %v2491 = vand.u32 %v107, 4294901760
    %2492 = vmatpush1.msra.mxu0 %v2491
    %2493 = vmatprep.subr.mxu0 0.0
    %v2494 = vand.u32 %v108, 4294901760
    %2495 = vmatpush1.msra.mxu0 %v2494
    %2496 = vmatprep.subr.mxu0 0.0
    %v2497 = vand.u32 %v109, 4294901760
    %2498 = vmatpush1.msra.mxu0 %v2497
    %2499 = vmatprep.subr.mxu0 0.0
    %v2500 = vand.u32 %v110, 4294901760
    %2501 = vmatpush1.msra.mxu0 %v2500
    %2502 = vmatprep.subr.mxu0 0.0
    %v2503 = vand.u32 %v111, 4294901760
    %2504 = vmatpush1.msra.mxu0 %v2503
    %2505 = vmatprep.subr.mxu0 0.0
    %v2506 = vand.u32 %v112, 4294901760
    %2507 = vmatpush1.msra.mxu0 %v2506
    %2508 = vmatprep.subr.mxu0 0.0
    %v2509 = vand.u32 %v113, 4294901760
    %2510 = vmatpush1.msra.mxu0 %v2509
    %2511 = vmatprep.subr.mxu0 0.0
    %v2512 = vand.u32 %v114, 4294901760
    %2513 = vmatpush1.msra.mxu0 %v2512
    %2514 = vmatprep.subr.mxu0 0.0
    %v2515 = vand.u32 %v115, 4294901760
    %2516 = vmatpush1.msra.mxu0 %v2515
    %2517 = vmatprep.subr.mxu0 0.0
    %2518 = vmatpush1.msra.mxu0 0.0
    %2519 = vmatprep.subr.mxu0 0.0
    %2520 = vmatpush1.msra.mxu0 0.0
    %2521 = vmatprep.subr.mxu0 0.0
    %2522 = vmatpush1.msra.mxu0 0.0
    %2523 = vmatprep.subr.mxu0 0.0
    %2524 = vmatpush1.msra.mxu0 0.0
    %2525 = vmatprep.subr.mxu0 0.0
    %2526 = vmatpush1.msra.mxu0 0.0
    %2527 = vmatprep.subr.mxu0 0.0
    %2528 = vmatpush1.msra.mxu0 0.0
    %2529 = vmatprep.subr.mxu0 0.0
    %2530 = vmatpush1.msra.mxu0 0.0
    %2531 = vmatprep.subr.mxu0 0.0
    %2532 = vmatpush1.msra.mxu0 0.0
    %2533 = vmatprep.subr.mxu0 0.0
    %2534 = vmatpush1.msra.mxu0 0.0
    %2535 = vmatprep.subr.mxu0 0.0
    %2536 = vmatpush1.msra.mxu0 0.0
    %2537 = vmatprep.subr.mxu0 0.0
    %2538 = vmatpush1.msra.mxu0 0.0
    %2539 = vmatprep.subr.mxu0 0.0
    %2540 = vmatpush1.msra.mxu0 0.0
    %2541 = vmatprep.subr.mxu0 0.0
    %2542 = vmatpush1.msra.mxu0 0.0
    %2543 = vmatprep.subr.mxu0 0.0
    %2544 = vmatpush1.msra.mxu0 0.0
    %2545 = vmatprep.subr.mxu0 0.0
    %2546 = vmatpush1.msra.mxu0 0.0
    %2547 = vmatprep.subr.mxu0 0.0
    %2548 = vmatpush1.msra.mxu0 0.0
    %2549 = vmatprep.subr.mxu0 0.0
    %2550 = vmatpush1.msra.mxu0 0.0
    %2551 = vmatprep.mubr.f32.mxu0 0.0
    %v2552 = vand.u32 %v1928, 4294901760
    %2553 = vmatmul.mubr.f32.gmra.mrb[0].mxu0 %v2552
    %v2554 = vpop.f32.mrb[0].mxu0
    %v2555 = vadd.f32 %v2469, %v2554
    %v2556 = vpop.f32.mrb[0].mxu0
    %2557 = vdwg.mxu0
    %v2558 = vtanh.pop %v2555
    %v2560 = vlaneseq
    %v2561 = vshrl.u32 %v2560, 7
    %v2562 = vsub.s32 0, %v2561
    %v2563 = vrot.slane %v140, %v2562
    %v2566 = vsel %vm650, %v2558, 0
    %2568 = vmatprep.subr.mxu0 0.0
    %v2569 = vand.u32 %v117, 4294901760
    %2570 = vmatpush1.msra.mxu0 %v2569
    %2571 = vmatprep.subr.mxu0 0.0
    %v2572 = vand.u32 %v118, 4294901760
    %2573 = vmatpush1.msra.mxu0 %v2572
    %2574 = vmatprep.subr.mxu0 0.0
    %v2575 = vand.u32 %v119, 4294901760
    %2576 = vmatpush1.msra.mxu0 %v2575
    %2577 = vmatprep.subr.mxu0 0.0
    %v2578 = vand.u32 %v120, 4294901760
    %2579 = vmatpush1.msra.mxu0 %v2578
    %2580 = vmatprep.subr.mxu0 0.0
    %v2581 = vand.u32 %v121, 4294901760
    %2582 = vmatpush1.msra.mxu0 %v2581
    %2583 = vmatprep.subr.mxu0 0.0
    %v2584 = vand.u32 %v122, 4294901760
    %2585 = vmatpush1.msra.mxu0 %v2584
    %2586 = vmatprep.subr.mxu0 0.0
    %v2587 = vand.u32 %v123, 4294901760
    %2588 = vmatpush1.msra.mxu0 %v2587
    %2589 = vmatprep.subr.mxu0 0.0
    %v2590 = vand.u32 %v124, 4294901760
    %2591 = vmatpush1.msra.mxu0 %v2590
    %2592 = vmatprep.subr.mxu0 0.0
    %v2593 = vand.u32 %v125, 4294901760
    %2594 = vmatpush1.msra.mxu0 %v2593
    %2595 = vmatprep.subr.mxu0 0.0
    %v2596 = vand.u32 %v126, 4294901760
    %2597 = vmatpush1.msra.mxu0 %v2596
    %2598 = vmatprep.subr.mxu0 0.0
    %v2599 = vand.u32 %v127, 4294901760
    %2600 = vmatpush1.msra.mxu0 %v2599
    %2601 = vmatprep.subr.mxu0 0.0
    %v2602 = vand.u32 %v128, 4294901760
    %2603 = vmatpush1.msra.mxu0 %v2602
    %2604 = vmatprep.subr.mxu0 0.0
    %v2605 = vand.u32 %v129, 4294901760
    %2606 = vmatpush1.msra.mxu0 %v2605
    %2607 = vmatprep.subr.mxu0 0.0
    %v2608 = vand.u32 %v130, 4294901760
    %2609 = vmatpush1.msra.mxu0 %v2608
    %2610 = vmatprep.subr.mxu0 0.0
    %v2611 = vand.u32 %v131, 4294901760
    %2612 = vmatpush1.msra.mxu0 %v2611
    %2613 = vmatprep.subr.mxu0 0.0
    %2614 = vmatpush1.msra.mxu0 0.0
    %2615 = vmatprep.subr.mxu0 0.0
    %2616 = vmatpush1.msra.mxu0 0.0
    %2617 = vmatprep.subr.mxu0 0.0
    %2618 = vmatpush1.msra.mxu0 0.0
    %2619 = vmatprep.subr.mxu0 0.0
    %2620 = vmatpush1.msra.mxu0 0.0
    %2621 = vmatprep.subr.mxu0 0.0
    %2622 = vmatpush1.msra.mxu0 0.0
    %2623 = vmatprep.subr.mxu0 0.0
    %2624 = vmatpush1.msra.mxu0 0.0
    %2625 = vmatprep.subr.mxu0 0.0
    %2626 = vmatpush1.msra.mxu0 0.0
    %2627 = vmatprep.subr.mxu0 0.0
    %2628 = vmatpush1.msra.mxu0 0.0
    %2629 = vmatprep.subr.mxu0 0.0
    %2630 = vmatpush1.msra.mxu0 0.0
    %2631 = vmatprep.subr.mxu0 0.0
    %2632 = vmatpush1.msra.mxu0 0.0
    %2633 = vmatprep.subr.mxu0 0.0
    %2634 = vmatpush1.msra.mxu0 0.0
    %2635 = vmatprep.subr.mxu0 0.0
    %2636 = vmatpush1.msra.mxu0 0.0
    %2637 = vmatprep.subr.mxu0 0.0
    %2638 = vmatpush1.msra.mxu0 0.0
    %2639 = vmatprep.subr.mxu0 0.0
    %2640 = vmatpush1.msra.mxu0 0.0
    %2641 = vmatprep.subr.mxu0 0.0
    %2642 = vmatpush1.msra.mxu0 0.0
    %2643 = vmatprep.subr.mxu0 0.0
    %2644 = vmatpush1.msra.mxu0 0.0
    %2645 = vmatprep.subr.mxu0 0.0
    %2646 = vmatpush1.msra.mxu0 0.0
    %2647 = vmatprep.mubr.f32.mxu0 0.0
    %v2648 = vand.u32 %v2566, 4294901760
    %v2649 = vsub.f32 %v2566, %v2648
    %v2650 = vand.u32 %v2649, 4294901760
    %v2651 = vsub.f32 %v2649, %v2650
    %v2652 = vand.u32 %v2651, 4294901760
    %2653 = vmatmul.mubr.f32.gmra.mrb[0].mxu0 %v2652
    %v2654 = vpop.f32.mrb[0].mxu0
    %v2655 = vadd.f32 %v2563, %v2654
    %v2656 = vpop.f32.mrb[0].mxu0
    %2657 = vdwg.mxu0
    %2658 = vmatprep.subr.mxu0 0.0
    %v2659 = vand.u32 %v117, 4294901760
    %v2660 = vsub.f32 %v117, %v2659
    %v2661 = vand.u32 %v2660, 4294901760
    %v2662 = vsub.f32 %v2660, %v2661
    %v2663 = vand.u32 %v2662, 4294901760
    %2664 = vmatpush1.msra.mxu0 %v2663
    %2665 = vmatprep.subr.mxu0 0.0
    %v2666 = vand.u32 %v118, 4294901760
    %v2667 = vsub.f32 %v118, %v2666
    %v2668 = vand.u32 %v2667, 4294901760
    %v2669 = vsub.f32 %v2667, %v2668
    %v2670 = vand.u32 %v2669, 4294901760
    %2671 = vmatpush1.msra.mxu0 %v2670
    %2672 = vmatprep.subr.mxu0 0.0
    %v2673 = vand.u32 %v119, 4294901760
    %v2674 = vsub.f32 %v119, %v2673
    %v2675 = vand.u32 %v2674, 4294901760
    %v2676 = vsub.f32 %v2674, %v2675
    %v2677 = vand.u32 %v2676, 4294901760
    %2678 = vmatpush1.msra.mxu0 %v2677
    %2679 = vmatprep.subr.mxu0 0.0
    %v2680 = vand.u32 %v120, 4294901760
    %v2681 = vsub.f32 %v120, %v2680
    %v2682 = vand.u32 %v2681, 4294901760
    %v2683 = vsub.f32 %v2681, %v2682
    %v2684 = vand.u32 %v2683, 4294901760
    %2685 = vmatpush1.msra.mxu0 %v2684
    %2686 = vmatprep.subr.mxu0 0.0
    %v2687 = vand.u32 %v121, 4294901760
    %v2688 = vsub.f32 %v121, %v2687
    %v2689 = vand.u32 %v2688, 4294901760
    %v2690 = vsub.f32 %v2688, %v2689
    %v2691 = vand.u32 %v2690, 4294901760
    %2692 = vmatpush1.msra.mxu0 %v2691
    %2693 = vmatprep.subr.mxu0 0.0
    %v2694 = vand.u32 %v122, 4294901760
    %v2695 = vsub.f32 %v122, %v2694
    %v2696 = vand.u32 %v2695, 4294901760
    %v2697 = vsub.f32 %v2695, %v2696
    %v2698 = vand.u32 %v2697, 4294901760
    %2699 = vmatpush1.msra.mxu0 %v2698
    %2700 = vmatprep.subr.mxu0 0.0
    %v2701 = vand.u32 %v123, 4294901760
    %v2702 = vsub.f32 %v123, %v2701
    %v2703 = vand.u32 %v2702, 4294901760
    %v2704 = vsub.f32 %v2702, %v2703
    %v2705 = vand.u32 %v2704, 4294901760
    %2706 = vmatpush1.msra.mxu0 %v2705
    %2707 = vmatprep.subr.mxu0 0.0
    %v2708 = vand.u32 %v124, 4294901760
    %v2709 = vsub.f32 %v124, %v2708
    %v2710 = vand.u32 %v2709, 4294901760
    %v2711 = vsub.f32 %v2709, %v2710
    %v2712 = vand.u32 %v2711, 4294901760
    %2713 = vmatpush1.msra.mxu0 %v2712
    %2714 = vmatprep.subr.mxu0 0.0
    %v2715 = vand.u32 %v125, 4294901760
    %v2716 = vsub.f32 %v125, %v2715
    %v2717 = vand.u32 %v2716, 4294901760
    %v2718 = vsub.f32 %v2716, %v2717
    %v2719 = vand.u32 %v2718, 4294901760
    %2720 = vmatpush1.msra.mxu0 %v2719
    %2721 = vmatprep.subr.mxu0 0.0
    %v2722 = vand.u32 %v126, 4294901760
    %v2723 = vsub.f32 %v126, %v2722
    %v2724 = vand.u32 %v2723, 4294901760
    %v2725 = vsub.f32 %v2723, %v2724
    %v2726 = vand.u32 %v2725, 4294901760
    %2727 = vmatpush1.msra.mxu0 %v2726
    %2728 = vmatprep.subr.mxu0 0.0
    %v2729 = vand.u32 %v127, 4294901760
    %v2730 = vsub.f32 %v127, %v2729
    %v2731 = vand.u32 %v2730, 4294901760
    %v2732 = vsub.f32 %v2730, %v2731
    %v2733 = vand.u32 %v2732, 4294901760
    %2734 = vmatpush1.msra.mxu0 %v2733
    %2735 = vmatprep.subr.mxu0 0.0
    %v2736 = vand.u32 %v128, 4294901760
    %v2737 = vsub.f32 %v128, %v2736
    %v2738 = vand.u32 %v2737, 4294901760
    %v2739 = vsub.f32 %v2737, %v2738
    %v2740 = vand.u32 %v2739, 4294901760
    %2741 = vmatpush1.msra.mxu0 %v2740
    %2742 = vmatprep.subr.mxu0 0.0
    %v2743 = vand.u32 %v129, 4294901760
    %v2744 = vsub.f32 %v129, %v2743
    %v2745 = vand.u32 %v2744, 4294901760
    %v2746 = vsub.f32 %v2744, %v2745
    %v2747 = vand.u32 %v2746, 4294901760
    %2748 = vmatpush1.msra.mxu0 %v2747
    %2749 = vmatprep.subr.mxu0 0.0
    %v2750 = vand.u32 %v130, 4294901760
    %v2751 = vsub.f32 %v130, %v2750
    %v2752 = vand.u32 %v2751, 4294901760
    %v2753 = vsub.f32 %v2751, %v2752
    %v2754 = vand.u32 %v2753, 4294901760
    %2755 = vmatpush1.msra.mxu0 %v2754
    %2756 = vmatprep.subr.mxu0 0.0
    %v2757 = vand.u32 %v131, 4294901760
    %v2758 = vsub.f32 %v131, %v2757
    %v2759 = vand.u32 %v2758, 4294901760
    %v2760 = vsub.f32 %v2758, %v2759
    %v2761 = vand.u32 %v2760, 4294901760
    %2762 = vmatpush1.msra.mxu0 %v2761
    %2763 = vmatprep.subr.mxu0 0.0
    %2764 = vmatpush1.msra.mxu0 0.0
    %2765 = vmatprep.subr.mxu0 0.0
    %2766 = vmatpush1.msra.mxu0 0.0
    %2767 = vmatprep.subr.mxu0 0.0
    %2768 = vmatpush1.msra.mxu0 0.0
    %2769 = vmatprep.subr.mxu0 0.0
    %2770 = vmatpush1.msra.mxu0 0.0
    %2771 = vmatprep.subr.mxu0 0.0
    %2772 = vmatpush1.msra.mxu0 0.0
    %2773 = vmatprep.subr.mxu0 0.0
    %2774 = vmatpush1.msra.mxu0 0.0
    %2775 = vmatprep.subr.mxu0 0.0
    %2776 = vmatpush1.msra.mxu0 0.0
    %2777 = vmatprep.subr.mxu0 0.0
    %2778 = vmatpush1.msra.mxu0 0.0
    %2779 = vmatprep.subr.mxu0 0.0
    %2780 = vmatpush1.msra.mxu0 0.0
    %2781 = vmatprep.subr.mxu0 0.0
    %2782 = vmatpush1.msra.mxu0 0.0
    %2783 = vmatprep.subr.mxu0 0.0
    %2784 = vmatpush1.msra.mxu0 0.0
    %2785 = vmatprep.subr.mxu0 0.0
    %2786 = vmatpush1.msra.mxu0 0.0
    %2787 = vmatprep.subr.mxu0 0.0
    %2788 = vmatpush1.msra.mxu0 0.0
    %2789 = vmatprep.subr.mxu0 0.0
    %2790 = vmatpush1.msra.mxu0 0.0
    %2791 = vmatprep.subr.mxu0 0.0
    %2792 = vmatpush1.msra.mxu0 0.0
    %2793 = vmatprep.subr.mxu0 0.0
    %2794 = vmatpush1.msra.mxu0 0.0
    %2795 = vmatprep.subr.mxu0 0.0
    %2796 = vmatpush1.msra.mxu0 0.0
    %2797 = vmatprep.mubr.f32.mxu0 0.0
    %v2798 = vand.u32 %v2566, 4294901760
    %2799 = vmatmul.mubr.f32.gmra.mrb[0].mxu0 %v2798
    %v2800 = vpop.f32.mrb[0].mxu0
    %v2801 = vadd.f32 %v2655, %v2800
    %v2802 = vpop.f32.mrb[0].mxu0
    %2803 = vdwg.mxu0
    %2804 = vmatprep.subr.mxu0 0.0
    %v2805 = vand.u32 %v117, 4294901760
    %v2806 = vsub.f32 %v117, %v2805
    %2807 = vmatpush1.msra.mxu0 %v2806
    %2808 = vmatprep.subr.mxu0 0.0
    %v2809 = vand.u32 %v118, 4294901760
    %v2810 = vsub.f32 %v118, %v2809
    %2811 = vmatpush1.msra.mxu0 %v2810
    %2812 = vmatprep.subr.mxu0 0.0
    %v2813 = vand.u32 %v119, 4294901760
    %v2814 = vsub.f32 %v119, %v2813
    %2815 = vmatpush1.msra.mxu0 %v2814
    %2816 = vmatprep.subr.mxu0 0.0
    %v2817 = vand.u32 %v120, 4294901760
    %v2818 = vsub.f32 %v120, %v2817
    %2819 = vmatpush1.msra.mxu0 %v2818
    %2820 = vmatprep.subr.mxu0 0.0
    %v2821 = vand.u32 %v121, 4294901760
    %v2822 = vsub.f32 %v121, %v2821
    %2823 = vmatpush1.msra.mxu0 %v2822
    %2824 = vmatprep.subr.mxu0 0.0
    %v2825 = vand.u32 %v122, 4294901760
    %v2826 = vsub.f32 %v122, %v2825
    %2827 = vmatpush1.msra.mxu0 %v2826
    %2828 = vmatprep.subr.mxu0 0.0
    %v2829 = vand.u32 %v123, 4294901760
    %v2830 = vsub.f32 %v123, %v2829
    %2831 = vmatpush1.msra.mxu0 %v2830
    %2832 = vmatprep.subr.mxu0 0.0
    %v2833 = vand.u32 %v124, 4294901760
    %v2834 = vsub.f32 %v124, %v2833
    %2835 = vmatpush1.msra.mxu0 %v2834
    %2836 = vmatprep.subr.mxu0 0.0
    %v2837 = vand.u32 %v125, 4294901760
    %v2838 = vsub.f32 %v125, %v2837
    %2839 = vmatpush1.msra.mxu0 %v2838
    %2840 = vmatprep.subr.mxu0 0.0
    %v2841 = vand.u32 %v126, 4294901760
    %v2842 = vsub.f32 %v126, %v2841
    %2843 = vmatpush1.msra.mxu0 %v2842
    %2844 = vmatprep.subr.mxu0 0.0
    %v2845 = vand.u32 %v127, 4294901760
    %v2846 = vsub.f32 %v127, %v2845
    %2847 = vmatpush1.msra.mxu0 %v2846
    %2848 = vmatprep.subr.mxu0 0.0
    %v2849 = vand.u32 %v128, 4294901760
    %v2850 = vsub.f32 %v128, %v2849
    %2851 = vmatpush1.msra.mxu0 %v2850
    %2852 = vmatprep.subr.mxu0 0.0
    %v2853 = vand.u32 %v129, 4294901760
    %v2854 = vsub.f32 %v129, %v2853
    %2855 = vmatpush1.msra.mxu0 %v2854
    %2856 = vmatprep.subr.mxu0 0.0
    %v2857 = vand.u32 %v130, 4294901760
    %v2858 = vsub.f32 %v130, %v2857
    %2859 = vmatpush1.msra.mxu0 %v2858
    %2860 = vmatprep.subr.mxu0 0.0
    %v2861 = vand.u32 %v131, 4294901760
    %v2862 = vsub.f32 %v131, %v2861
    %2863 = vmatpush1.msra.mxu0 %v2862
    %2864 = vmatprep.subr.mxu0 0.0
    %2865 = vmatpush1.msra.mxu0 0.0
    %2866 = vmatprep.subr.mxu0 0.0
    %2867 = vmatpush1.msra.mxu0 0.0
    %2868 = vmatprep.subr.mxu0 0.0
    %2869 = vmatpush1.msra.mxu0 0.0
    %2870 = vmatprep.subr.mxu0 0.0
    %2871 = vmatpush1.msra.mxu0 0.0
    %2872 = vmatprep.subr.mxu0 0.0
    %2873 = vmatpush1.msra.mxu0 0.0
    %2874 = vmatprep.subr.mxu0 0.0
    %2875 = vmatpush1.msra.mxu0 0.0
    %2876 = vmatprep.subr.mxu0 0.0
    %2877 = vmatpush1.msra.mxu0 0.0
    %2878 = vmatprep.subr.mxu0 0.0
    %2879 = vmatpush1.msra.mxu0 0.0
    %2880 = vmatprep.subr.mxu0 0.0
    %2881 = vmatpush1.msra.mxu0 0.0
    %2882 = vmatprep.subr.mxu0 0.0
    %2883 = vmatpush1.msra.mxu0 0.0
    %2884 = vmatprep.subr.mxu0 0.0
    %2885 = vmatpush1.msra.mxu0 0.0
    %2886 = vmatprep.subr.mxu0 0.0
    %2887 = vmatpush1.msra.mxu0 0.0
    %2888 = vmatprep.subr.mxu0 0.0
    %2889 = vmatpush1.msra.mxu0 0.0
    %2890 = vmatprep.subr.mxu0 0.0
    %2891 = vmatpush1.msra.mxu0 0.0
    %2892 = vmatprep.subr.mxu0 0.0
    %2893 = vmatpush1.msra.mxu0 0.0
    %2894 = vmatprep.subr.mxu0 0.0
    %2895 = vmatpush1.msra.mxu0 0.0
    %2896 = vmatprep.subr.mxu0 0.0
    %2897 = vmatpush1.msra.mxu0 0.0
    %2898 = vmatprep.mubr.f32.mxu0 0.0
    %v2899 = vand.u32 %v2566, 4294901760
    %v2900 = vsub.f32 %v2566, %v2899
    %2901 = vmatmul.mubr.f32.gmra.mrb[0].mxu0 %v2900
    %v2902 = vpop.f32.mrb[0].mxu0
    %v2903 = vadd.f32 %v2801, %v2902
    %v2904 = vpop.f32.mrb[0].mxu0
    %2905 = vdwg.mxu0
    %2906 = vmatprep.subr.mxu0 0.0
    %v2907 = vand.u32 %v117, 4294901760
    %2908 = vmatpush1.msra.mxu0 %v2907
    %2909 = vmatprep.subr.mxu0 0.0
    %v2910 = vand.u32 %v118, 4294901760
    %2911 = vmatpush1.msra.mxu0 %v2910
    %2912 = vmatprep.subr.mxu0 0.0
    %v2913 = vand.u32 %v119, 4294901760
    %2914 = vmatpush1.msra.mxu0 %v2913
    %2915 = vmatprep.subr.mxu0 0.0
    %v2916 = vand.u32 %v120, 4294901760
    %2917 = vmatpush1.msra.mxu0 %v2916
    %2918 = vmatprep.subr.mxu0 0.0
    %v2919 = vand.u32 %v121, 4294901760
    %2920 = vmatpush1.msra.mxu0 %v2919
    %2921 = vmatprep.subr.mxu0 0.0
    %v2922 = vand.u32 %v122, 4294901760
    %2923 = vmatpush1.msra.mxu0 %v2922
    %2924 = vmatprep.subr.mxu0 0.0
    %v2925 = vand.u32 %v123, 4294901760
    %2926 = vmatpush1.msra.mxu0 %v2925
    %2927 = vmatprep.subr.mxu0 0.0
    %v2928 = vand.u32 %v124, 4294901760
    %2929 = vmatpush1.msra.mxu0 %v2928
    %2930 = vmatprep.subr.mxu0 0.0
    %v2931 = vand.u32 %v125, 4294901760
    %2932 = vmatpush1.msra.mxu0 %v2931
    %2933 = vmatprep.subr.mxu0 0.0
    %v2934 = vand.u32 %v126, 4294901760
    %2935 = vmatpush1.msra.mxu0 %v2934
    %2936 = vmatprep.subr.mxu0 0.0
    %v2937 = vand.u32 %v127, 4294901760
    %2938 = vmatpush1.msra.mxu0 %v2937
    %2939 = vmatprep.subr.mxu0 0.0
    %v2940 = vand.u32 %v128, 4294901760
    %2941 = vmatpush1.msra.mxu0 %v2940
    %2942 = vmatprep.subr.mxu0 0.0
    %v2943 = vand.u32 %v129, 4294901760
    %2944 = vmatpush1.msra.mxu0 %v2943
    %2945 = vmatprep.subr.mxu0 0.0
    %v2946 = vand.u32 %v130, 4294901760
    %2947 = vmatpush1.msra.mxu0 %v2946
    %2948 = vmatprep.subr.mxu0 0.0
    %v2949 = vand.u32 %v131, 4294901760
    %2950 = vmatpush1.msra.mxu0 %v2949
    %2951 = vmatprep.subr.mxu0 0.0
    %2952 = vmatpush1.msra.mxu0 0.0
    %2953 = vmatprep.subr.mxu0 0.0
    %2954 = vmatpush1.msra.mxu0 0.0
    %2955 = vmatprep.subr.mxu0 0.0
    %2956 = vmatpush1.msra.mxu0 0.0
    %2957 = vmatprep.subr.mxu0 0.0
    %2958 = vmatpush1.msra.mxu0 0.0
    %2959 = vmatprep.subr.mxu0 0.0
    %2960 = vmatpush1.msra.mxu0 0.0
    %2961 = vmatprep.subr.mxu0 0.0
    %2962 = vmatpush1.msra.mxu0 0.0
    %2963 = vmatprep.subr.mxu0 0.0
    %2964 = vmatpush1.msra.mxu0 0.0
    %2965 = vmatprep.subr.mxu0 0.0
    %2966 = vmatpush1.msra.mxu0 0.0
    %2967 = vmatprep.subr.mxu0 0.0
    %2968 = vmatpush1.msra.mxu0 0.0
    %2969 = vmatprep.subr.mxu0 0.0
    %2970 = vmatpush1.msra.mxu0 0.0
    %2971 = vmatprep.subr.mxu0 0.0
    %2972 = vmatpush1.msra.mxu0 0.0
    %2973 = vmatprep.subr.mxu0 0.0
    %2974 = vmatpush1.msra.mxu0 0.0
    %2975 = vmatprep.subr.mxu0 0.0
    %2976 = vmatpush1.msra.mxu0 0.0
    %2977 = vmatprep.subr.mxu0 0.0
    %2978 = vmatpush1.msra.mxu0 0.0
    %2979 = vmatprep.subr.mxu0 0.0
    %2980 = vmatpush1.msra.mxu0 0.0
    %2981 = vmatprep.subr.mxu0 0.0
    %2982 = vmatpush1.msra.mxu0 0.0
    %2983 = vmatprep.subr.mxu0 0.0
    %2984 = vmatpush1.msra.mxu0 0.0
    %2985 = vmatprep.mubr.f32.mxu0 0.0
    %v2986 = vand.u32 %v2566, 4294901760
    %v2987 = vsub.f32 %v2566, %v2986
    %v2988 = vand.u32 %v2987, 4294901760
    %2989 = vmatmul.mubr.f32.gmra.mrb[0].mxu0 %v2988
    %v2990 = vpop.f32.mrb[0].mxu0
    %v2991 = vadd.f32 %v2903, %v2990
    %v2992 = vpop.f32.mrb[0].mxu0
    %2993 = vdwg.mxu0
    %2994 = vmatprep.subr.mxu0 0.0
    %v2995 = vand.u32 %v117, 4294901760
    %v2996 = vsub.f32 %v117, %v2995
    %v2997 = vand.u32 %v2996, 4294901760
    %2998 = vmatpush1.msra.mxu0 %v2997
    %2999 = vmatprep.subr.mxu0 0.0
    %v3000 = vand.u32 %v118, 4294901760
    %v3001 = vsub.f32 %v118, %v3000
    %v3002 = vand.u32 %v3001, 4294901760
    %3003 = vmatpush1.msra.mxu0 %v3002
    %3004 = vmatprep.subr.mxu0 0.0
    %v3005 = vand.u32 %v119, 4294901760
    %v3006 = vsub.f32 %v119, %v3005
    %v3007 = vand.u32 %v3006, 4294901760
    %3008 = vmatpush1.msra.mxu0 %v3007
    %3009 = vmatprep.subr.mxu0 0.0
    %v3010 = vand.u32 %v120, 4294901760
    %v3011 = vsub.f32 %v120, %v3010
    %v3012 = vand.u32 %v3011, 4294901760
    %3013 = vmatpush1.msra.mxu0 %v3012
    %3014 = vmatprep.subr.mxu0 0.0
    %v3015 = vand.u32 %v121, 4294901760
    %v3016 = vsub.f32 %v121, %v3015
    %v3017 = vand.u32 %v3016, 4294901760
    %3018 = vmatpush1.msra.mxu0 %v3017
    %3019 = vmatprep.subr.mxu0 0.0
    %v3020 = vand.u32 %v122, 4294901760
    %v3021 = vsub.f32 %v122, %v3020
    %v3022 = vand.u32 %v3021, 4294901760
    %3023 = vmatpush1.msra.mxu0 %v3022
    %3024 = vmatprep.subr.mxu0 0.0
    %v3025 = vand.u32 %v123, 4294901760
    %v3026 = vsub.f32 %v123, %v3025
    %v3027 = vand.u32 %v3026, 4294901760
    %3028 = vmatpush1.msra.mxu0 %v3027
    %3029 = vmatprep.subr.mxu0 0.0
    %v3030 = vand.u32 %v124, 4294901760
    %v3031 = vsub.f32 %v124, %v3030
    %v3032 = vand.u32 %v3031, 4294901760
    %3033 = vmatpush1.msra.mxu0 %v3032
    %3034 = vmatprep.subr.mxu0 0.0
    %v3035 = vand.u32 %v125, 4294901760
    %v3036 = vsub.f32 %v125, %v3035
    %v3037 = vand.u32 %v3036, 4294901760
    %3038 = vmatpush1.msra.mxu0 %v3037
    %3039 = vmatprep.subr.mxu0 0.0
    %v3040 = vand.u32 %v126, 4294901760
    %v3041 = vsub.f32 %v126, %v3040
    %v3042 = vand.u32 %v3041, 4294901760
    %3043 = vmatpush1.msra.mxu0 %v3042
    %3044 = vmatprep.subr.mxu0 0.0
    %v3045 = vand.u32 %v127, 4294901760
    %v3046 = vsub.f32 %v127, %v3045
    %v3047 = vand.u32 %v3046, 4294901760
    %3048 = vmatpush1.msra.mxu0 %v3047
    %3049 = vmatprep.subr.mxu0 0.0
    %v3050 = vand.u32 %v128, 4294901760
    %v3051 = vsub.f32 %v128, %v3050
    %v3052 = vand.u32 %v3051, 4294901760
    %3053 = vmatpush1.msra.mxu0 %v3052
    %3054 = vmatprep.subr.mxu0 0.0
    %v3055 = vand.u32 %v129, 4294901760
    %v3056 = vsub.f32 %v129, %v3055
    %v3057 = vand.u32 %v3056, 4294901760
    %3058 = vmatpush1.msra.mxu0 %v3057
    %3059 = vmatprep.subr.mxu0 0.0
    %v3060 = vand.u32 %v130, 4294901760
    %v3061 = vsub.f32 %v130, %v3060
    %v3062 = vand.u32 %v3061, 4294901760
    %3063 = vmatpush1.msra.mxu0 %v3062
    %3064 = vmatprep.subr.mxu0 0.0
    %v3065 = vand.u32 %v131, 4294901760
    %v3066 = vsub.f32 %v131, %v3065
    %v3067 = vand.u32 %v3066, 4294901760
    %3068 = vmatpush1.msra.mxu0 %v3067
    %3069 = vmatprep.subr.mxu0 0.0
    %3070 = vmatpush1.msra.mxu0 0.0
    %3071 = vmatprep.subr.mxu0 0.0
    %3072 = vmatpush1.msra.mxu0 0.0
    %3073 = vmatprep.subr.mxu0 0.0
    %3074 = vmatpush1.msra.mxu0 0.0
    %3075 = vmatprep.subr.mxu0 0.0
    %3076 = vmatpush1.msra.mxu0 0.0
    %3077 = vmatprep.subr.mxu0 0.0
    %3078 = vmatpush1.msra.mxu0 0.0
    %3079 = vmatprep.subr.mxu0 0.0
    %3080 = vmatpush1.msra.mxu0 0.0
    %3081 = vmatprep.subr.mxu0 0.0
    %3082 = vmatpush1.msra.mxu0 0.0
    %3083 = vmatprep.subr.mxu0 0.0
    %3084 = vmatpush1.msra.mxu0 0.0
    %3085 = vmatprep.subr.mxu0 0.0
    %3086 = vmatpush1.msra.mxu0 0.0
    %3087 = vmatprep.subr.mxu0 0.0
    %3088 = vmatpush1.msra.mxu0 0.0
    %3089 = vmatprep.subr.mxu0 0.0
    %3090 = vmatpush1.msra.mxu0 0.0
    %3091 = vmatprep.subr.mxu0 0.0
    %3092 = vmatpush1.msra.mxu0 0.0
    %3093 = vmatprep.subr.mxu0 0.0
    %3094 = vmatpush1.msra.mxu0 0.0
    %3095 = vmatprep.subr.mxu0 0.0
    %3096 = vmatpush1.msra.mxu0 0.0
    %3097 = vmatprep.subr.mxu0 0.0
    %3098 = vmatpush1.msra.mxu0 0.0
    %3099 = vmatprep.subr.mxu0 0.0
    %3100 = vmatpush1.msra.mxu0 0.0
    %3101 = vmatprep.subr.mxu0 0.0
    %3102 = vmatpush1.msra.mxu0 0.0
    %3103 = vmatprep.mubr.f32.mxu0 0.0
    %v3104 = vand.u32 %v2566, 4294901760
    %3105 = vmatmul.mubr.f32.gmra.mrb[0].mxu0 %v3104
    %v3106 = vpop.f32.mrb[0].mxu0
    %v3107 = vadd.f32 %v2991, %v3106
    %v3108 = vpop.f32.mrb[0].mxu0
    %3109 = vdwg.mxu0
    %3110 = vmatprep.subr.mxu0 0.0
    %v3111 = vand.u32 %v117, 4294901760
    %3112 = vmatpush1.msra.mxu0 %v3111
    %3113 = vmatprep.subr.mxu0 0.0
    %v3114 = vand.u32 %v118, 4294901760
    %3115 = vmatpush1.msra.mxu0 %v3114
    %3116 = vmatprep.subr.mxu0 0.0
    %v3117 = vand.u32 %v119, 4294901760
    %3118 = vmatpush1.msra.mxu0 %v3117
    %3119 = vmatprep.subr.mxu0 0.0
    %v3120 = vand.u32 %v120, 4294901760
    %3121 = vmatpush1.msra.mxu0 %v3120
    %3122 = vmatprep.subr.mxu0 0.0
    %v3123 = vand.u32 %v121, 4294901760
    %3124 = vmatpush1.msra.mxu0 %v3123
    %3125 = vmatprep.subr.mxu0 0.0
    %v3126 = vand.u32 %v122, 4294901760
    %3127 = vmatpush1.msra.mxu0 %v3126
    %3128 = vmatprep.subr.mxu0 0.0
    %v3129 = vand.u32 %v123, 4294901760
    %3130 = vmatpush1.msra.mxu0 %v3129
    %3131 = vmatprep.subr.mxu0 0.0
    %v3132 = vand.u32 %v124, 4294901760
    %3133 = vmatpush1.msra.mxu0 %v3132
    %3134 = vmatprep.subr.mxu0 0.0
    %v3135 = vand.u32 %v125, 4294901760
    %3136 = vmatpush1.msra.mxu0 %v3135
    %3137 = vmatprep.subr.mxu0 0.0
    %v3138 = vand.u32 %v126, 4294901760
    %3139 = vmatpush1.msra.mxu0 %v3138
    %3140 = vmatprep.subr.mxu0 0.0
    %v3141 = vand.u32 %v127, 4294901760
    %3142 = vmatpush1.msra.mxu0 %v3141
    %3143 = vmatprep.subr.mxu0 0.0
    %v3144 = vand.u32 %v128, 4294901760
    %3145 = vmatpush1.msra.mxu0 %v3144
    %3146 = vmatprep.subr.mxu0 0.0
    %v3147 = vand.u32 %v129, 4294901760
    %3148 = vmatpush1.msra.mxu0 %v3147
    %3149 = vmatprep.subr.mxu0 0.0
    %v3150 = vand.u32 %v130, 4294901760
    %3151 = vmatpush1.msra.mxu0 %v3150
    %3152 = vmatprep.subr.mxu0 0.0
    %v3153 = vand.u32 %v131, 4294901760
    %3154 = vmatpush1.msra.mxu0 %v3153
    %3155 = vmatprep.subr.mxu0 0.0
    %3156 = vmatpush1.msra.mxu0 0.0
    %3157 = vmatprep.subr.mxu0 0.0
    %3158 = vmatpush1.msra.mxu0 0.0
    %3159 = vmatprep.subr.mxu0 0.0
    %3160 = vmatpush1.msra.mxu0 0.0
    %3161 = vmatprep.subr.mxu0 0.0
    %3162 = vmatpush1.msra.mxu0 0.0
    %3163 = vmatprep.subr.mxu0 0.0
    %3164 = vmatpush1.msra.mxu0 0.0
    %3165 = vmatprep.subr.mxu0 0.0
    %3166 = vmatpush1.msra.mxu0 0.0
    %3167 = vmatprep.subr.mxu0 0.0
    %3168 = vmatpush1.msra.mxu0 0.0
    %3169 = vmatprep.subr.mxu0 0.0
    %3170 = vmatpush1.msra.mxu0 0.0
    %3171 = vmatprep.subr.mxu0 0.0
    %3172 = vmatpush1.msra.mxu0 0.0
    %3173 = vmatprep.subr.mxu0 0.0
    %3174 = vmatpush1.msra.mxu0 0.0
    %3175 = vmatprep.subr.mxu0 0.0
    %3176 = vmatpush1.msra.mxu0 0.0
    %3177 = vmatprep.subr.mxu0 0.0
    %3178 = vmatpush1.msra.mxu0 0.0
    %3179 = vmatprep.subr.mxu0 0.0
    %3180 = vmatpush1.msra.mxu0 0.0
    %3181 = vmatprep.subr.mxu0 0.0
    %3182 = vmatpush1.msra.mxu0 0.0
    %3183 = vmatprep.subr.mxu0 0.0
    %3184 = vmatpush1.msra.mxu0 0.0
    %3185 = vmatprep.subr.mxu0 0.0
    %3186 = vmatpush1.msra.mxu0 0.0
    %3187 = vmatprep.subr.mxu0 0.0
    %3188 = vmatpush1.msra.mxu0 0.0
    %3189 = vmatprep.mubr.f32.mxu0 0.0
    %v3190 = vand.u32 %v2566, 4294901760
    %3191 = vmatmul.mubr.f32.gmra.mrb[0].mxu0 %v3190
    %v3192 = vpop.f32.mrb[0].mxu0
    %v3193 = vadd.f32 %v3107, %v3192
    %v3194 = vpop.f32.mrb[0].mxu0
    %3195 = vdwg.mxu0
    %v3196 = vtanh.pop %v3193
    %v3198 = vlaneseq
    %v3199 = vshrl.u32 %v3198, 7
    %v3200 = vsub.s32 0, %v3199
    %v3201 = vrot.slane %v142, %v3200
    %3202 = vset.pattern.permute.xlu0 0
    %3203 = vperm.xlu0 %3202, %v3201
    %v3204 = vpop.permute.xlu0 %3203
    %v3207 = vsel %vm650, %v141, 0
    %v3210 = vsel %vm650, %v3196, 0
    %3212 = vmatprep.subr.mxu0 0.0
    %v3213 = vand.u32 %v3210, 4294901760
    %3214 = vmatpush1.xpose.msra.mxu0 %v3213
    %3215 = vmatprep.subr.mxu0 0.0
    %3216 = vmatpush1.xpose.msra.mxu0 0.0
    %3217 = vmatprep.subr.mxu0 0.0
    %3218 = vmatpush1.xpose.msra.mxu0 0.0
    %3219 = vmatprep.subr.mxu0 0.0
    %3220 = vmatpush1.xpose.msra.mxu0 0.0
    %3221 = vmatprep.subr.mxu0 0.0
    %3222 = vmatpush1.xpose.msra.mxu0 0.0
    %3223 = vmatprep.subr.mxu0 0.0
    %3224 = vmatpush1.xpose.msra.mxu0 0.0
    %3225 = vmatprep.subr.mxu0 0.0
    %3226 = vmatpush1.xpose.msra.mxu0 0.0
    %3227 = vmatprep.subr.mxu0 0.0
    %3228 = vmatpush1.xpose.msra.mxu0 0.0
    %3229 = vmatprep.subr.mxu0 0.0
    %3230 = vmatpush1.xpose.msra.mxu0 0.0
    %3231 = vmatprep.subr.mxu0 0.0
    %3232 = vmatpush1.xpose.msra.mxu0 0.0
    %3233 = vmatprep.subr.mxu0 0.0
    %3234 = vmatpush1.xpose.msra.mxu0 0.0
    %3235 = vmatprep.subr.mxu0 0.0
    %3236 = vmatpush1.xpose.msra.mxu0 0.0
    %3237 = vmatprep.subr.mxu0 0.0
    %3238 = vmatpush1.xpose.msra.mxu0 0.0
    %3239 = vmatprep.subr.mxu0 0.0
    %3240 = vmatpush1.xpose.msra.mxu0 0.0
    %3241 = vmatprep.subr.mxu0 0.0
    %3242 = vmatpush1.xpose.msra.mxu0 0.0
    %3243 = vmatprep.subr.mxu0 0.0
    %3244 = vmatpush1.xpose.msra.mxu0 0.0
    %3245 = vmatprep.subr.mxu0 0.0
    %3246 = vmatpush1.xpose.msra.mxu0 0.0
    %3247 = vmatprep.subr.mxu0 0.0
    %3248 = vmatpush1.xpose.msra.mxu0 0.0
    %3249 = vmatprep.subr.mxu0 0.0
    %3250 = vmatpush1.xpose.msra.mxu0 0.0
    %3251 = vmatprep.subr.mxu0 0.0
    %3252 = vmatpush1.xpose.msra.mxu0 0.0
    %3253 = vmatprep.subr.mxu0 0.0
    %3254 = vmatpush1.xpose.msra.mxu0 0.0
    %3255 = vmatprep.subr.mxu0 0.0
    %3256 = vmatpush1.xpose.msra.mxu0 0.0
    %3257 = vmatprep.subr.mxu0 0.0
    %3258 = vmatpush1.xpose.msra.mxu0 0.0
    %3259 = vmatprep.subr.mxu0 0.0
    %3260 = vmatpush1.xpose.msra.mxu0 0.0
    %3261 = vmatprep.subr.mxu0 0.0
    %3262 = vmatpush1.xpose.msra.mxu0 0.0
    %3263 = vmatprep.subr.mxu0 0.0
    %3264 = vmatpush1.xpose.msra.mxu0 0.0
    %3265 = vmatprep.subr.mxu0 0.0
    %3266 = vmatpush1.xpose.msra.mxu0 0.0
    %3267 = vmatprep.subr.mxu0 0.0
    %3268 = vmatpush1.xpose.msra.mxu0 0.0
    %3269 = vmatprep.subr.mxu0 0.0
    %3270 = vmatpush1.xpose.msra.mxu0 0.0
    %3271 = vmatprep.subr.mxu0 0.0
    %3272 = vmatpush1.xpose.msra.mxu0 0.0
    %3273 = vmatprep.subr.mxu0 0.0
    %3274 = vmatpush1.xpose.msra.mxu0 0.0
    %3275 = vmatprep.subr.mxu0 0.0
    %3276 = vmatpush1.xpose.msra.mxu0 0.0
    %3277 = vmatprep.mubr.f32.mxu0 0.0
    %v3278 = vand.u32 %v3207, 4294901760
    %v3279 = vsub.f32 %v3207, %v3278
    %v3280 = vand.u32 %v3279, 4294901760
    %v3281 = vsub.f32 %v3279, %v3280
    %v3282 = vand.u32 %v3281, 4294901760
    %3283 = vmatmul.mubr.f32.gmra.mrb[0].mxu0 %v3282
    %v3284 = vpop.f32.mrb[0].mxu0
    %v3285 = vadd.f32 %v3204, %v3284
    %v3286 = vpop.f32.mrb[0].mxu0
    %3287 = vdwg.mxu0
    %3288 = vmatprep.subr.mxu0 0.0
    %v3289 = vand.u32 %v3210, 4294901760
    %v3290 = vsub.f32 %v3210, %v3289
    %v3291 = vand.u32 %v3290, 4294901760
    %v3292 = vsub.f32 %v3290, %v3291
    %v3293 = vand.u32 %v3292, 4294901760
    %3294 = vmatpush1.xpose.msra.mxu0 %v3293
    %3295 = vmatprep.subr.mxu0 0.0
    %3296 = vmatpush1.xpose.msra.mxu0 0.0
    %3297 = vmatprep.subr.mxu0 0.0
    %3298 = vmatpush1.xpose.msra.mxu0 0.0
    %3299 = vmatprep.subr.mxu0 0.0
    %3300 = vmatpush1.xpose.msra.mxu0 0.0
    %3301 = vmatprep.subr.mxu0 0.0
    %3302 = vmatpush1.xpose.msra.mxu0 0.0
    %3303 = vmatprep.subr.mxu0 0.0
    %3304 = vmatpush1.xpose.msra.mxu0 0.0
    %3305 = vmatprep.subr.mxu0 0.0
    %3306 = vmatpush1.xpose.msra.mxu0 0.0
    %3307 = vmatprep.subr.mxu0 0.0
    %3308 = vmatpush1.xpose.msra.mxu0 0.0
    %3309 = vmatprep.subr.mxu0 0.0
    %3310 = vmatpush1.xpose.msra.mxu0 0.0
    %3311 = vmatprep.subr.mxu0 0.0
    %3312 = vmatpush1.xpose.msra.mxu0 0.0
    %3313 = vmatprep.subr.mxu0 0.0
    %3314 = vmatpush1.xpose.msra.mxu0 0.0
    %3315 = vmatprep.subr.mxu0 0.0
    %3316 = vmatpush1.xpose.msra.mxu0 0.0
    %3317 = vmatprep.subr.mxu0 0.0
    %3318 = vmatpush1.xpose.msra.mxu0 0.0
    %3319 = vmatprep.subr.mxu0 0.0
    %3320 = vmatpush1.xpose.msra.mxu0 0.0
    %3321 = vmatprep.subr.mxu0 0.0
    %3322 = vmatpush1.xpose.msra.mxu0 0.0
    %3323 = vmatprep.subr.mxu0 0.0
    %3324 = vmatpush1.xpose.msra.mxu0 0.0
    %3325 = vmatprep.subr.mxu0 0.0
    %3326 = vmatpush1.xpose.msra.mxu0 0.0
    %3327 = vmatprep.subr.mxu0 0.0
    %3328 = vmatpush1.xpose.msra.mxu0 0.0
    %3329 = vmatprep.subr.mxu0 0.0
    %3330 = vmatpush1.xpose.msra.mxu0 0.0
    %3331 = vmatprep.subr.mxu0 0.0
    %3332 = vmatpush1.xpose.msra.mxu0 0.0
    %3333 = vmatprep.subr.mxu0 0.0
    %3334 = vmatpush1.xpose.msra.mxu0 0.0
    %3335 = vmatprep.subr.mxu0 0.0
    %3336 = vmatpush1.xpose.msra.mxu0 0.0
    %3337 = vmatprep.subr.mxu0 0.0
    %3338 = vmatpush1.xpose.msra.mxu0 0.0
    %3339 = vmatprep.subr.mxu0 0.0
    %3340 = vmatpush1.xpose.msra.mxu0 0.0
    %3341 = vmatprep.subr.mxu0 0.0
    %3342 = vmatpush1.xpose.msra.mxu0 0.0
    %3343 = vmatprep.subr.mxu0 0.0
    %3344 = vmatpush1.xpose.msra.mxu0 0.0
    %3345 = vmatprep.subr.mxu0 0.0
    %3346 = vmatpush1.xpose.msra.mxu0 0.0
    %3347 = vmatprep.subr.mxu0 0.0
    %3348 = vmatpush1.xpose.msra.mxu0 0.0
    %3349 = vmatprep.subr.mxu0 0.0
    %3350 = vmatpush1.xpose.msra.mxu0 0.0
    %3351 = vmatprep.subr.mxu0 0.0
    %3352 = vmatpush1.xpose.msra.mxu0 0.0
    %3353 = vmatprep.subr.mxu0 0.0
    %3354 = vmatpush1.xpose.msra.mxu0 0.0
    %3355 = vmatprep.subr.mxu0 0.0
    %3356 = vmatpush1.xpose.msra.mxu0 0.0
    %3357 = vmatprep.mubr.f32.mxu0 0.0
    %v3358 = vand.u32 %v3207, 4294901760
    %3359 = vmatmul.mubr.f32.gmra.mrb[0].mxu0 %v3358
    %v3360 = vpop.f32.mrb[0].mxu0
    %v3361 = vadd.f32 %v3285, %v3360
    %v3362 = vpop.f32.mrb[0].mxu0
    %3363 = vdwg.mxu0
    %3364 = vmatprep.subr.mxu0 0.0
    %v3365 = vand.u32 %v3210, 4294901760
    %v3366 = vsub.f32 %v3210, %v3365
    %3367 = vmatpush1.xpose.msra.mxu0 %v3366
    %3368 = vmatprep.subr.mxu0 0.0
    %3369 = vmatpush1.xpose.msra.mxu0 0.0
    %3370 = vmatprep.subr.mxu0 0.0
    %3371 = vmatpush1.xpose.msra.mxu0 0.0
    %3372 = vmatprep.subr.mxu0 0.0
    %3373 = vmatpush1.xpose.msra.mxu0 0.0
    %3374 = vmatprep.subr.mxu0 0.0
    %3375 = vmatpush1.xpose.msra.mxu0 0.0
    %3376 = vmatprep.subr.mxu0 0.0
    %3377 = vmatpush1.xpose.msra.mxu0 0.0
    %3378 = vmatprep.subr.mxu0 0.0
    %3379 = vmatpush1.xpose.msra.mxu0 0.0
    %3380 = vmatprep.subr.mxu0 0.0
    %3381 = vmatpush1.xpose.msra.mxu0 0.0
    %3382 = vmatprep.subr.mxu0 0.0
    %3383 = vmatpush1.xpose.msra.mxu0 0.0
    %3384 = vmatprep.subr.mxu0 0.0
    %3385 = vmatpush1.xpose.msra.mxu0 0.0
    %3386 = vmatprep.subr.mxu0 0.0
    %3387 = vmatpush1.xpose.msra.mxu0 0.0
    %3388 = vmatprep.subr.mxu0 0.0
    %3389 = vmatpush1.xpose.msra.mxu0 0.0
    %3390 = vmatprep.subr.mxu0 0.0
    %3391 = vmatpush1.xpose.msra.mxu0 0.0
    %3392 = vmatprep.subr.mxu0 0.0
    %3393 = vmatpush1.xpose.msra.mxu0 0.0
    %3394 = vmatprep.subr.mxu0 0.0
    %3395 = vmatpush1.xpose.msra.mxu0 0.0
    %3396 = vmatprep.subr.mxu0 0.0
    %3397 = vmatpush1.xpose.msra.mxu0 0.0
    %3398 = vmatprep.subr.mxu0 0.0
    %3399 = vmatpush1.xpose.msra.mxu0 0.0
    %3400 = vmatprep.subr.mxu0 0.0
    %3401 = vmatpush1.xpose.msra.mxu0 0.0
    %3402 = vmatprep.subr.mxu0 0.0
    %3403 = vmatpush1.xpose.msra.mxu0 0.0
    %3404 = vmatprep.subr.mxu0 0.0
    %3405 = vmatpush1.xpose.msra.mxu0 0.0
    %3406 = vmatprep.subr.mxu0 0.0
    %3407 = vmatpush1.xpose.msra.mxu0 0.0
    %3408 = vmatprep.subr.mxu0 0.0
    %3409 = vmatpush1.xpose.msra.mxu0 0.0
    %3410 = vmatprep.subr.mxu0 0.0
    %3411 = vmatpush1.xpose.msra.mxu0 0.0
    %3412 = vmatprep.subr.mxu0 0.0
    %3413 = vmatpush1.xpose.msra.mxu0 0.0
    %3414 = vmatprep.subr.mxu0 0.0
    %3415 = vmatpush1.xpose.msra.mxu0 0.0
    %3416 = vmatprep.subr.mxu0 0.0
    %3417 = vmatpush1.xpose.msra.mxu0 0.0
    %3418 = vmatprep.subr.mxu0 0.0
    %3419 = vmatpush1.xpose.msra.mxu0 0.0
    %3420 = vmatprep.subr.mxu0 0.0
    %3421 = vmatpush1.xpose.msra.mxu0 0.0
    %3422 = vmatprep.subr.mxu0 0.0
    %3423 = vmatpush1.xpose.msra.mxu0 0.0
    %3424 = vmatprep.subr.mxu0 0.0
    %3425 = vmatpush1.xpose.msra.mxu0 0.0
    %3426 = vmatprep.subr.mxu0 0.0
    %3427 = vmatpush1.xpose.msra.mxu0 0.0
    %3428 = vmatprep.subr.mxu0 0.0
    %3429 = vmatpush1.xpose.msra.mxu0 0.0
    %3430 = vmatprep.mubr.f32.mxu0 0.0
    %v3431 = vand.u32 %v3207, 4294901760
    %v3432 = vsub.f32 %v3207, %v3431
    %3433 = vmatmul.mubr.f32.gmra.mrb[0].mxu0 %v3432
    %v3434 = vpop.f32.mrb[0].mxu0
    %v3435 = vadd.f32 %v3361, %v3434
    %v3436 = vpop.f32.mrb[0].mxu0
    %3437 = vdwg.mxu0
    %3438 = vmatprep.subr.mxu0 0.0
    %v3439 = vand.u32 %v3210, 4294901760
    %3440 = vmatpush1.xpose.msra.mxu0 %v3439
    %3441 = vmatprep.subr.mxu0 0.0
    %3442 = vmatpush1.xpose.msra.mxu0 0.0
    %3443 = vmatprep.subr.mxu0 0.0
    %3444 = vmatpush1.xpose.msra.mxu0 0.0
    %3445 = vmatprep.subr.mxu0 0.0
    %3446 = vmatpush1.xpose.msra.mxu0 0.0
    %3447 = vmatprep.subr.mxu0 0.0
    %3448 = vmatpush1.xpose.msra.mxu0 0.0
    %3449 = vmatprep.subr.mxu0 0.0
    %3450 = vmatpush1.xpose.msra.mxu0 0.0
    %3451 = vmatprep.subr.mxu0 0.0
    %3452 = vmatpush1.xpose.msra.mxu0 0.0
    %3453 = vmatprep.subr.mxu0 0.0
    %3454 = vmatpush1.xpose.msra.mxu0 0.0
    %3455 = vmatprep.subr.mxu0 0.0
    %3456 = vmatpush1.xpose.msra.mxu0 0.0
    %3457 = vmatprep.subr.mxu0 0.0
    %3458 = vmatpush1.xpose.msra.mxu0 0.0
    %3459 = vmatprep.subr.mxu0 0.0
    %3460 = vmatpush1.xpose.msra.mxu0 0.0
    %3461 = vmatprep.subr.mxu0 0.0
    %3462 = vmatpush1.xpose.msra.mxu0 0.0
    %3463 = vmatprep.subr.mxu0 0.0
    %3464 = vmatpush1.xpose.msra.mxu0 0.0
    %3465 = vmatprep.subr.mxu0 0.0
    %3466 = vmatpush1.xpose.msra.mxu0 0.0
    %3467 = vmatprep.subr.mxu0 0.0
    %3468 = vmatpush1.xpose.msra.mxu0 0.0
    %3469 = vmatprep.subr.mxu0 0.0
    %3470 = vmatpush1.xpose.msra.mxu0 0.0
    %3471 = vmatprep.subr.mxu0 0.0
    %3472 = vmatpush1.xpose.msra.mxu0 0.0
    %3473 = vmatprep.subr.mxu0 0.0
    %3474 = vmatpush1.xpose.msra.mxu0 0.0
    %3475 = vmatprep.subr.mxu0 0.0
    %3476 = vmatpush1.xpose.msra.mxu0 0.0
    %3477 = vmatprep.subr.mxu0 0.0
    %3478 = vmatpush1.xpose.msra.mxu0 0.0
    %3479 = vmatprep.subr.mxu0 0.0
    %3480 = vmatpush1.xpose.msra.mxu0 0.0
    %3481 = vmatprep.subr.mxu0 0.0
    %3482 = vmatpush1.xpose.msra.mxu0 0.0
    %3483 = vmatprep.subr.mxu0 0.0
    %3484 = vmatpush1.xpose.msra.mxu0 0.0
    %3485 = vmatprep.subr.mxu0 0.0
    %3486 = vmatpush1.xpose.msra.mxu0 0.0
    %3487 = vmatprep.subr.mxu0 0.0
    %3488 = vmatpush1.xpose.msra.mxu0 0.0
    %3489 = vmatprep.subr.mxu0 0.0
    %3490 = vmatpush1.xpose.msra.mxu0 0.0
    %3491 = vmatprep.subr.mxu0 0.0
    %3492 = vmatpush1.xpose.msra.mxu0 0.0
    %3493 = vmatprep.subr.mxu0 0.0
    %3494 = vmatpush1.xpose.msra.mxu0 0.0
    %3495 = vmatprep.subr.mxu0 0.0
    %3496 = vmatpush1.xpose.msra.mxu0 0.0
    %3497 = vmatprep.subr.mxu0 0.0
    %3498 = vmatpush1.xpose.msra.mxu0 0.0
    %3499 = vmatprep.subr.mxu0 0.0
    %3500 = vmatpush1.xpose.msra.mxu0 0.0
    %3501 = vmatprep.subr.mxu0 0.0
    %3502 = vmatpush1.xpose.msra.mxu0 0.0
    %3503 = vmatprep.mubr.f32.mxu0 0.0
    %v3504 = vand.u32 %v3207, 4294901760
    %v3505 = vsub.f32 %v3207, %v3504
    %v3506 = vand.u32 %v3505, 4294901760
    %3507 = vmatmul.mubr.f32.gmra.mrb[0].mxu0 %v3506
    %v3508 = vpop.f32.mrb[0].mxu0
    %v3509 = vadd.f32 %v3435, %v3508
    %v3510 = vpop.f32.mrb[0].mxu0
    %3511 = vdwg.mxu0
    %3512 = vmatprep.subr.mxu0 0.0
    %v3513 = vand.u32 %v3210, 4294901760
    %v3514 = vsub.f32 %v3210, %v3513
    %v3515 = vand.u32 %v3514, 4294901760
    %3516 = vmatpush1.xpose.msra.mxu0 %v3515
    %3517 = vmatprep.subr.mxu0 0.0
    %3518 = vmatpush1.xpose.msra.mxu0 0.0
    %3519 = vmatprep.subr.mxu0 0.0
    %3520 = vmatpush1.xpose.msra.mxu0 0.0
    %3521 = vmatprep.subr.mxu0 0.0
    %3522 = vmatpush1.xpose.msra.mxu0 0.0
    %3523 = vmatprep.subr.mxu0 0.0
    %3524 = vmatpush1.xpose.msra.mxu0 0.0
    %3525 = vmatprep.subr.mxu0 0.0
    %3526 = vmatpush1.xpose.msra.mxu0 0.0
    %3527 = vmatprep.subr.mxu0 0.0
    %3528 = vmatpush1.xpose.msra.mxu0 0.0
    %3529 = vmatprep.subr.mxu0 0.0
    %3530 = vmatpush1.xpose.msra.mxu0 0.0
    %3531 = vmatprep.subr.mxu0 0.0
    %3532 = vmatpush1.xpose.msra.mxu0 0.0
    %3533 = vmatprep.subr.mxu0 0.0
    %3534 = vmatpush1.xpose.msra.mxu0 0.0
    %3535 = vmatprep.subr.mxu0 0.0
    %3536 = vmatpush1.xpose.msra.mxu0 0.0
    %3537 = vmatprep.subr.mxu0 0.0
    %3538 = vmatpush1.xpose.msra.mxu0 0.0
    %3539 = vmatprep.subr.mxu0 0.0
    %3540 = vmatpush1.xpose.msra.mxu0 0.0
    %3541 = vmatprep.subr.mxu0 0.0
    %3542 = vmatpush1.xpose.msra.mxu0 0.0
    %3543 = vmatprep.subr.mxu0 0.0
    %3544 = vmatpush1.xpose.msra.mxu0 0.0
    %3545 = vmatprep.subr.mxu0 0.0
    %3546 = vmatpush1.xpose.msra.mxu0 0.0
    %3547 = vmatprep.subr.mxu0 0.0
    %3548 = vmatpush1.xpose.msra.mxu0 0.0
    %3549 = vmatprep.subr.mxu0 0.0
    %3550 = vmatpush1.xpose.msra.mxu0 0.0
    %3551 = vmatprep.subr.mxu0 0.0
    %3552 = vmatpush1.xpose.msra.mxu0 0.0
    %3553 = vmatprep.subr.mxu0 0.0
    %3554 = vmatpush1.xpose.msra.mxu0 0.0
    %3555 = vmatprep.subr.mxu0 0.0
    %3556 = vmatpush1.xpose.msra.mxu0 0.0
    %3557 = vmatprep.subr.mxu0 0.0
    %3558 = vmatpush1.xpose.msra.mxu0 0.0
    %3559 = vmatprep.subr.mxu0 0.0
    %3560 = vmatpush1.xpose.msra.mxu0 0.0
    %3561 = vmatprep.subr.mxu0 0.0
    %3562 = vmatpush1.xpose.msra.mxu0 0.0
    %3563 = vmatprep.subr.mxu0 0.0
    %3564 = vmatpush1.xpose.msra.mxu0 0.0
    %3565 = vmatprep.subr.mxu0 0.0
    %3566 = vmatpush1.xpose.msra.mxu0 0.0
    %3567 = vmatprep.subr.mxu0 0.0
    %3568 = vmatpush1.xpose.msra.mxu0 0.0
    %3569 = vmatprep.subr.mxu0 0.0
    %3570 = vmatpush1.xpose.msra.mxu0 0.0
    %3571 = vmatprep.subr.mxu0 0.0
    %3572 = vmatpush1.xpose.msra.mxu0 0.0
    %3573 = vmatprep.subr.mxu0 0.0
    %3574 = vmatpush1.xpose.msra.mxu0 0.0
    %3575 = vmatprep.subr.mxu0 0.0
    %3576 = vmatpush1.xpose.msra.mxu0 0.0
    %3577 = vmatprep.subr.mxu0 0.0
    %3578 = vmatpush1.xpose.msra.mxu0 0.0
    %3579 = vmatprep.mubr.f32.mxu0 0.0
    %v3580 = vand.u32 %v3207, 4294901760
    %3581 = vmatmul.mubr.f32.gmra.mrb[0].mxu0 %v3580
    %v3582 = vpop.f32.mrb[0].mxu0
    %v3583 = vadd.f32 %v3509, %v3582
    %v3584 = vpop.f32.mrb[0].mxu0
    %3585 = vdwg.mxu0
    %3586 = vmatprep.subr.mxu0 0.0
    %v3587 = vand.u32 %v3210, 4294901760
    %3588 = vmatpush1.xpose.msra.mxu0 %v3587
    %3589 = vmatprep.subr.mxu0 0.0
    %3590 = vmatpush1.xpose.msra.mxu0 0.0
    %3591 = vmatprep.subr.mxu0 0.0
    %3592 = vmatpush1.xpose.msra.mxu0 0.0
    %3593 = vmatprep.subr.mxu0 0.0
    %3594 = vmatpush1.xpose.msra.mxu0 0.0
    %3595 = vmatprep.subr.mxu0 0.0
    %3596 = vmatpush1.xpose.msra.mxu0 0.0
    %3597 = vmatprep.subr.mxu0 0.0
    %3598 = vmatpush1.xpose.msra.mxu0 0.0
    %3599 = vmatprep.subr.mxu0 0.0
    %3600 = vmatpush1.xpose.msra.mxu0 0.0
    %3601 = vmatprep.subr.mxu0 0.0
    %3602 = vmatpush1.xpose.msra.mxu0 0.0
    %3603 = vmatprep.subr.mxu0 0.0
    %3604 = vmatpush1.xpose.msra.mxu0 0.0
    %3605 = vmatprep.subr.mxu0 0.0
    %3606 = vmatpush1.xpose.msra.mxu0 0.0
    %3607 = vmatprep.subr.mxu0 0.0
    %3608 = vmatpush1.xpose.msra.mxu0 0.0
    %3609 = vmatprep.subr.mxu0 0.0
    %3610 = vmatpush1.xpose.msra.mxu0 0.0
    %3611 = vmatprep.subr.mxu0 0.0
    %3612 = vmatpush1.xpose.msra.mxu0 0.0
    %3613 = vmatprep.subr.mxu0 0.0
    %3614 = vmatpush1.xpose.msra.mxu0 0.0
    %3615 = vmatprep.subr.mxu0 0.0
    %3616 = vmatpush1.xpose.msra.mxu0 0.0
    %3617 = vmatprep.subr.mxu0 0.0
    %3618 = vmatpush1.xpose.msra.mxu0 0.0
    %3619 = vmatprep.subr.mxu0 0.0
    %3620 = vmatpush1.xpose.msra.mxu0 0.0
    %3621 = vmatprep.subr.mxu0 0.0
    %3622 = vmatpush1.xpose.msra.mxu0 0.0
    %3623 = vmatprep.subr.mxu0 0.0
    %3624 = vmatpush1.xpose.msra.mxu0 0.0
    %3625 = vmatprep.subr.mxu0 0.0
    %3626 = vmatpush1.xpose.msra.mxu0 0.0
    %3627 = vmatprep.subr.mxu0 0.0
    %3628 = vmatpush1.xpose.msra.mxu0 0.0
    %3629 = vmatprep.subr.mxu0 0.0
    %3630 = vmatpush1.xpose.msra.mxu0 0.0
    %3631 = vmatprep.subr.mxu0 0.0
    %3632 = vmatpush1.xpose.msra.mxu0 0.0
    %3633 = vmatprep.subr.mxu0 0.0
    %3634 = vmatpush1.xpose.msra.mxu0 0.0
    %3635 = vmatprep.subr.mxu0 0.0
    %3636 = vmatpush1.xpose.msra.mxu0 0.0
    %3637 = vmatprep.subr.mxu0 0.0
    %3638 = vmatpush1.xpose.msra.mxu0 0.0
    %3639 = vmatprep.subr.mxu0 0.0
    %3640 = vmatpush1.xpose.msra.mxu0 0.0
    %3641 = vmatprep.subr.mxu0 0.0
    %3642 = vmatpush1.xpose.msra.mxu0 0.0
    %3643 = vmatprep.subr.mxu0 0.0
    %3644 = vmatpush1.xpose.msra.mxu0 0.0
    %3645 = vmatprep.subr.mxu0 0.0
    %3646 = vmatpush1.xpose.msra.mxu0 0.0
    %3647 = vmatprep.subr.mxu0 0.0
    %3648 = vmatpush1.xpose.msra.mxu0 0.0
    %3649 = vmatprep.subr.mxu0 0.0
    %3650 = vmatpush1.xpose.msra.mxu0 0.0
    %3651 = vmatprep.mubr.f32.mxu0 0.0
    %v3652 = vand.u32 %v3207, 4294901760
    %3653 = vmatmul.mubr.f32.gmra.mrb[0].mxu0 %v3652
    %v3654 = vpop.f32.mrb[0].mxu0
    %v3655 = vadd.f32 %v3583, %v3654
    %v3656 = vpop.f32.mrb[0].mxu0
    %3657 = vdwg.mxu0
    %vm3658 = vcmask 59392
    %3659 = vst.msk [vmem:[#allocation9] sm:$0x7] %vm3658, %v3655
    // Predicated region
    $region38: #{tpu_custom_call.1} parent=1 // pred_check
      _
    $region39: #{tpu_custom_call.1} parent=1 // pred_check_branch
      %3661 = sbr.rel (0) target = $region41
    $region40: #{tpu_custom_call.1} parent=1 // pred_region
      %s3663 = ssub.s32 64, 64
      %3664 = vsyncadd [#allocation5], %s3663
      %s3666 = sshll.u32 [#allocation9], 4
      %s3667 = int_to_ptr.vmem [resolvable:$true] %s3666
      %3669 = dma.vmem_to_hbm [thread:$0]  %s3667, 64, %s6, [#allocation5]
    $region41: #{tpu_custom_call.1} parent=1 // pred_fallthru
      _
    // Predicated region
    $region42: #{tpu_custom_call.1} parent=1 // pred_check
      _
    $region43: #{tpu_custom_call.1} parent=1 // pred_check_branch
      %3671 = sbr.rel (0) target = $region45
    $region44: #{tpu_custom_call.1} parent=1 // pred_region
      %3672 = dma.done [#allocation5], 64
    $region45: #{tpu_custom_call.1} parent=1 // pred_fallthru
      _
    %3673 = vsyncpa [#allocation4], 1
    %3674 = vsyncpa [#allocation7], 1
    %3675 = vsyncpa [#allocation5], 1

</llo_original>
